<compile_context>
chip_gen: v5e
topology: v5e:2x2
jax: 0.10.0
libtpu: 0.0.40
codegen_flags: <defaults>
</compile_context>

<pallas_src>
import functools

import jax
import jax.numpy as jnp
from jax.experimental import pallas as pl
from jax.experimental.pallas import tpu as pltpu

LN_EPS = 1e-5  # PyTorch nn.LayerNorm default


# ----------------------------- in-kernel helpers -----------------------------

def _ln(x, g, b):
    """LayerNorm over the last axis (f32 math, biased variance like PyTorch)."""
    mean = jnp.mean(x, axis=-1, keepdims=True)
    var = jnp.mean(jnp.square(x - mean), axis=-1, keepdims=True)
    return (x - mean) * jax.lax.rsqrt(var + LN_EPS) * g + b


# --------------------------------- kernel ------------------------------------

def _vlm_kernel(img_ref, txt_ref, imgw_ref, imgb_ref, lng_ref, lnb_ref,
                wqkv_ref, bqkv_ref, wo_ref, bo_ref,
                g1_ref, b1_ref, w1_ref, f1_ref, w2_ref, f2_ref,
                g2_ref, b2_ref, clsw_ref, clsb_ref,
                logits_ref, x_scratch,
                *, batch, s_img, s_txt, num_heads):
    l = pl.program_id(0)
    n_layers = pl.num_programs(0)

    BS, E = x_scratch.shape
    S = BS // batch
    H = num_heads
    Dh = E // H
    rf = s_img // s_txt
    scale = 1.0 / float(Dh) ** 0.5

    # ---- pre-stage: image Linear+LN, text LN, tile + concat (only at l==0) ----
    @pl.when(l == 0)
    def _prestage():
        img = jnp.dot(img_ref[...].astype(jnp.bfloat16), imgw_ref[...],
                      preferred_element_type=jnp.float32) + imgb_ref[...]
        img = _ln(img, lng_ref[...], lnb_ref[...])            # (B*S_img, E)
        txt = _ln(txt_ref[...], lng_ref[...], lnb_ref[...])   # (B*S_txt, E)
        for b in range(batch):
            x_scratch[b * S: b * S + s_img, :] = img[b * s_img:(b + 1) * s_img, :]
            for r in range(rf):
                row0 = b * S + s_img + r * s_txt
                x_scratch[row0: row0 + s_txt, :] = txt[b * s_txt:(b + 1) * s_txt, :]

    # ---- one post-norm TransformerEncoderLayer on the (B*S, E) slab ----
    x = x_scratch[...]                                         # (B*S, E) f32
    xb = x.astype(jnp.bfloat16)

    # fused Q/K/V projection: one (B*S,E) x (E,3E) matmul
    qkv = jnp.dot(xb, wqkv_ref[0],
                  preferred_element_type=jnp.float32) + bqkv_ref[0]   # (B*S, 3E)
    qkv3 = qkv.reshape(batch, S, 3 * E)

    # multi-head attention: heads unrolled, batch handled via batched dot_general;
    # head outputs folded directly into the output projection (no lane concat).
    wo = wo_ref[0]                                             # (E, E) bf16
    attn = jnp.zeros((BS, E), jnp.float32)
    for h in range(H):
        qh = qkv3[:, :, h * Dh:(h + 1) * Dh].astype(jnp.bfloat16)
        kh = qkv3[:, :, E + h * Dh: E + (h + 1) * Dh].astype(jnp.bfloat16)
        vh = qkv3[:, :, 2 * E + h * Dh: 2 * E + (h + 1) * Dh].astype(jnp.bfloat16)
        s = jax.lax.dot_general(qh, kh, (((2,), (2,)), ((0,), (0,))),
                                preferred_element_type=jnp.float32) * scale  # (B,S,S)
        s = s - jnp.max(s, axis=-1, keepdims=True)
        p = jnp.exp(s)
        p = p / jnp.sum(p, axis=-1, keepdims=True)
        ctx = jax.lax.dot_general(p.astype(jnp.bfloat16), vh,
                                  (((2,), (1,)), ((0,), (0,))),
                                  preferred_element_type=jnp.float32)        # (B,S,Dh)
        attn = attn + jnp.dot(ctx.reshape(BS, Dh).astype(jnp.bfloat16),
                              wo[h * Dh:(h + 1) * Dh, :],
                              preferred_element_type=jnp.float32)
    attn = attn + bo_ref[0]
    # TODO(synk): dropout layers omitted (eval-mode semantics)

    h1 = _ln(x + attn, g1_ref[0], b1_ref[0])                   # residual + LN1

    ff = jnp.dot(h1.astype(jnp.bfloat16), w1_ref[0],
                 preferred_element_type=jnp.float32) + f1_ref[0]
    ff = jnp.maximum(ff, 0.0)
    ff = jnp.dot(ff.astype(jnp.bfloat16), w2_ref[0],
                 preferred_element_type=jnp.float32) + f2_ref[0]
    x_new = _ln(h1 + ff, g2_ref[0], b2_ref[0])                 # residual + LN2

    x_scratch[...] = x_new

    # ---- classifier head fused into the last layer step ----
    @pl.when(l == n_layers - 1)
    def _classify():
        cls = jnp.concatenate([x_new[b * S: b * S + 1, :] for b in range(batch)],
                              axis=0)                          # (B, E)
        logits_ref[...] = jnp.dot(cls.astype(jnp.bfloat16), clsw_ref[...],
                                  preferred_element_type=jnp.float32) + clsb_ref[...]


# ------------------------------ pallas wrapper --------------------------------

def vlm_forward(params, image_tokens, text_tokens, *, num_heads, num_classes):
    B, S_img, Din = image_tokens.shape
    S_txt = text_tokens.shape[1]
    E = params["ln_g"].shape[1]
    F = params["w1"].shape[2]
    L = params["wqkv"].shape[0]
    NPAD = params["cls_w"].shape[1]
    assert S_img % S_txt == 0, "image seq len must be a multiple of text seq len"
    rf = S_img // S_txt
    S = S_img + rf * S_txt

    # TODO(synk): embedding gather (nn.Embedding) done in plain JAX.
    txt_emb = jnp.take(params["embed"], text_tokens, axis=0)   # (B, S_txt, E)

    img2 = image_tokens.reshape(B * S_img, Din)
    txt2 = txt_emb.reshape(B * S_txt, E)

    const2 = lambda l: (0, 0)
    stack3 = lambda l: (l, 0, 0)

    kernel = functools.partial(_vlm_kernel, batch=B, s_img=S_img, s_txt=S_txt,
                               num_heads=num_heads)

    logits = pl.pallas_call(
        kernel,
        out_shape=jax.ShapeDtypeStruct((B, NPAD), jnp.float32),
        grid=(L,),
        in_specs=[
            pl.BlockSpec((B * S_img, Din), const2),   # image tokens
            pl.BlockSpec((B * S_txt, E), const2),     # text embeddings
            pl.BlockSpec((Din, E), const2),           # img_w
            pl.BlockSpec((1, E), const2),             # img_b
            pl.BlockSpec((1, E), const2),             # ln_g (shared)
            pl.BlockSpec((1, E), const2),             # ln_b (shared)
            pl.BlockSpec((1, E, 3 * E), stack3),      # wqkv  (stacked over L)
            pl.BlockSpec((1, 1, 3 * E), stack3),      # bqkv
            pl.BlockSpec((1, E, E), stack3),          # wo
            pl.BlockSpec((1, 1, E), stack3),          # bo
            pl.BlockSpec((1, 1, E), stack3),          # ln1_g
            pl.BlockSpec((1, 1, E), stack3),          # ln1_b
            pl.BlockSpec((1, E, F), stack3),          # w1
            pl.BlockSpec((1, 1, F), stack3),          # b1
            pl.BlockSpec((1, F, E), stack3),          # w2
            pl.BlockSpec((1, 1, E), stack3),          # b2
            pl.BlockSpec((1, 1, E), stack3),          # ln2_g
            pl.BlockSpec((1, 1, E), stack3),          # ln2_b
            pl.BlockSpec((E, NPAD), const2),          # cls_w (lane-padded)
            pl.BlockSpec((1, NPAD), const2),          # cls_b (lane-padded)
        ],
        out_specs=pl.BlockSpec((B, NPAD), const2),
        scratch_shapes=[pltpu.VMEM((B * S, E), jnp.float32)],
        compiler_params=pltpu.CompilerParams(
            dimension_semantics=("arbitrary",),
        ),
    )(img2, txt2, params["img_w"], params["img_b"], params["ln_g"], params["ln_b"],
      params["wqkv"], params["bqkv"], params["wo"], params["bo"],
      params["ln1_g"], params["ln1_b"], params["w1"], params["b1"],
      params["w2"], params["b2"], params["ln2_g"], params["ln2_b"],
      params["cls_w"], params["cls_b"])

    return logits[:, :num_classes]


# --------------------------------- params ------------------------------------

def init_params(key, embed_dim, num_layers, num_classes, ff_dim, vocab, *,
                class_pad=128):
    E, F, L = embed_dim, ff_dim, num_layers
    ks = jax.random.split(key, 8)

    def w(k, shape, scale=0.02):
        return (scale * jax.random.normal(k, shape)).astype(jnp.float32)

    def bf16(a):
        return a.astype(jnp.bfloat16)

    npad = max(class_pad, num_classes)
    cls_w = jnp.zeros((E, npad), jnp.float32).at[:, :num_classes].set(
        w(ks[2], (E, num_classes)))

    params = {
        "img_w": bf16(w(ks[0], (768, E))),
        "img_b": jnp.zeros((1, E), jnp.float32),
        "embed": w(ks[1], (vocab, E)),
        "ln_g": jnp.ones((1, E), jnp.float32),
        "ln_b": jnp.zeros((1, E), jnp.float32),
        "cls_w": bf16(cls_w),
        "cls_b": jnp.zeros((1, npad), jnp.float32),
        # per-layer weights stacked along a leading L dim
        "wqkv": bf16(w(ks[3], (L, E, 3 * E))),
        "bqkv": jnp.zeros((L, 1, 3 * E), jnp.float32),
        "wo": bf16(w(ks[4], (L, E, E))),
        "bo": jnp.zeros((L, 1, E), jnp.float32),
        "ln1_g": jnp.ones((L, 1, E), jnp.float32),
        "ln1_b": jnp.zeros((L, 1, E), jnp.float32),
        "w1": bf16(w(ks[5], (L, E, F))),
        "b1": jnp.zeros((L, 1, F), jnp.float32),
        "w2": bf16(w(ks[6], (L, F, E))),
        "b2": jnp.zeros((L, 1, E), jnp.float32),
        "ln2_g": jnp.ones((L, 1, E), jnp.float32),
        "ln2_b": jnp.zeros((L, 1, E), jnp.float32),
    }
    return params


# ---------------------------------- main --------------------------------------

if __name__ == "__main__":
    # small shapes consistent with the module's forward
    B, S_IMG, S_TXT = 2, 16, 8
    EMBED, HEADS, LAYERS, FF, CLASSES, VOCAB = 128, 4, 2, 256, 10, 10000

    key = jax.random.PRNGKey(0)
    k_img, k_txt, k_par = jax.random.split(key, 3)
    image_tokens = jax.random.normal(k_img, (B, S_IMG, 768), dtype=jnp.float32)
    text_tokens = jax.random.randint(k_txt, (B, S_TXT), 0, VOCAB, dtype=jnp.int32)

    params = init_params(k_par, EMBED, LAYERS, CLASSES, FF, VOCAB)

    fwd = jax.jit(functools.partial(vlm_forward, num_heads=HEADS,
                                    num_classes=CLASSES))
    out = fwd(params, image_tokens, text_tokens)
    jax.block_until_ready(out)

    assert out.shape == (B, CLASSES), out.shape
    assert jnp.all(jnp.isfinite(out))
    print("KERNEL_OK")
</pallas_src>

<mosaic_0001>
module attributes {stable_mosaic.version = 11 : i64} {
  func.func @_vlm_kernel(%arg0: i32, %arg1: memref<32x768xf32, #tpu.memory_space<vmem>>, %arg2: memref<16x128xf32, #tpu.memory_space<vmem>>, %arg3: memref<768x128xbf16, #tpu.memory_space<vmem>>, %arg4: memref<1x128xf32, #tpu.memory_space<vmem>>, %arg5: memref<1x128xf32, #tpu.memory_space<vmem>>, %arg6: memref<1x128xf32, #tpu.memory_space<vmem>>, %arg7: memref<1x128x384xbf16, #tpu.memory_space<vmem>>, %arg8: memref<1x1x384xf32, #tpu.memory_space<vmem>>, %arg9: memref<1x128x128xbf16, #tpu.memory_space<vmem>>, %arg10: memref<1x1x128xf32, #tpu.memory_space<vmem>>, %arg11: memref<1x1x128xf32, #tpu.memory_space<vmem>>, %arg12: memref<1x1x128xf32, #tpu.memory_space<vmem>>, %arg13: memref<1x128x256xbf16, #tpu.memory_space<vmem>>, %arg14: memref<1x1x256xf32, #tpu.memory_space<vmem>>, %arg15: memref<1x256x128xbf16, #tpu.memory_space<vmem>>, %arg16: memref<1x1x128xf32, #tpu.memory_space<vmem>>, %arg17: memref<1x1x128xf32, #tpu.memory_space<vmem>>, %arg18: memref<1x1x128xf32, #tpu.memory_space<vmem>>, %arg19: memref<128x128xbf16, #tpu.memory_space<vmem>>, %arg20: memref<1x128xf32, #tpu.memory_space<vmem>>, %arg21: memref<2x128xf32, #tpu.memory_space<vmem>>, %arg22: memref<64x128xf32, #tpu.memory_space<vmem>>) attributes {dimension_semantics = [#tpu.dimension_semantics<arbitrary>], iteration_bounds = array<i64: 2>, scalar_prefetch = 0 : i64, scratch_operands = 1 : i64, tpu.core_type = #tpu.core_type<tc>, window_params = [{pipeline_mode = #tpu.pipeline_mode<synchronous>, transform_indices = @transform_0, window_bounds = array<i64: 32, 768>}, {pipeline_mode = #tpu.pipeline_mode<synchronous>, transform_indices = @transform_1, window_bounds = array<i64: 16, 128>}, {pipeline_mode = #tpu.pipeline_mode<synchronous>, transform_indices = @transform_2, window_bounds = array<i64: 768, 128>}, {pipeline_mode = #tpu.pipeline_mode<synchronous>, transform_indices = @transform_3, window_bounds = array<i64: 1, 128>}, {pipeline_mode = #tpu.pipeline_mode<synchronous>, transform_indices = @transform_4, window_bounds = array<i64: 1, 128>}, {pipeline_mode = #tpu.pipeline_mode<synchronous>, transform_indices = @transform_5, window_bounds = array<i64: 1, 128>}, {transform_indices = @transform_6, window_bounds = array<i64: 1, 128, 384>}, {transform_indices = @transform_7, window_bounds = array<i64: 1, 1, 384>}, {transform_indices = @transform_8, window_bounds = array<i64: 1, 128, 128>}, {transform_indices = @transform_9, window_bounds = array<i64: 1, 1, 128>}, {transform_indices = @transform_10, window_bounds = array<i64: 1, 1, 128>}, {transform_indices = @transform_11, window_bounds = array<i64: 1, 1, 128>}, {transform_indices = @transform_12, window_bounds = array<i64: 1, 128, 256>}, {transform_indices = @transform_13, window_bounds = array<i64: 1, 1, 256>}, {transform_indices = @transform_14, window_bounds = array<i64: 1, 256, 128>}, {transform_indices = @transform_15, window_bounds = array<i64: 1, 1, 128>}, {transform_indices = @transform_16, window_bounds = array<i64: 1, 1, 128>}, {transform_indices = @transform_17, window_bounds = array<i64: 1, 1, 128>}, {pipeline_mode = #tpu.pipeline_mode<synchronous>, transform_indices = @transform_18, window_bounds = array<i64: 128, 128>}, {pipeline_mode = #tpu.pipeline_mode<synchronous>, transform_indices = @transform_19, window_bounds = array<i64: 1, 128>}, {pipeline_mode = #tpu.pipeline_mode<synchronous>, transform_indices = @transform_20, window_bounds = array<i64: 2, 128>}]} {
    %c0_i32 = arith.constant 0 : i32
    %0 = arith.cmpi eq, %arg0, %c0_i32 : i32
    %1 = arith.extui %0 : i1 to i32
    %c0_i32_0 = arith.constant 0 : i32
    %2 = arith.cmpi ne, %1, %c0_i32_0 : i32
    scf.if %2 {
      %c0_79 = arith.constant 0 : index
      %c0_80 = arith.constant 0 : index
      %196 = vector.load %arg1[%c0_79, %c0_80] : memref<32x768xf32, #tpu.memory_space<vmem>>, vector<32x768xf32>
      %197 = arith.truncf %196 : vector<32x768xf32> to vector<32x768xbf16>
      %c0_81 = arith.constant 0 : index
      %c0_82 = arith.constant 0 : index
      %198 = vector.load %arg3[%c0_81, %c0_82] : memref<768x128xbf16, #tpu.memory_space<vmem>>, vector<768x128xbf16>
      %cst_83 = arith.constant dense<0.000000e+00> : vector<32x128xf32>
      %199 = tpu.matmul %197, %198, %cst_83 {dimension_numbers = #tpu.dot_dimension_numbers<[1], [0], [0], [1], [0, 0, 1, 1], [], []>} : vector<32x768xbf16>, vector<768x128xbf16>, vector<32x128xf32> -> vector<32x128xf32>
      %c0_84 = arith.constant 0 : index
      %c0_85 = arith.constant 0 : index
      %200 = vector.load %arg4[%c0_84, %c0_85] : memref<1x128xf32, #tpu.memory_space<vmem>>, vector<1x128xf32>
      %201 = vector.broadcast %200 : vector<1x128xf32> to vector<32x128xf32>
      %202 = arith.addf %199, %201 : vector<32x128xf32>
      %c0_86 = arith.constant 0 : index
      %c0_87 = arith.constant 0 : index
      %203 = vector.load %arg5[%c0_86, %c0_87] : memref<1x128xf32, #tpu.memory_space<vmem>>, vector<1x128xf32>
      %c0_88 = arith.constant 0 : index
      %c0_89 = arith.constant 0 : index
      %204 = vector.load %arg6[%c0_88, %c0_89] : memref<1x128xf32, #tpu.memory_space<vmem>>, vector<1x128xf32>
      %cst_90 = arith.constant dense<0.000000e+00> : vector<32xf32>
      %205 = vector.multi_reduction <add>, %202, %cst_90 [1] : vector<32x128xf32> to vector<32xf32>
      %206 = vector.shape_cast %205 : vector<32xf32> to vector<32x1xf32>
      %cst_91 = arith.constant 1.280000e+02 : f32
      %207 = vector.broadcast %cst_91 : f32 to vector<32x1xf32>
      %208 = arith.divf %206, %207 : vector<32x1xf32>
      %209 = vector.broadcast %208 : vector<32x1xf32> to vector<32x128xf32>
      %210 = arith.subf %202, %209 : vector<32x128xf32>
      %211 = arith.mulf %210, %210 : vector<32x128xf32>
      %cst_92 = arith.constant dense<0.000000e+00> : vector<32xf32>
      %212 = vector.multi_reduction <add>, %211, %cst_92 [1] : vector<32x128xf32> to vector<32xf32>
      %213 = vector.shape_cast %212 : vector<32xf32> to vector<32x1xf32>
      %cst_93 = arith.constant 1.280000e+02 : f32
      %214 = vector.broadcast %cst_93 : f32 to vector<32x1xf32>
      %215 = arith.divf %213, %214 : vector<32x1xf32>
      %216 = vector.broadcast %208 : vector<32x1xf32> to vector<32x128xf32>
      %217 = arith.subf %202, %216 : vector<32x128xf32>
      %cst_94 = arith.constant 9.99999974E-6 : f32
      %218 = vector.broadcast %cst_94 : f32 to vector<32x1xf32>
      %219 = arith.addf %215, %218 : vector<32x1xf32>
      %220 = math.rsqrt %219 : vector<32x1xf32>
      %221 = vector.broadcast %220 : vector<32x1xf32> to vector<32x128xf32>
      %222 = arith.mulf %217, %221 : vector<32x128xf32>
      %223 = vector.broadcast %203 : vector<1x128xf32> to vector<32x128xf32>
      %224 = arith.mulf %222, %223 : vector<32x128xf32>
      %225 = vector.broadcast %204 : vector<1x128xf32> to vector<32x128xf32>
      %226 = arith.addf %224, %225 : vector<32x128xf32>
      %c0_95 = arith.constant 0 : index
      %c0_96 = arith.constant 0 : index
      %227 = vector.load %arg2[%c0_95, %c0_96] : memref<16x128xf32, #tpu.memory_space<vmem>>, vector<16x128xf32>
      %c0_97 = arith.constant 0 : index
      %c0_98 = arith.constant 0 : index
      %228 = vector.load %arg5[%c0_97, %c0_98] : memref<1x128xf32, #tpu.memory_space<vmem>>, vector<1x128xf32>
      %c0_99 = arith.constant 0 : index
      %c0_100 = arith.constant 0 : index
      %229 = vector.load %arg6[%c0_99, %c0_100] : memref<1x128xf32, #tpu.memory_space<vmem>>, vector<1x128xf32>
      %cst_101 = arith.constant dense<0.000000e+00> : vector<16xf32>
      %230 = vector.multi_reduction <add>, %227, %cst_101 [1] : vector<16x128xf32> to vector<16xf32>
      %231 = vector.shape_cast %230 : vector<16xf32> to vector<16x1xf32>
      %cst_102 = arith.constant 1.280000e+02 : f32
      %232 = vector.broadcast %cst_102 : f32 to vector<16x1xf32>
      %233 = arith.divf %231, %232 : vector<16x1xf32>
      %234 = vector.broadcast %233 : vector<16x1xf32> to vector<16x128xf32>
      %235 = arith.subf %227, %234 : vector<16x128xf32>
      %236 = arith.mulf %235, %235 : vector<16x128xf32>
      %cst_103 = arith.constant dense<0.000000e+00> : vector<16xf32>
      %237 = vector.multi_reduction <add>, %236, %cst_103 [1] : vector<16x128xf32> to vector<16xf32>
      %238 = vector.shape_cast %237 : vector<16xf32> to vector<16x1xf32>
      %cst_104 = arith.constant 1.280000e+02 : f32
      %239 = vector.broadcast %cst_104 : f32 to vector<16x1xf32>
      %240 = arith.divf %238, %239 : vector<16x1xf32>
      %241 = vector.broadcast %233 : vector<16x1xf32> to vector<16x128xf32>
      %242 = arith.subf %227, %241 : vector<16x128xf32>
      %cst_105 = arith.constant 9.99999974E-6 : f32
      %243 = vector.broadcast %cst_105 : f32 to vector<16x1xf32>
      %244 = arith.addf %240, %243 : vector<16x1xf32>
      %245 = math.rsqrt %244 : vector<16x1xf32>
      %246 = vector.broadcast %245 : vector<16x1xf32> to vector<16x128xf32>
      %247 = arith.mulf %242, %246 : vector<16x128xf32>
      %248 = vector.broadcast %228 : vector<1x128xf32> to vector<16x128xf32>
      %249 = arith.mulf %247, %248 : vector<16x128xf32>
      %250 = vector.broadcast %229 : vector<1x128xf32> to vector<16x128xf32>
      %251 = arith.addf %249, %250 : vector<16x128xf32>
      %252 = vector.extract_strided_slice %226 {offsets = [0, 0], sizes = [16, 128], strides = [1, 1]} : vector<32x128xf32> to vector<16x128xf32>
      %c0_106 = arith.constant 0 : index
      %c0_107 = arith.constant 0 : index
      %253 = vector.load %arg22[%c0_106, %c0_107] : memref<64x128xf32, #tpu.memory_space<vmem>>, vector<16x128xf32>
      tpu.vector_store %arg22[%c0_106, %c0_107], %252 {strides = array<i32>} : memref<64x128xf32, #tpu.memory_space<vmem>>, vector<16x128xf32>,
      %254 = vector.extract_strided_slice %251 {offsets = [0, 0], sizes = [8, 128], strides = [1, 1]} : vector<16x128xf32> to vector<8x128xf32>
      %c16 = arith.constant 16 : index
      %c0_108 = arith.constant 0 : index
      %255 = vector.load %arg22[%c16, %c0_108] : memref<64x128xf32, #tpu.memory_space<vmem>>, vector<8x128xf32>
      tpu.vector_store %arg22[%c16, %c0_108], %254 {strides = array<i32>} : memref<64x128xf32, #tpu.memory_space<vmem>>, vector<8x128xf32>,
      %256 = vector.extract_strided_slice %251 {offsets = [0, 0], sizes = [8, 128], strides = [1, 1]} : vector<16x128xf32> to vector<8x128xf32>
      %c24 = arith.constant 24 : index
      %c0_109 = arith.constant 0 : index
      %257 = vector.load %arg22[%c24, %c0_109] : memref<64x128xf32, #tpu.memory_space<vmem>>, vector<8x128xf32>
      tpu.vector_store %arg22[%c24, %c0_109], %256 {strides = array<i32>} : memref<64x128xf32, #tpu.memory_space<vmem>>, vector<8x128xf32>,
      %258 = vector.extract_strided_slice %226 {offsets = [16, 0], sizes = [16, 128], strides = [1, 1]} : vector<32x128xf32> to vector<16x128xf32>
      %c32 = arith.constant 32 : index
      %c0_110 = arith.constant 0 : index
      %259 = vector.load %arg22[%c32, %c0_110] : memref<64x128xf32, #tpu.memory_space<vmem>>, vector<16x128xf32>
      tpu.vector_store %arg22[%c32, %c0_110], %258 {strides = array<i32>} : memref<64x128xf32, #tpu.memory_space<vmem>>, vector<16x128xf32>,
      %260 = vector.extract_strided_slice %251 {offsets = [8, 0], sizes = [8, 128], strides = [1, 1]} : vector<16x128xf32> to vector<8x128xf32>
      %c48 = arith.constant 48 : index
      %c0_111 = arith.constant 0 : index
      %261 = vector.load %arg22[%c48, %c0_111] : memref<64x128xf32, #tpu.memory_space<vmem>>, vector<8x128xf32>
      tpu.vector_store %arg22[%c48, %c0_111], %260 {strides = array<i32>} : memref<64x128xf32, #tpu.memory_space<vmem>>, vector<8x128xf32>,
      %262 = vector.extract_strided_slice %251 {offsets = [8, 0], sizes = [8, 128], strides = [1, 1]} : vector<16x128xf32> to vector<8x128xf32>
      %c56 = arith.constant 56 : index
      %c0_112 = arith.constant 0 : index
      %263 = vector.load %arg22[%c56, %c0_112] : memref<64x128xf32, #tpu.memory_space<vmem>>, vector<8x128xf32>
      tpu.vector_store %arg22[%c56, %c0_112], %262 {strides = array<i32>} : memref<64x128xf32, #tpu.memory_space<vmem>>, vector<8x128xf32>,
    } else {
    }
    %c0 = arith.constant 0 : index
    %c0_1 = arith.constant 0 : index
    %3 = vector.load %arg22[%c0, %c0_1] : memref<64x128xf32, #tpu.memory_space<vmem>>, vector<64x128xf32>
    %4 = arith.truncf %3 : vector<64x128xf32> to vector<64x128xbf16>
    %c0_2 = arith.constant 0 : index
    %c0_3 = arith.constant 0 : index
    %c0_4 = arith.constant 0 : index
    %5 = vector.load %arg7[%c0_2, %c0_3, %c0_4] : memref<1x128x384xbf16, #tpu.memory_space<vmem>>, vector<1x128x384xbf16>
    %6 = vector.shape_cast %5 : vector<1x128x384xbf16> to vector<128x384xbf16>
    %cst = arith.constant dense<0.000000e+00> : vector<64x384xf32>
    %7 = tpu.matmul %4, %6, %cst {dimension_numbers = #tpu.dot_dimension_numbers<[1], [0], [0], [1], [0, 0, 1, 1], [], []>} : vector<64x128xbf16>, vector<128x384xbf16>, vector<64x384xf32> -> vector<64x384xf32>
    %c0_5 = arith.constant 0 : index
    %c0_6 = arith.constant 0 : index
    %c0_7 = arith.constant 0 : index
    %8 = vector.load %arg8[%c0_5, %c0_6, %c0_7] : memref<1x1x384xf32, #tpu.memory_space<vmem>>, vector<1x1x384xf32>
    %9 = vector.shape_cast %8 : vector<1x1x384xf32> to vector<1x384xf32>
    %10 = vector.broadcast %9 : vector<1x384xf32> to vector<64x384xf32>
    %11 = arith.addf %7, %10 : vector<64x384xf32>
    %12 = vector.shape_cast %11 : vector<64x384xf32> to vector<2x32x384xf32>
    %c0_8 = arith.constant 0 : index
    %c0_9 = arith.constant 0 : index
    %c0_10 = arith.constant 0 : index
    %13 = vector.load %arg9[%c0_8, %c0_9, %c0_10] : memref<1x128x128xbf16, #tpu.memory_space<vmem>>, vector<1x128x128xbf16>
    %14 = vector.shape_cast %13 : vector<1x128x128xbf16> to vector<128x128xbf16>
    %cst_11 = arith.constant 0.000000e+00 : f32
    %15 = vector.broadcast %cst_11 : f32 to vector<64x128xf32>
    %16 = vector.extract_strided_slice %12 {offsets = [0, 0, 0], sizes = [2, 32, 32], strides = [1, 1, 1]} : vector<2x32x384xf32> to vector<2x32x32xf32>
    %17 = arith.truncf %16 : vector<2x32x32xf32> to vector<2x32x32xbf16>
    %18 = vector.extract_strided_slice %12 {offsets = [0, 0, 128], sizes = [2, 32, 32], strides = [1, 1, 1]} : vector<2x32x384xf32> to vector<2x32x32xf32>
    %19 = arith.truncf %18 : vector<2x32x32xf32> to vector<2x32x32xbf16>
    %20 = vector.extract_strided_slice %12 {offsets = [0, 0, 256], sizes = [2, 32, 32], strides = [1, 1, 1]} : vector<2x32x384xf32> to vector<2x32x32xf32>
    %21 = arith.truncf %20 : vector<2x32x32xf32> to vector<2x32x32xbf16>
    %cst_12 = arith.constant dense<0.000000e+00> : vector<2x32x32xf32>
    %22 = tpu.matmul %17, %19, %cst_12 {dimension_numbers = #tpu.dot_dimension_numbers<[2], [2], [1], [1], [0, 0, 0, 1, 1, 1], [0], [0]>} : vector<2x32x32xbf16>, vector<2x32x32xbf16>, vector<2x32x32xf32> -> vector<2x32x32xf32>
    %cst_13 = arith.constant 0.176776692 : f32
    %23 = vector.broadcast %cst_13 : f32 to vector<2x32x32xf32>
    %24 = arith.mulf %22, %23 : vector<2x32x32xf32>
    %cst_14 = arith.constant dense<0xFF800000> : vector<2x32xf32>
    %25 = vector.multi_reduction <maximumf>, %24, %cst_14 [2] : vector<2x32x32xf32> to vector<2x32xf32>
    %26 = vector.shape_cast %25 : vector<2x32xf32> to vector<2x32x1xf32>
    %27 = vector.broadcast %26 : vector<2x32x1xf32> to vector<2x32x32xf32>
    %28 = arith.subf %24, %27 : vector<2x32x32xf32>
    %29 = math.exp %28 : vector<2x32x32xf32>
    %cst_15 = arith.constant dense<0.000000e+00> : vector<2x32xf32>
    %30 = vector.multi_reduction <add>, %29, %cst_15 [2] : vector<2x32x32xf32> to vector<2x32xf32>
    %31 = vector.shape_cast %30 : vector<2x32xf32> to vector<2x32x1xf32>
    %32 = vector.broadcast %31 : vector<2x32x1xf32> to vector<2x32x32xf32>
    %33 = arith.divf %29, %32 : vector<2x32x32xf32>
    %34 = arith.truncf %33 : vector<2x32x32xf32> to vector<2x32x32xbf16>
    %cst_16 = arith.constant dense<0.000000e+00> : vector<2x32x32xf32>
    %35 = tpu.matmul %34, %21, %cst_16 {dimension_numbers = #tpu.dot_dimension_numbers<[2], [1], [1], [2], [0, 0, 0, 1, 1, 2], [0], [0]>} : vector<2x32x32xbf16>, vector<2x32x32xbf16>, vector<2x32x32xf32> -> vector<2x32x32xf32>
    %36 = vector.shape_cast %35 : vector<2x32x32xf32> to vector<64x32xf32>
    %37 = arith.truncf %36 : vector<64x32xf32> to vector<64x32xbf16>
    %38 = vector.extract_strided_slice %14 {offsets = [0, 0], sizes = [32, 128], strides = [1, 1]} : vector<128x128xbf16> to vector<32x128xbf16>
    %cst_17 = arith.constant dense<0.000000e+00> : vector<64x128xf32>
    %39 = tpu.matmul %37, %38, %cst_17 {dimension_numbers = #tpu.dot_dimension_numbers<[1], [0], [0], [1], [0, 0, 1, 1], [], []>} : vector<64x32xbf16>, vector<32x128xbf16>, vector<64x128xf32> -> vector<64x128xf32>
    %40 = arith.addf %15, %39 : vector<64x128xf32>
    %41 = vector.extract_strided_slice %12 {offsets = [0, 0, 32], sizes = [2, 32, 32], strides = [1, 1, 1]} : vector<2x32x384xf32> to vector<2x32x32xf32>
    %42 = arith.truncf %41 : vector<2x32x32xf32> to vector<2x32x32xbf16>
    %43 = vector.extract_strided_slice %12 {offsets = [0, 0, 160], sizes = [2, 32, 32], strides = [1, 1, 1]} : vector<2x32x384xf32> to vector<2x32x32xf32>
    %44 = arith.truncf %43 : vector<2x32x32xf32> to vector<2x32x32xbf16>
    %45 = vector.extract_strided_slice %12 {offsets = [0, 0, 288], sizes = [2, 32, 32], strides = [1, 1, 1]} : vector<2x32x384xf32> to vector<2x32x32xf32>
    %46 = arith.truncf %45 : vector<2x32x32xf32> to vector<2x32x32xbf16>
    %cst_18 = arith.constant dense<0.000000e+00> : vector<2x32x32xf32>
    %47 = tpu.matmul %42, %44, %cst_18 {dimension_numbers = #tpu.dot_dimension_numbers<[2], [2], [1], [1], [0, 0, 0, 1, 1, 1], [0], [0]>} : vector<2x32x32xbf16>, vector<2x32x32xbf16>, vector<2x32x32xf32> -> vector<2x32x32xf32>
    %cst_19 = arith.constant 0.176776692 : f32
    %48 = vector.broadcast %cst_19 : f32 to vector<2x32x32xf32>
    %49 = arith.mulf %47, %48 : vector<2x32x32xf32>
    %cst_20 = arith.constant dense<0xFF800000> : vector<2x32xf32>
    %50 = vector.multi_reduction <maximumf>, %49, %cst_20 [2] : vector<2x32x32xf32> to vector<2x32xf32>
    %51 = vector.shape_cast %50 : vector<2x32xf32> to vector<2x32x1xf32>
    %52 = vector.broadcast %51 : vector<2x32x1xf32> to vector<2x32x32xf32>
    %53 = arith.subf %49, %52 : vector<2x32x32xf32>
    %54 = math.exp %53 : vector<2x32x32xf32>
    %cst_21 = arith.constant dense<0.000000e+00> : vector<2x32xf32>
    %55 = vector.multi_reduction <add>, %54, %cst_21 [2] : vector<2x32x32xf32> to vector<2x32xf32>
    %56 = vector.shape_cast %55 : vector<2x32xf32> to vector<2x32x1xf32>
    %57 = vector.broadcast %56 : vector<2x32x1xf32> to vector<2x32x32xf32>
    %58 = arith.divf %54, %57 : vector<2x32x32xf32>
    %59 = arith.truncf %58 : vector<2x32x32xf32> to vector<2x32x32xbf16>
    %cst_22 = arith.constant dense<0.000000e+00> : vector<2x32x32xf32>
    %60 = tpu.matmul %59, %46, %cst_22 {dimension_numbers = #tpu.dot_dimension_numbers<[2], [1], [1], [2], [0, 0, 0, 1, 1, 2], [0], [0]>} : vector<2x32x32xbf16>, vector<2x32x32xbf16>, vector<2x32x32xf32> -> vector<2x32x32xf32>
    %61 = vector.shape_cast %60 : vector<2x32x32xf32> to vector<64x32xf32>
    %62 = arith.truncf %61 : vector<64x32xf32> to vector<64x32xbf16>
    %63 = vector.extract_strided_slice %14 {offsets = [32, 0], sizes = [32, 128], strides = [1, 1]} : vector<128x128xbf16> to vector<32x128xbf16>
    %cst_23 = arith.constant dense<0.000000e+00> : vector<64x128xf32>
    %64 = tpu.matmul %62, %63, %cst_23 {dimension_numbers = #tpu.dot_dimension_numbers<[1], [0], [0], [1], [0, 0, 1, 1], [], []>} : vector<64x32xbf16>, vector<32x128xbf16>, vector<64x128xf32> -> vector<64x128xf32>
    %65 = arith.addf %40, %64 : vector<64x128xf32>
    %66 = vector.extract_strided_slice %12 {offsets = [0, 0, 64], sizes = [2, 32, 32], strides = [1, 1, 1]} : vector<2x32x384xf32> to vector<2x32x32xf32>
    %67 = arith.truncf %66 : vector<2x32x32xf32> to vector<2x32x32xbf16>
    %68 = vector.extract_strided_slice %12 {offsets = [0, 0, 192], sizes = [2, 32, 32], strides = [1, 1, 1]} : vector<2x32x384xf32> to vector<2x32x32xf32>
    %69 = arith.truncf %68 : vector<2x32x32xf32> to vector<2x32x32xbf16>
    %70 = vector.extract_strided_slice %12 {offsets = [0, 0, 320], sizes = [2, 32, 32], strides = [1, 1, 1]} : vector<2x32x384xf32> to vector<2x32x32xf32>
    %71 = arith.truncf %70 : vector<2x32x32xf32> to vector<2x32x32xbf16>
    %cst_24 = arith.constant dense<0.000000e+00> : vector<2x32x32xf32>
    %72 = tpu.matmul %67, %69, %cst_24 {dimension_numbers = #tpu.dot_dimension_numbers<[2], [2], [1], [1], [0, 0, 0, 1, 1, 1], [0], [0]>} : vector<2x32x32xbf16>, vector<2x32x32xbf16>, vector<2x32x32xf32> -> vector<2x32x32xf32>
    %cst_25 = arith.constant 0.176776692 : f32
    %73 = vector.broadcast %cst_25 : f32 to vector<2x32x32xf32>
    %74 = arith.mulf %72, %73 : vector<2x32x32xf32>
    %cst_26 = arith.constant dense<0xFF800000> : vector<2x32xf32>
    %75 = vector.multi_reduction <maximumf>, %74, %cst_26 [2] : vector<2x32x32xf32> to vector<2x32xf32>
    %76 = vector.shape_cast %75 : vector<2x32xf32> to vector<2x32x1xf32>
    %77 = vector.broadcast %76 : vector<2x32x1xf32> to vector<2x32x32xf32>
    %78 = arith.subf %74, %77 : vector<2x32x32xf32>
    %79 = math.exp %78 : vector<2x32x32xf32>
    %cst_27 = arith.constant dense<0.000000e+00> : vector<2x32xf32>
    %80 = vector.multi_reduction <add>, %79, %cst_27 [2] : vector<2x32x32xf32> to vector<2x32xf32>
    %81 = vector.shape_cast %80 : vector<2x32xf32> to vector<2x32x1xf32>
    %82 = vector.broadcast %81 : vector<2x32x1xf32> to vector<2x32x32xf32>
    %83 = arith.divf %79, %82 : vector<2x32x32xf32>
    %84 = arith.truncf %83 : vector<2x32x32xf32> to vector<2x32x32xbf16>
    %cst_28 = arith.constant dense<0.000000e+00> : vector<2x32x32xf32>
    %85 = tpu.matmul %84, %71, %cst_28 {dimension_numbers = #tpu.dot_dimension_numbers<[2], [1], [1], [2], [0, 0, 0, 1, 1, 2], [0], [0]>} : vector<2x32x32xbf16>, vector<2x32x32xbf16>, vector<2x32x32xf32> -> vector<2x32x32xf32>
    %86 = vector.shape_cast %85 : vector<2x32x32xf32> to vector<64x32xf32>
    %87 = arith.truncf %86 : vector<64x32xf32> to vector<64x32xbf16>
    %88 = vector.extract_strided_slice %14 {offsets = [64, 0], sizes = [32, 128], strides = [1, 1]} : vector<128x128xbf16> to vector<32x128xbf16>
    %cst_29 = arith.constant dense<0.000000e+00> : vector<64x128xf32>
    %89 = tpu.matmul %87, %88, %cst_29 {dimension_numbers = #tpu.dot_dimension_numbers<[1], [0], [0], [1], [0, 0, 1, 1], [], []>} : vector<64x32xbf16>, vector<32x128xbf16>, vector<64x128xf32> -> vector<64x128xf32>
    %90 = arith.addf %65, %89 : vector<64x128xf32>
    %91 = vector.extract_strided_slice %12 {offsets = [0, 0, 96], sizes = [2, 32, 32], strides = [1, 1, 1]} : vector<2x32x384xf32> to vector<2x32x32xf32>
    %92 = arith.truncf %91 : vector<2x32x32xf32> to vector<2x32x32xbf16>
    %93 = vector.extract_strided_slice %12 {offsets = [0, 0, 224], sizes = [2, 32, 32], strides = [1, 1, 1]} : vector<2x32x384xf32> to vector<2x32x32xf32>
    %94 = arith.truncf %93 : vector<2x32x32xf32> to vector<2x32x32xbf16>
    %95 = vector.extract_strided_slice %12 {offsets = [0, 0, 352], sizes = [2, 32, 32], strides = [1, 1, 1]} : vector<2x32x384xf32> to vector<2x32x32xf32>
    %96 = arith.truncf %95 : vector<2x32x32xf32> to vector<2x32x32xbf16>
    %cst_30 = arith.constant dense<0.000000e+00> : vector<2x32x32xf32>
    %97 = tpu.matmul %92, %94, %cst_30 {dimension_numbers = #tpu.dot_dimension_numbers<[2], [2], [1], [1], [0, 0, 0, 1, 1, 1], [0], [0]>} : vector<2x32x32xbf16>, vector<2x32x32xbf16>, vector<2x32x32xf32> -> vector<2x32x32xf32>
    %cst_31 = arith.constant 0.176776692 : f32
    %98 = vector.broadcast %cst_31 : f32 to vector<2x32x32xf32>
    %99 = arith.mulf %97, %98 : vector<2x32x32xf32>
    %cst_32 = arith.constant dense<0xFF800000> : vector<2x32xf32>
    %100 = vector.multi_reduction <maximumf>, %99, %cst_32 [2] : vector<2x32x32xf32> to vector<2x32xf32>
    %101 = vector.shape_cast %100 : vector<2x32xf32> to vector<2x32x1xf32>
    %102 = vector.broadcast %101 : vector<2x32x1xf32> to vector<2x32x32xf32>
    %103 = arith.subf %99, %102 : vector<2x32x32xf32>
    %104 = math.exp %103 : vector<2x32x32xf32>
    %cst_33 = arith.constant dense<0.000000e+00> : vector<2x32xf32>
    %105 = vector.multi_reduction <add>, %104, %cst_33 [2] : vector<2x32x32xf32> to vector<2x32xf32>
    %106 = vector.shape_cast %105 : vector<2x32xf32> to vector<2x32x1xf32>
    %107 = vector.broadcast %106 : vector<2x32x1xf32> to vector<2x32x32xf32>
    %108 = arith.divf %104, %107 : vector<2x32x32xf32>
    %109 = arith.truncf %108 : vector<2x32x32xf32> to vector<2x32x32xbf16>
    %cst_34 = arith.constant dense<0.000000e+00> : vector<2x32x32xf32>
    %110 = tpu.matmul %109, %96, %cst_34 {dimension_numbers = #tpu.dot_dimension_numbers<[2], [1], [1], [2], [0, 0, 0, 1, 1, 2], [0], [0]>} : vector<2x32x32xbf16>, vector<2x32x32xbf16>, vector<2x32x32xf32> -> vector<2x32x32xf32>
    %111 = vector.shape_cast %110 : vector<2x32x32xf32> to vector<64x32xf32>
    %112 = arith.truncf %111 : vector<64x32xf32> to vector<64x32xbf16>
    %113 = vector.extract_strided_slice %14 {offsets = [96, 0], sizes = [32, 128], strides = [1, 1]} : vector<128x128xbf16> to vector<32x128xbf16>
    %cst_35 = arith.constant dense<0.000000e+00> : vector<64x128xf32>
    %114 = tpu.matmul %112, %113, %cst_35 {dimension_numbers = #tpu.dot_dimension_numbers<[1], [0], [0], [1], [0, 0, 1, 1], [], []>} : vector<64x32xbf16>, vector<32x128xbf16>, vector<64x128xf32> -> vector<64x128xf32>
    %115 = arith.addf %90, %114 : vector<64x128xf32>
    %c0_36 = arith.constant 0 : index
    %c0_37 = arith.constant 0 : index
    %c0_38 = arith.constant 0 : index
    %116 = vector.load %arg10[%c0_36, %c0_37, %c0_38] : memref<1x1x128xf32, #tpu.memory_space<vmem>>, vector<1x1x128xf32>
    %117 = vector.shape_cast %116 : vector<1x1x128xf32> to vector<1x128xf32>
    %118 = vector.broadcast %117 : vector<1x128xf32> to vector<64x128xf32>
    %119 = arith.addf %115, %118 : vector<64x128xf32>
    %120 = arith.addf %3, %119 : vector<64x128xf32>
    %c0_39 = arith.constant 0 : index
    %c0_40 = arith.constant 0 : index
    %c0_41 = arith.constant 0 : index
    %121 = vector.load %arg11[%c0_39, %c0_40, %c0_41] : memref<1x1x128xf32, #tpu.memory_space<vmem>>, vector<1x1x128xf32>
    %122 = vector.shape_cast %121 : vector<1x1x128xf32> to vector<1x128xf32>
    %c0_42 = arith.constant 0 : index
    %c0_43 = arith.constant 0 : index
    %c0_44 = arith.constant 0 : index
    %123 = vector.load %arg12[%c0_42, %c0_43, %c0_44] : memref<1x1x128xf32, #tpu.memory_space<vmem>>, vector<1x1x128xf32>
    %124 = vector.shape_cast %123 : vector<1x1x128xf32> to vector<1x128xf32>
    %cst_45 = arith.constant dense<0.000000e+00> : vector<64xf32>
    %125 = vector.multi_reduction <add>, %120, %cst_45 [1] : vector<64x128xf32> to vector<64xf32>
    %126 = vector.shape_cast %125 : vector<64xf32> to vector<64x1xf32>
    %cst_46 = arith.constant 1.280000e+02 : f32
    %127 = vector.broadcast %cst_46 : f32 to vector<64x1xf32>
    %128 = arith.divf %126, %127 : vector<64x1xf32>
    %129 = vector.broadcast %128 : vector<64x1xf32> to vector<64x128xf32>
    %130 = arith.subf %120, %129 : vector<64x128xf32>
    %131 = arith.mulf %130, %130 : vector<64x128xf32>
    %cst_47 = arith.constant dense<0.000000e+00> : vector<64xf32>
    %132 = vector.multi_reduction <add>, %131, %cst_47 [1] : vector<64x128xf32> to vector<64xf32>
    %133 = vector.shape_cast %132 : vector<64xf32> to vector<64x1xf32>
    %cst_48 = arith.constant 1.280000e+02 : f32
    %134 = vector.broadcast %cst_48 : f32 to vector<64x1xf32>
    %135 = arith.divf %133, %134 : vector<64x1xf32>
    %136 = vector.broadcast %128 : vector<64x1xf32> to vector<64x128xf32>
    %137 = arith.subf %120, %136 : vector<64x128xf32>
    %cst_49 = arith.constant 9.99999974E-6 : f32
    %138 = vector.broadcast %cst_49 : f32 to vector<64x1xf32>
    %139 = arith.addf %135, %138 : vector<64x1xf32>
    %140 = math.rsqrt %139 : vector<64x1xf32>
    %141 = vector.broadcast %140 : vector<64x1xf32> to vector<64x128xf32>
    %142 = arith.mulf %137, %141 : vector<64x128xf32>
    %143 = vector.broadcast %122 : vector<1x128xf32> to vector<64x128xf32>
    %144 = arith.mulf %142, %143 : vector<64x128xf32>
    %145 = vector.broadcast %124 : vector<1x128xf32> to vector<64x128xf32>
    %146 = arith.addf %144, %145 : vector<64x128xf32>
    %147 = arith.truncf %146 : vector<64x128xf32> to vector<64x128xbf16>
    %c0_50 = arith.constant 0 : index
    %c0_51 = arith.constant 0 : index
    %c0_52 = arith.constant 0 : index
    %148 = vector.load %arg13[%c0_50, %c0_51, %c0_52] : memref<1x128x256xbf16, #tpu.memory_space<vmem>>, vector<1x128x256xbf16>
    %149 = vector.shape_cast %148 : vector<1x128x256xbf16> to vector<128x256xbf16>
    %cst_53 = arith.constant dense<0.000000e+00> : vector<64x256xf32>
    %150 = tpu.matmul %147, %149, %cst_53 {dimension_numbers = #tpu.dot_dimension_numbers<[1], [0], [0], [1], [0, 0, 1, 1], [], []>} : vector<64x128xbf16>, vector<128x256xbf16>, vector<64x256xf32> -> vector<64x256xf32>
    %c0_54 = arith.constant 0 : index
    %c0_55 = arith.constant 0 : index
    %c0_56 = arith.constant 0 : index
    %151 = vector.load %arg14[%c0_54, %c0_55, %c0_56] : memref<1x1x256xf32, #tpu.memory_space<vmem>>, vector<1x1x256xf32>
    %152 = vector.shape_cast %151 : vector<1x1x256xf32> to vector<1x256xf32>
    %153 = vector.broadcast %152 : vector<1x256xf32> to vector<64x256xf32>
    %154 = arith.addf %150, %153 : vector<64x256xf32>
    %cst_57 = arith.constant 0.000000e+00 : f32
    %155 = vector.broadcast %cst_57 : f32 to vector<64x256xf32>
    %156 = arith.maximumf %154, %155 : vector<64x256xf32>
    %157 = arith.truncf %156 : vector<64x256xf32> to vector<64x256xbf16>
    %c0_58 = arith.constant 0 : index
    %c0_59 = arith.constant 0 : index
    %c0_60 = arith.constant 0 : index
    %158 = vector.load %arg15[%c0_58, %c0_59, %c0_60] : memref<1x256x128xbf16, #tpu.memory_space<vmem>>, vector<1x256x128xbf16>
    %159 = vector.shape_cast %158 : vector<1x256x128xbf16> to vector<256x128xbf16>
    %cst_61 = arith.constant dense<0.000000e+00> : vector<64x128xf32>
    %160 = tpu.matmul %157, %159, %cst_61 {dimension_numbers = #tpu.dot_dimension_numbers<[1], [0], [0], [1], [0, 0, 1, 1], [], []>} : vector<64x256xbf16>, vector<256x128xbf16>, vector<64x128xf32> -> vector<64x128xf32>
    %c0_62 = arith.constant 0 : index
    %c0_63 = arith.constant 0 : index
    %c0_64 = arith.constant 0 : index
    %161 = vector.load %arg16[%c0_62, %c0_63, %c0_64] : memref<1x1x128xf32, #tpu.memory_space<vmem>>, vector<1x1x128xf32>
    %162 = vector.shape_cast %161 : vector<1x1x128xf32> to vector<1x128xf32>
    %163 = vector.broadcast %162 : vector<1x128xf32> to vector<64x128xf32>
    %164 = arith.addf %160, %163 : vector<64x128xf32>
    %165 = arith.addf %146, %164 : vector<64x128xf32>
    %c0_65 = arith.constant 0 : index
    %c0_66 = arith.constant 0 : index
    %c0_67 = arith.constant 0 : index
    %166 = vector.load %arg17[%c0_65, %c0_66, %c0_67] : memref<1x1x128xf32, #tpu.memory_space<vmem>>, vector<1x1x128xf32>
    %167 = vector.shape_cast %166 : vector<1x1x128xf32> to vector<1x128xf32>
    %c0_68 = arith.constant 0 : index
    %c0_69 = arith.constant 0 : index
    %c0_70 = arith.constant 0 : index
    %168 = vector.load %arg18[%c0_68, %c0_69, %c0_70] : memref<1x1x128xf32, #tpu.memory_space<vmem>>, vector<1x1x128xf32>
    %169 = vector.shape_cast %168 : vector<1x1x128xf32> to vector<1x128xf32>
    %cst_71 = arith.constant dense<0.000000e+00> : vector<64xf32>
    %170 = vector.multi_reduction <add>, %165, %cst_71 [1] : vector<64x128xf32> to vector<64xf32>
    %171 = vector.shape_cast %170 : vector<64xf32> to vector<64x1xf32>
    %cst_72 = arith.constant 1.280000e+02 : f32
    %172 = vector.broadcast %cst_72 : f32 to vector<64x1xf32>
    %173 = arith.divf %171, %172 : vector<64x1xf32>
    %174 = vector.broadcast %173 : vector<64x1xf32> to vector<64x128xf32>
    %175 = arith.subf %165, %174 : vector<64x128xf32>
    %176 = arith.mulf %175, %175 : vector<64x128xf32>
    %cst_73 = arith.constant dense<0.000000e+00> : vector<64xf32>
    %177 = vector.multi_reduction <add>, %176, %cst_73 [1] : vector<64x128xf32> to vector<64xf32>
    %178 = vector.shape_cast %177 : vector<64xf32> to vector<64x1xf32>
    %cst_74 = arith.constant 1.280000e+02 : f32
    %179 = vector.broadcast %cst_74 : f32 to vector<64x1xf32>
    %180 = arith.divf %178, %179 : vector<64x1xf32>
    %181 = vector.broadcast %173 : vector<64x1xf32> to vector<64x128xf32>
    %182 = arith.subf %165, %181 : vector<64x128xf32>
    %cst_75 = arith.constant 9.99999974E-6 : f32
    %183 = vector.broadcast %cst_75 : f32 to vector<64x1xf32>
    %184 = arith.addf %180, %183 : vector<64x1xf32>
    %185 = math.rsqrt %184 : vector<64x1xf32>
    %186 = vector.broadcast %185 : vector<64x1xf32> to vector<64x128xf32>
    %187 = arith.mulf %182, %186 : vector<64x128xf32>
    %188 = vector.broadcast %167 : vector<1x128xf32> to vector<64x128xf32>
    %189 = arith.mulf %187, %188 : vector<64x128xf32>
    %190 = vector.broadcast %169 : vector<1x128xf32> to vector<64x128xf32>
    %191 = arith.addf %189, %190 : vector<64x128xf32>
    %c0_76 = arith.constant 0 : index
    %c0_77 = arith.constant 0 : index
    %192 = vector.load %arg22[%c0_76, %c0_77] : memref<64x128xf32, #tpu.memory_space<vmem>>, vector<64x128xf32>
    tpu.vector_store %arg22[%c0_76, %c0_77], %191 {strides = array<i32>} : memref<64x128xf32, #tpu.memory_space<vmem>>, vector<64x128xf32>,
    %c1_i32 = arith.constant 1 : i32
    %193 = arith.cmpi eq, %arg0, %c1_i32 : i32
    %194 = arith.extui %193 : i1 to i32
    %c0_i32_78 = arith.constant 0 : i32
    %195 = arith.cmpi ne, %194, %c0_i32_78 : i32
    scf.if %195 {
      %196 = vector.extract_strided_slice %191 {offsets = [0, 0], sizes = [1, 128], strides = [1, 1]} : vector<64x128xf32> to vector<1x128xf32>
      %197 = vector.extract_strided_slice %191 {offsets = [32, 0], sizes = [1, 128], strides = [1, 1]} : vector<64x128xf32> to vector<1x128xf32>
      %198 = tpu.concatenate %196, %197 in 0 : vector<1x128xf32>, vector<1x128xf32> -> vector<2x128xf32>
      %199 = arith.truncf %198 : vector<2x128xf32> to vector<2x128xbf16>
      %c0_79 = arith.constant 0 : index
      %c0_80 = arith.constant 0 : index
      %200 = vector.load %arg19[%c0_79, %c0_80] : memref<128x128xbf16, #tpu.memory_space<vmem>>, vector<128x128xbf16>
      %cst_81 = arith.constant dense<0.000000e+00> : vector<2x128xf32>
      %201 = tpu.matmul %199, %200, %cst_81 {dimension_numbers = #tpu.dot_dimension_numbers<[1], [0], [0], [1], [0, 0, 1, 1], [], []>} : vector<2x128xbf16>, vector<128x128xbf16>, vector<2x128xf32> -> vector<2x128xf32>
      %c0_82 = arith.constant 0 : index
      %c0_83 = arith.constant 0 : index
      %202 = vector.load %arg20[%c0_82, %c0_83] : memref<1x128xf32, #tpu.memory_space<vmem>>, vector<1x128xf32>
      %203 = vector.broadcast %202 : vector<1x128xf32> to vector<2x128xf32>
      %204 = arith.addf %201, %203 : vector<2x128xf32>
      %c0_84 = arith.constant 0 : index
      %c0_85 = arith.constant 0 : index
      %205 = vector.load %arg21[%c0_84, %c0_85] : memref<2x128xf32, #tpu.memory_space<vmem>>, vector<2x128xf32>
      tpu.vector_store %arg21[%c0_84, %c0_85], %204 {strides = array<i32>} : memref<2x128xf32, #tpu.memory_space<vmem>>, vector<2x128xf32>,
    } else {
    }
    return
  }
  func.func @transform_0(%arg0: i32) -> (i32, i32) {
    %c0_i32 = arith.constant 0 : i32
    %c0_i32_0 = arith.constant 0 : i32
    %c0_i32_1 = arith.constant 0 : i32
    return %c0_i32, %c0_i32_0 : i32, i32
  }
  func.func @transform_1(%arg0: i32) -> (i32, i32) {
    %c0_i32 = arith.constant 0 : i32
    %c0_i32_0 = arith.constant 0 : i32
    %c0_i32_1 = arith.constant 0 : i32
    return %c0_i32, %c0_i32_0 : i32, i32
  }
  func.func @transform_2(%arg0: i32) -> (i32, i32) {
    %c0_i32 = arith.constant 0 : i32
    %c0_i32_0 = arith.constant 0 : i32
    %c0_i32_1 = arith.constant 0 : i32
    return %c0_i32, %c0_i32_0 : i32, i32
  }
  func.func @transform_3(%arg0: i32) -> (i32, i32) {
    %c0_i32 = arith.constant 0 : i32
    %c0_i32_0 = arith.constant 0 : i32
    %c0_i32_1 = arith.constant 0 : i32
    return %c0_i32, %c0_i32_0 : i32, i32
  }
  func.func @transform_4(%arg0: i32) -> (i32, i32) {
    %c0_i32 = arith.constant 0 : i32
    %c0_i32_0 = arith.constant 0 : i32
    %c0_i32_1 = arith.constant 0 : i32
    return %c0_i32, %c0_i32_0 : i32, i32
  }
  func.func @transform_5(%arg0: i32) -> (i32, i32) {
    %c0_i32 = arith.constant 0 : i32
    %c0_i32_0 = arith.constant 0 : i32
    %c0_i32_1 = arith.constant 0 : i32
    return %c0_i32, %c0_i32_0 : i32, i32
  }
  func.func @transform_6(%arg0: i32) -> (i32, i32, i32) {
    %c0_i32 = arith.constant 0 : i32
    %c0_i32_0 = arith.constant 0 : i32
    %c0_i32_1 = arith.constant 0 : i32
    return %arg0, %c0_i32, %c0_i32_0 : i32, i32, i32
  }
  func.func @transform_7(%arg0: i32) -> (i32, i32, i32) {
    %c0_i32 = arith.constant 0 : i32
    %c0_i32_0 = arith.constant 0 : i32
    %c0_i32_1 = arith.constant 0 : i32
    return %arg0, %c0_i32, %c0_i32_0 : i32, i32, i32
  }
  func.func @transform_8(%arg0: i32) -> (i32, i32, i32) {
    %c0_i32 = arith.constant 0 : i32
    %c0_i32_0 = arith.constant 0 : i32
    %c0_i32_1 = arith.constant 0 : i32
    return %arg0, %c0_i32, %c0_i32_0 : i32, i32, i32
  }
  func.func @transform_9(%arg0: i32) -> (i32, i32, i32) {
    %c0_i32 = arith.constant 0 : i32
    %c0_i32_0 = arith.constant 0 : i32
    %c0_i32_1 = arith.constant 0 : i32
    return %arg0, %c0_i32, %c0_i32_0 : i32, i32, i32
  }
  func.func @transform_10(%arg0: i32) -> (i32, i32, i32) {
    %c0_i32 = arith.constant 0 : i32
    %c0_i32_0 = arith.constant 0 : i32
    %c0_i32_1 = arith.constant 0 : i32
    return %arg0, %c0_i32, %c0_i32_0 : i32, i32, i32
  }
  func.func @transform_11(%arg0: i32) -> (i32, i32, i32) {
    %c0_i32 = arith.constant 0 : i32
    %c0_i32_0 = arith.constant 0 : i32
    %c0_i32_1 = arith.constant 0 : i32
    return %arg0, %c0_i32, %c0_i32_0 : i32, i32, i32
  }
  func.func @transform_12(%arg0: i32) -> (i32, i32, i32) {
    %c0_i32 = arith.constant 0 : i32
    %c0_i32_0 = arith.constant 0 : i32
    %c0_i32_1 = arith.constant 0 : i32
    return %arg0, %c0_i32, %c0_i32_0 : i32, i32, i32
  }
  func.func @transform_13(%arg0: i32) -> (i32, i32, i32) {
    %c0_i32 = arith.constant 0 : i32
    %c0_i32_0 = arith.constant 0 : i32
    %c0_i32_1 = arith.constant 0 : i32
    return %arg0, %c0_i32, %c0_i32_0 : i32, i32, i32
  }
  func.func @transform_14(%arg0: i32) -> (i32, i32, i32) {
    %c0_i32 = arith.constant 0 : i32
    %c0_i32_0 = arith.constant 0 : i32
    %c0_i32_1 = arith.constant 0 : i32
    return %arg0, %c0_i32, %c0_i32_0 : i32, i32, i32
  }
  func.func @transform_15(%arg0: i32) -> (i32, i32, i32) {
    %c0_i32 = arith.constant 0 : i32
    %c0_i32_0 = arith.constant 0 : i32
    %c0_i32_1 = arith.constant 0 : i32
    return %arg0, %c0_i32, %c0_i32_0 : i32, i32, i32
  }
  func.func @transform_16(%arg0: i32) -> (i32, i32, i32) {
    %c0_i32 = arith.constant 0 : i32
    %c0_i32_0 = arith.constant 0 : i32
    %c0_i32_1 = arith.constant 0 : i32
    return %arg0, %c0_i32, %c0_i32_0 : i32, i32, i32
  }
  func.func @transform_17(%arg0: i32) -> (i32, i32, i32) {
    %c0_i32 = arith.constant 0 : i32
    %c0_i32_0 = arith.constant 0 : i32
    %c0_i32_1 = arith.constant 0 : i32
    return %arg0, %c0_i32, %c0_i32_0 : i32, i32, i32
  }
  func.func @transform_18(%arg0: i32) -> (i32, i32) {
    %c0_i32 = arith.constant 0 : i32
    %c0_i32_0 = arith.constant 0 : i32
    %c0_i32_1 = arith.constant 0 : i32
    return %c0_i32, %c0_i32_0 : i32, i32
  }
  func.func @transform_19(%arg0: i32) -> (i32, i32) {
    %c0_i32 = arith.constant 0 : i32
    %c0_i32_0 = arith.constant 0 : i32
    %c0_i32_1 = arith.constant 0 : i32
    return %c0_i32, %c0_i32_0 : i32, i32
  }
  func.func @transform_20(%arg0: i32) -> (i32, i32) {
    %c0_i32 = arith.constant 0 : i32
    %c0_i32_0 = arith.constant 0 : i32
    %c0_i32_1 = arith.constant 0 : i32
    return %c0_i32, %c0_i32_0 : i32, i32
  }
}

</mosaic_0001>

<llo_original>
// kernel: vlm_forward.1
$region0: #{vlm_forward.1}
  #allocation0 [shape = 'u32[]', space=smem, size = 0x4, offset = 0x4, fixed_abs, tag = 'smem constant byte address 0x4 - core index']
  #allocation1 [shape = 'u32[72,128]{1,0:T(1,128)}', space=vmem, size = 0x9000, scoped, tag = 'internal scratch']
  #allocation2 [shape = 'f32[64,128]{1,0:T(8,128)}', space=vmem, size = 0x8000, scoped, tag = 'scratch operand']
  %s0 = inlined_call_operand.hbm [shape: f32[32,768], index: 0, kind: input, shape index: {}]
  %s1 = inlined_call_operand.vmem [shape: f32[16,128], index: 1, kind: input, shape index: {}]
  %s2 = inlined_call_operand.hbm [shape: bf16[768,128], index: 2, kind: input, shape index: {}]
  %s3 = inlined_call_operand.hbm [shape: f32[1,128], index: 3, kind: input, shape index: {}]
  %s4 = inlined_call_operand.hbm [shape: f32[1,128], index: 4, kind: input, shape index: {}]
  %s5 = inlined_call_operand.hbm [shape: f32[1,128], index: 5, kind: input, shape index: {}]
  %s6 = inlined_call_operand.hbm [shape: bf16[2,128,384], index: 6, kind: input, shape index: {}]
  %s7 = inlined_call_operand.hbm [shape: f32[2,1,384], index: 7, kind: input, shape index: {}]
  %s8 = inlined_call_operand.hbm [shape: bf16[2,128,128], index: 8, kind: input, shape index: {}]
  %s9 = inlined_call_operand.hbm [shape: f32[2,1,128], index: 9, kind: input, shape index: {}]
  %s10 = inlined_call_operand.hbm [shape: f32[2,1,128], index: 10, kind: input, shape index: {}]
  %s11 = inlined_call_operand.hbm [shape: f32[2,1,128], index: 11, kind: input, shape index: {}]
  %s12 = inlined_call_operand.hbm [shape: bf16[2,128,256], index: 12, kind: input, shape index: {}]
  %s13 = inlined_call_operand.hbm [shape: f32[2,1,256], index: 13, kind: input, shape index: {}]
  %s14 = inlined_call_operand.hbm [shape: bf16[2,256,128], index: 14, kind: input, shape index: {}]
  %s15 = inlined_call_operand.hbm [shape: f32[2,1,128], index: 15, kind: input, shape index: {}]
  %s16 = inlined_call_operand.hbm [shape: f32[2,1,128], index: 16, kind: input, shape index: {}]
  %s17 = inlined_call_operand.hbm [shape: f32[2,1,128], index: 17, kind: input, shape index: {}]
  %s18 = inlined_call_operand.hbm [shape: bf16[128,128], index: 18, kind: input, shape index: {}]
  %s19 = inlined_call_operand.hbm [shape: f32[1,128], index: 19, kind: input, shape index: {}]
  %s20 = inlined_call_operand.hbm [shape: f32[2,128], index: 20, kind: output, shape index: {}]
  %s21 = sld [smem:[#allocation0]]
  $region197: #{vlm_forward.1} parent=0
    _
  %s23 = ssub.s32 1, %s21
  %s24 = scalar_select 0, %s23, %s21
  $region1: #{vlm_forward.1} parent=0
    #allocation3 [shape = 'u8[98304]{0}', space=vmem, size = 0x18000, scoped, tag = 'input window, operand 0, single buffered']
    #allocation4 [shape = 's32[2]{0}', space=sflag, size = 0x8, scoped, tag = 'scoped memory for vlm_forward.1']
    #allocation5 [shape = 's32[2]{0}', space=sflag, size = 0x8, scoped, tag = 'scoped memory for vlm_forward.1']
    #allocation6 [shape = 'u8[196608]{0}', space=vmem, size = 0x30000, scoped, tag = 'input window, operand 2, single buffered']
    #allocation7 [shape = 's32[1]{0}', space=sflag, size = 0x4, scoped, tag = 'scoped memory for vlm_forward.1']
    #allocation8 [shape = 'u8[512]{0}', space=vmem, size = 0x400, scoped, tag = 'input window, operand 3, single buffered']
    #allocation9 [shape = 'u8[512]{0}', space=vmem, size = 0x400, scoped, tag = 'input window, operand 4, single buffered']
    #allocation10 [shape = 's32[1]{0}', space=sflag, size = 0x4, scoped, tag = 'scoped memory for vlm_forward.1']
    #allocation11 [shape = 'u8[512]{0}', space=vmem, size = 0x400, scoped, tag = 'input window, operand 5, single buffered']
    #allocation12 [shape = 'u8[196608]{0}', space=vmem, size = 0x30000, scoped, tag = 'input window, operand 6']
    #allocation13 [shape = 's32[2]{0}', space=sflag, size = 0x8, scoped, tag = 'scoped memory for vlm_forward.1']
    #allocation14 [shape = 'u8[3072]{0}', space=vmem, size = 0xc00, scoped, tag = 'input window, operand 7']
    #allocation15 [shape = 'u8[65536]{0}', space=vmem, size = 0x10000, scoped, tag = 'input window, operand 8']
    #allocation16 [shape = 's32[2]{0}', space=sflag, size = 0x8, scoped, tag = 'scoped memory for vlm_forward.1']
    #allocation17 [shape = 'u8[1024]{0}', space=vmem, size = 0x400, scoped, tag = 'input window, operand 9']
    #allocation18 [shape = 'u8[1024]{0}', space=vmem, size = 0x400, scoped, tag = 'input window, operand 10']
    #allocation19 [shape = 's32[2]{0}', space=sflag, size = 0x8, scoped, tag = 'scoped memory for vlm_forward.1']
    #allocation20 [shape = 'u8[1024]{0}', space=vmem, size = 0x400, scoped, tag = 'input window, operand 11']
    #allocation21 [shape = 'u8[131072]{0}', space=vmem, size = 0x20000, scoped, tag = 'input window, operand 12']
    #allocation22 [shape = 's32[2]{0}', space=sflag, size = 0x8, scoped, tag = 'scoped memory for vlm_forward.1']
    #allocation23 [shape = 'u8[2048]{0}', space=vmem, size = 0x800, scoped, tag = 'input window, operand 13']
    #allocation24 [shape = 'u8[131072]{0}', space=vmem, size = 0x20000, scoped, tag = 'input window, operand 14']
    #allocation25 [shape = 's32[2]{0}', space=sflag, size = 0x8, scoped, tag = 'scoped memory for vlm_forward.1']
    #allocation26 [shape = 'u8[1024]{0}', space=vmem, size = 0x400, scoped, tag = 'input window, operand 15']
    #allocation27 [shape = 'u8[1024]{0}', space=vmem, size = 0x400, scoped, tag = 'input window, operand 16']
    #allocation28 [shape = 's32[2]{0}', space=sflag, size = 0x8, scoped, tag = 'scoped memory for vlm_forward.1']
    #allocation29 [shape = 'u8[1024]{0}', space=vmem, size = 0x400, scoped, tag = 'input window, operand 17']
    #allocation30 [shape = 'u8[32768]{0}', space=vmem, size = 0x8000, scoped, tag = 'input window, operand 18, single buffered']
    #allocation31 [shape = 's32[1]{0}', space=sflag, size = 0x4, scoped, tag = 'scoped memory for vlm_forward.1']
    #allocation32 [shape = 'u8[512]{0}', space=vmem, size = 0x400, scoped, tag = 'input window, operand 19, single buffered']
    #allocation33 [shape = 'u8[1024]{0}', space=vmem, size = 0x400, scoped, tag = 'output window, operand 0, single buffered']
    %25 = vsyncpa [#allocation4], 0
    %26 = vsyncpa [#allocation7], 0
    %27 = vsyncpa [#allocation10], 0
    %28 = vsyncpa [#allocation13], 0
    %s29 = scalar_lea.sflag [#allocation13], 1
    %30 = vsyncpa %s29, 0
    %31 = vsyncpa [#allocation16], 0
    %s32 = scalar_lea.sflag [#allocation16], 1
    %33 = vsyncpa %s32, 0
    %34 = vsyncpa [#allocation19], 0
    %s35 = scalar_lea.sflag [#allocation19], 1
    %36 = vsyncpa %s35, 0
    %37 = vsyncpa [#allocation22], 0
    %s38 = scalar_lea.sflag [#allocation22], 1
    %39 = vsyncpa %s38, 0
    %40 = vsyncpa [#allocation25], 0
    %s41 = scalar_lea.sflag [#allocation25], 1
    %42 = vsyncpa %s41, 0
    %43 = vsyncpa [#allocation28], 0
    %s44 = scalar_lea.sflag [#allocation28], 1
    %45 = vsyncpa %s44, 0
    %46 = vsyncpa [#allocation31], 0
    %47 = vsyncpa [#allocation5], 0
    loop: start=0, step=1, limit=4
    $region2: #{vlm_forward.1} parent=1 // loop_pre_header
      _
    $region3: #{vlm_forward.1} parent=1 // loop_header
      %s49 = sphi 0, %s53
      %p50 = scmp.ge.s32.totalorder %s49, 4
      %s57 = sphi 0, %s57
      %s59 = sphi 0, %s57
      %s60 = sphi 0, %s59
      %s74 = sphi 0, %s60
      %s78 = sphi 0, %s78
      %s80 = sphi 0, %s78
      %s81 = sphi 0, %s80
      %s95 = sphi 0, %s81
      %s99 = sphi 0, %s99
      %s101 = sphi 0, %s99
      %s102 = sphi 0, %s101
      %s116 = sphi 0, %s102
      %s120 = sphi 0, %s120
      %s122 = sphi 0, %s120
      %s123 = sphi 0, %s122
      %s137 = sphi 0, %s123
      %s141 = sphi 0, %s141
      %s143 = sphi 0, %s141
      %s144 = sphi 0, %s143
      %s158 = sphi 0, %s144
      %s162 = sphi 0, %s162
      %s164 = sphi 0, %s162
      %s165 = sphi 0, %s164
      %s179 = sphi 0, %s165
      %s185 = sphi 0, %s187
      %s188 = sphi 0, %s185
      %s189 = sphi 0, %s188
      %s205 = sphi 0, %s189
      %s211 = sphi 0, %s213
      %s214 = sphi 0, %s211
      %s215 = sphi 0, %s214
      %s231 = sphi 0, %s215
      %s237 = sphi 0, %s239
      %s240 = sphi 0, %s237
      %s241 = sphi 0, %s240
      %s257 = sphi 0, %s241
      %s263 = sphi 0, %s265
      %s266 = sphi 0, %s263
      %s267 = sphi 0, %s266
      %s283 = sphi 0, %s267
      %s289 = sphi 0, %s291
      %s292 = sphi 0, %s289
      %s293 = sphi 0, %s292
      %s309 = sphi 0, %s293
      %s315 = sphi 0, %s317
      %s318 = sphi 0, %s315
      %s319 = sphi 0, %s318
      %s335 = sphi 0, %s319
      %s341 = sphi 0, %s343
      %s344 = sphi 0, %s341
      %s345 = sphi 0, %s344
      %s361 = sphi 0, %s345
      %s367 = sphi 0, %s369
      %s370 = sphi 0, %s367
      %s371 = sphi 0, %s370
      %s387 = sphi 0, %s371
      %s393 = sphi 0, %s395
      %s396 = sphi 0, %s393
      %s397 = sphi 0, %s396
      %s413 = sphi 0, %s397
      %s419 = sphi 0, %s421
      %s422 = sphi 0, %s419
      %s423 = sphi 0, %s422
      %s439 = sphi 0, %s423
      %s445 = sphi 0, %s447
      %s448 = sphi 0, %s445
      %s449 = sphi 0, %s448
      %s465 = sphi 0, %s449
      %s471 = sphi 0, %s473
      %s474 = sphi 0, %s471
      %s475 = sphi 0, %s474
      %s491 = sphi 0, %s475
      %s495 = sphi 0, %s495
      %s497 = sphi 0, %s495
      %s498 = sphi 0, %s497
      %s512 = sphi 0, %s498
      %s516 = sphi 0, %s516
      %s518 = sphi 0, %s516
      %s519 = sphi 0, %s518
      %s533 = sphi 0, %s519
      %s537 = sphi 0, %s537
      %s539 = sphi 0, %s537
      %s540 = sphi 0, %s539
      %s554 = sphi 0, %s540
    $region4: #{vlm_forward.1} parent=1 // loop_header_branch
      %52 = sbr.rel (%p50) target = $region8
    $region5: #{vlm_forward.1} parent=1 // loop_body
      %s54 = ssub.s32 %s49, 1
      %s55 = ssub.s32 %s49, 2
      %s56 = sadd.s32 %s49, 1
      %s58 = sadd.s32 %s57, 1
      %p61 = scmp.eq.s32.totalorder %s49, 1
      %p62 = scmp.ne.s32.totalorder %s57, %s59
      %p63 = scmp.eq.s32.totalorder %s49, 0
      %p64 = por %p62, %p63
      %p65 = scmp.ne.s32.totalorder %s57, %s59
      %p66 = scmp.eq.s32.totalorder %s54, 1
      %p67 = por %p65, %p66
      %p68 = scmp.ne.s32.totalorder %s59, %s60
      %p69 = scmp.eq.s32.totalorder %s54, 0
      %p70 = por %p68, %p69
      %p71 = scmp.ne.s32.totalorder %s59, %s60
      %p72 = scmp.eq.s32.totalorder %s55, 1
      %p73 = por %p71, %p72
      %p75 = scmp.ne.s32.totalorder %s60, %s74
      %p76 = scmp.eq.s32.totalorder %s55, 0
      %p77 = por %p75, %p76
      %s79 = sadd.s32 %s78, 1
      %p82 = scmp.eq.s32.totalorder %s49, 1
      %p83 = scmp.ne.s32.totalorder %s78, %s80
      %p84 = scmp.eq.s32.totalorder %s49, 0
      %p85 = por %p83, %p84
      %p86 = scmp.ne.s32.totalorder %s78, %s80
      %p87 = scmp.eq.s32.totalorder %s54, 1
      %p88 = por %p86, %p87
      %p89 = scmp.ne.s32.totalorder %s80, %s81
      %p90 = scmp.eq.s32.totalorder %s54, 0
      %p91 = por %p89, %p90
      %p92 = scmp.ne.s32.totalorder %s80, %s81
      %p93 = scmp.eq.s32.totalorder %s55, 1
      %p94 = por %p92, %p93
      %p96 = scmp.ne.s32.totalorder %s81, %s95
      %p97 = scmp.eq.s32.totalorder %s55, 0
      %p98 = por %p96, %p97
      %s100 = sadd.s32 %s99, 1
      %p103 = scmp.eq.s32.totalorder %s49, 1
      %p104 = scmp.ne.s32.totalorder %s99, %s101
      %p105 = scmp.eq.s32.totalorder %s49, 0
      %p106 = por %p104, %p105
      %p107 = scmp.ne.s32.totalorder %s99, %s101
      %p108 = scmp.eq.s32.totalorder %s54, 1
      %p109 = por %p107, %p108
      %p110 = scmp.ne.s32.totalorder %s101, %s102
      %p111 = scmp.eq.s32.totalorder %s54, 0
      %p112 = por %p110, %p111
      %p113 = scmp.ne.s32.totalorder %s101, %s102
      %p114 = scmp.eq.s32.totalorder %s55, 1
      %p115 = por %p113, %p114
      %p117 = scmp.ne.s32.totalorder %s102, %s116
      %p118 = scmp.eq.s32.totalorder %s55, 0
      %p119 = por %p117, %p118
      %s121 = sadd.s32 %s120, 1
      %p124 = scmp.eq.s32.totalorder %s49, 1
      %p125 = scmp.ne.s32.totalorder %s120, %s122
      %p126 = scmp.eq.s32.totalorder %s49, 0
      %p127 = por %p125, %p126
      %p128 = scmp.ne.s32.totalorder %s120, %s122
      %p129 = scmp.eq.s32.totalorder %s54, 1
      %p130 = por %p128, %p129
      %p131 = scmp.ne.s32.totalorder %s122, %s123
      %p132 = scmp.eq.s32.totalorder %s54, 0
      %p133 = por %p131, %p132
      %p134 = scmp.ne.s32.totalorder %s122, %s123
      %p135 = scmp.eq.s32.totalorder %s55, 1
      %p136 = por %p134, %p135
      %p138 = scmp.ne.s32.totalorder %s123, %s137
      %p139 = scmp.eq.s32.totalorder %s55, 0
      %p140 = por %p138, %p139
      %s142 = sadd.s32 %s141, 1
      %p145 = scmp.eq.s32.totalorder %s49, 1
      %p146 = scmp.ne.s32.totalorder %s141, %s143
      %p147 = scmp.eq.s32.totalorder %s49, 0
      %p148 = por %p146, %p147
      %p149 = scmp.ne.s32.totalorder %s141, %s143
      %p150 = scmp.eq.s32.totalorder %s54, 1
      %p151 = por %p149, %p150
      %p152 = scmp.ne.s32.totalorder %s143, %s144
      %p153 = scmp.eq.s32.totalorder %s54, 0
      %p154 = por %p152, %p153
      %p155 = scmp.ne.s32.totalorder %s143, %s144
      %p156 = scmp.eq.s32.totalorder %s55, 1
      %p157 = por %p155, %p156
      %p159 = scmp.ne.s32.totalorder %s144, %s158
      %p160 = scmp.eq.s32.totalorder %s55, 0
      %p161 = por %p159, %p160
      %s163 = sadd.s32 %s162, 1
      %p166 = scmp.eq.s32.totalorder %s49, 1
      %p167 = scmp.ne.s32.totalorder %s162, %s164
      %p168 = scmp.eq.s32.totalorder %s49, 0
      %p169 = por %p167, %p168
      %p170 = scmp.ne.s32.totalorder %s162, %s164
      %p171 = scmp.eq.s32.totalorder %s54, 1
      %p172 = por %p170, %p171
      %p173 = scmp.ne.s32.totalorder %s164, %s165
      %p174 = scmp.eq.s32.totalorder %s54, 0
      %p175 = por %p173, %p174
      %p176 = scmp.ne.s32.totalorder %s164, %s165
      %p177 = scmp.eq.s32.totalorder %s55, 1
      %p178 = por %p176, %p177
      %p180 = scmp.ne.s32.totalorder %s165, %s179
      %p181 = scmp.eq.s32.totalorder %s55, 0
      %p182 = por %p180, %p181
      %s183 = ssub.s32 %s49, %s56
      %p184 = scmp.eq.s32.totalorder %s183, 0
      %s186 = sadd.s32 %s185, 1
      %s187 = scalar_select %p184, %s185, %s186
      %p190 = pneg %p184
      %p191 = scmp.eq.s32.totalorder %s49, 1
      %p192 = por %p190, %p191
      %p193 = scmp.ne.s32.totalorder %s185, %s188
      %p194 = scmp.eq.s32.totalorder %s49, 0
      %p195 = por %p193, %p194
      %p196 = scmp.ne.s32.totalorder %s185, %s188
      %p197 = scmp.eq.s32.totalorder %s54, 1
      %p198 = por %p196, %p197
      %p199 = scmp.ne.s32.totalorder %s188, %s189
      %p200 = scmp.eq.s32.totalorder %s54, 0
      %p201 = por %p199, %p200
      %p202 = scmp.ne.s32.totalorder %s188, %s189
      %p203 = scmp.eq.s32.totalorder %s55, 1
      %p204 = por %p202, %p203
      %p206 = scmp.ne.s32.totalorder %s189, %s205
      %p207 = scmp.eq.s32.totalorder %s55, 0
      %p208 = por %p206, %p207
      %s209 = ssub.s32 %s49, %s56
      %p210 = scmp.eq.s32.totalorder %s209, 0
      %s212 = sadd.s32 %s211, 1
      %s213 = scalar_select %p210, %s211, %s212
      %p216 = pneg %p210
      %p217 = scmp.eq.s32.totalorder %s49, 1
      %p218 = por %p216, %p217
      %p219 = scmp.ne.s32.totalorder %s211, %s214
      %p220 = scmp.eq.s32.totalorder %s49, 0
      %p221 = por %p219, %p220
      %p222 = scmp.ne.s32.totalorder %s211, %s214
      %p223 = scmp.eq.s32.totalorder %s54, 1
      %p224 = por %p222, %p223
      %p225 = scmp.ne.s32.totalorder %s214, %s215
      %p226 = scmp.eq.s32.totalorder %s54, 0
      %p227 = por %p225, %p226
      %p228 = scmp.ne.s32.totalorder %s214, %s215
      %p229 = scmp.eq.s32.totalorder %s55, 1
      %p230 = por %p228, %p229
      %p232 = scmp.ne.s32.totalorder %s215, %s231
      %p233 = scmp.eq.s32.totalorder %s55, 0
      %p234 = por %p232, %p233
      %s235 = ssub.s32 %s49, %s56
      %p236 = scmp.eq.s32.totalorder %s235, 0
      %s238 = sadd.s32 %s237, 1
      %s239 = scalar_select %p236, %s237, %s238
      %p242 = pneg %p236
      %p243 = scmp.eq.s32.totalorder %s49, 1
      %p244 = por %p242, %p243
      %p245 = scmp.ne.s32.totalorder %s237, %s240
      %p246 = scmp.eq.s32.totalorder %s49, 0
      %p247 = por %p245, %p246
      %p248 = scmp.ne.s32.totalorder %s237, %s240
      %p249 = scmp.eq.s32.totalorder %s54, 1
      %p250 = por %p248, %p249
      %p251 = scmp.ne.s32.totalorder %s240, %s241
      %p252 = scmp.eq.s32.totalorder %s54, 0
      %p253 = por %p251, %p252
      %p254 = scmp.ne.s32.totalorder %s240, %s241
      %p255 = scmp.eq.s32.totalorder %s55, 1
      %p256 = por %p254, %p255
      %p258 = scmp.ne.s32.totalorder %s241, %s257
      %p259 = scmp.eq.s32.totalorder %s55, 0
      %p260 = por %p258, %p259
      %s261 = ssub.s32 %s49, %s56
      %p262 = scmp.eq.s32.totalorder %s261, 0
      %s264 = sadd.s32 %s263, 1
      %s265 = scalar_select %p262, %s263, %s264
      %p268 = pneg %p262
      %p269 = scmp.eq.s32.totalorder %s49, 1
      %p270 = por %p268, %p269
      %p271 = scmp.ne.s32.totalorder %s263, %s266
      %p272 = scmp.eq.s32.totalorder %s49, 0
      %p273 = por %p271, %p272
      %p274 = scmp.ne.s32.totalorder %s263, %s266
      %p275 = scmp.eq.s32.totalorder %s54, 1
      %p276 = por %p274, %p275
      %p277 = scmp.ne.s32.totalorder %s266, %s267
      %p278 = scmp.eq.s32.totalorder %s54, 0
      %p279 = por %p277, %p278
      %p280 = scmp.ne.s32.totalorder %s266, %s267
      %p281 = scmp.eq.s32.totalorder %s55, 1
      %p282 = por %p280, %p281
      %p284 = scmp.ne.s32.totalorder %s267, %s283
      %p285 = scmp.eq.s32.totalorder %s55, 0
      %p286 = por %p284, %p285
      %s287 = ssub.s32 %s49, %s56
      %p288 = scmp.eq.s32.totalorder %s287, 0
      %s290 = sadd.s32 %s289, 1
      %s291 = scalar_select %p288, %s289, %s290
      %p294 = pneg %p288
      %p295 = scmp.eq.s32.totalorder %s49, 1
      %p296 = por %p294, %p295
      %p297 = scmp.ne.s32.totalorder %s289, %s292
      %p298 = scmp.eq.s32.totalorder %s49, 0
      %p299 = por %p297, %p298
      %p300 = scmp.ne.s32.totalorder %s289, %s292
      %p301 = scmp.eq.s32.totalorder %s54, 1
      %p302 = por %p300, %p301
      %p303 = scmp.ne.s32.totalorder %s292, %s293
      %p304 = scmp.eq.s32.totalorder %s54, 0
      %p305 = por %p303, %p304
      %p306 = scmp.ne.s32.totalorder %s292, %s293
      %p307 = scmp.eq.s32.totalorder %s55, 1
      %p308 = por %p306, %p307
      %p310 = scmp.ne.s32.totalorder %s293, %s309
      %p311 = scmp.eq.s32.totalorder %s55, 0
      %p312 = por %p310, %p311
      %s313 = ssub.s32 %s49, %s56
      %p314 = scmp.eq.s32.totalorder %s313, 0
      %s316 = sadd.s32 %s315, 1
      %s317 = scalar_select %p314, %s315, %s316
      %p320 = pneg %p314
      %p321 = scmp.eq.s32.totalorder %s49, 1
      %p322 = por %p320, %p321
      %p323 = scmp.ne.s32.totalorder %s315, %s318
      %p324 = scmp.eq.s32.totalorder %s49, 0
      %p325 = por %p323, %p324
      %p326 = scmp.ne.s32.totalorder %s315, %s318
      %p327 = scmp.eq.s32.totalorder %s54, 1
      %p328 = por %p326, %p327
      %p329 = scmp.ne.s32.totalorder %s318, %s319
      %p330 = scmp.eq.s32.totalorder %s54, 0
      %p331 = por %p329, %p330
      %p332 = scmp.ne.s32.totalorder %s318, %s319
      %p333 = scmp.eq.s32.totalorder %s55, 1
      %p334 = por %p332, %p333
      %p336 = scmp.ne.s32.totalorder %s319, %s335
      %p337 = scmp.eq.s32.totalorder %s55, 0
      %p338 = por %p336, %p337
      %s339 = ssub.s32 %s49, %s56
      %p340 = scmp.eq.s32.totalorder %s339, 0
      %s342 = sadd.s32 %s341, 1
      %s343 = scalar_select %p340, %s341, %s342
      %p346 = pneg %p340
      %p347 = scmp.eq.s32.totalorder %s49, 1
      %p348 = por %p346, %p347
      %p349 = scmp.ne.s32.totalorder %s341, %s344
      %p350 = scmp.eq.s32.totalorder %s49, 0
      %p351 = por %p349, %p350
      %p352 = scmp.ne.s32.totalorder %s341, %s344
      %p353 = scmp.eq.s32.totalorder %s54, 1
      %p354 = por %p352, %p353
      %p355 = scmp.ne.s32.totalorder %s344, %s345
      %p356 = scmp.eq.s32.totalorder %s54, 0
      %p357 = por %p355, %p356
      %p358 = scmp.ne.s32.totalorder %s344, %s345
      %p359 = scmp.eq.s32.totalorder %s55, 1
      %p360 = por %p358, %p359
      %p362 = scmp.ne.s32.totalorder %s345, %s361
      %p363 = scmp.eq.s32.totalorder %s55, 0
      %p364 = por %p362, %p363
      %s365 = ssub.s32 %s49, %s56
      %p366 = scmp.eq.s32.totalorder %s365, 0
      %s368 = sadd.s32 %s367, 1
      %s369 = scalar_select %p366, %s367, %s368
      %p372 = pneg %p366
      %p373 = scmp.eq.s32.totalorder %s49, 1
      %p374 = por %p372, %p373
      %p375 = scmp.ne.s32.totalorder %s367, %s370
      %p376 = scmp.eq.s32.totalorder %s49, 0
      %p377 = por %p375, %p376
      %p378 = scmp.ne.s32.totalorder %s367, %s370
      %p379 = scmp.eq.s32.totalorder %s54, 1
      %p380 = por %p378, %p379
      %p381 = scmp.ne.s32.totalorder %s370, %s371
      %p382 = scmp.eq.s32.totalorder %s54, 0
      %p383 = por %p381, %p382
      %p384 = scmp.ne.s32.totalorder %s370, %s371
      %p385 = scmp.eq.s32.totalorder %s55, 1
      %p386 = por %p384, %p385
      %p388 = scmp.ne.s32.totalorder %s371, %s387
      %p389 = scmp.eq.s32.totalorder %s55, 0
      %p390 = por %p388, %p389
      %s391 = ssub.s32 %s49, %s56
      %p392 = scmp.eq.s32.totalorder %s391, 0
      %s394 = sadd.s32 %s393, 1
      %s395 = scalar_select %p392, %s393, %s394
      %p398 = pneg %p392
      %p399 = scmp.eq.s32.totalorder %s49, 1
      %p400 = por %p398, %p399
      %p401 = scmp.ne.s32.totalorder %s393, %s396
      %p402 = scmp.eq.s32.totalorder %s49, 0
      %p403 = por %p401, %p402
      %p404 = scmp.ne.s32.totalorder %s393, %s396
      %p405 = scmp.eq.s32.totalorder %s54, 1
      %p406 = por %p404, %p405
      %p407 = scmp.ne.s32.totalorder %s396, %s397
      %p408 = scmp.eq.s32.totalorder %s54, 0
      %p409 = por %p407, %p408
      %p410 = scmp.ne.s32.totalorder %s396, %s397
      %p411 = scmp.eq.s32.totalorder %s55, 1
      %p412 = por %p410, %p411
      %p414 = scmp.ne.s32.totalorder %s397, %s413
      %p415 = scmp.eq.s32.totalorder %s55, 0
      %p416 = por %p414, %p415
      %s417 = ssub.s32 %s49, %s56
      %p418 = scmp.eq.s32.totalorder %s417, 0
      %s420 = sadd.s32 %s419, 1
      %s421 = scalar_select %p418, %s419, %s420
      %p424 = pneg %p418
      %p425 = scmp.eq.s32.totalorder %s49, 1
      %p426 = por %p424, %p425
      %p427 = scmp.ne.s32.totalorder %s419, %s422
      %p428 = scmp.eq.s32.totalorder %s49, 0
      %p429 = por %p427, %p428
      %p430 = scmp.ne.s32.totalorder %s419, %s422
      %p431 = scmp.eq.s32.totalorder %s54, 1
      %p432 = por %p430, %p431
      %p433 = scmp.ne.s32.totalorder %s422, %s423
      %p434 = scmp.eq.s32.totalorder %s54, 0
      %p435 = por %p433, %p434
      %p436 = scmp.ne.s32.totalorder %s422, %s423
      %p437 = scmp.eq.s32.totalorder %s55, 1
      %p438 = por %p436, %p437
      %p440 = scmp.ne.s32.totalorder %s423, %s439
      %p441 = scmp.eq.s32.totalorder %s55, 0
      %p442 = por %p440, %p441
      %s443 = ssub.s32 %s49, %s56
      %p444 = scmp.eq.s32.totalorder %s443, 0
      %s446 = sadd.s32 %s445, 1
      %s447 = scalar_select %p444, %s445, %s446
      %p450 = pneg %p444
      %p451 = scmp.eq.s32.totalorder %s49, 1
      %p452 = por %p450, %p451
      %p453 = scmp.ne.s32.totalorder %s445, %s448
      %p454 = scmp.eq.s32.totalorder %s49, 0
      %p455 = por %p453, %p454
      %p456 = scmp.ne.s32.totalorder %s445, %s448
      %p457 = scmp.eq.s32.totalorder %s54, 1
      %p458 = por %p456, %p457
      %p459 = scmp.ne.s32.totalorder %s448, %s449
      %p460 = scmp.eq.s32.totalorder %s54, 0
      %p461 = por %p459, %p460
      %p462 = scmp.ne.s32.totalorder %s448, %s449
      %p463 = scmp.eq.s32.totalorder %s55, 1
      %p464 = por %p462, %p463
      %p466 = scmp.ne.s32.totalorder %s449, %s465
      %p467 = scmp.eq.s32.totalorder %s55, 0
      %p468 = por %p466, %p467
      %s469 = ssub.s32 %s49, %s56
      %p470 = scmp.eq.s32.totalorder %s469, 0
      %s472 = sadd.s32 %s471, 1
      %s473 = scalar_select %p470, %s471, %s472
      %p476 = pneg %p470
      %p477 = scmp.eq.s32.totalorder %s49, 1
      %p478 = por %p476, %p477
      %p479 = scmp.ne.s32.totalorder %s471, %s474
      %p480 = scmp.eq.s32.totalorder %s49, 0
      %p481 = por %p479, %p480
      %p482 = scmp.ne.s32.totalorder %s471, %s474
      %p483 = scmp.eq.s32.totalorder %s54, 1
      %p484 = por %p482, %p483
      %p485 = scmp.ne.s32.totalorder %s474, %s475
      %p486 = scmp.eq.s32.totalorder %s54, 0
      %p487 = por %p485, %p486
      %p488 = scmp.ne.s32.totalorder %s474, %s475
      %p489 = scmp.eq.s32.totalorder %s55, 1
      %p490 = por %p488, %p489
      %p492 = scmp.ne.s32.totalorder %s475, %s491
      %p493 = scmp.eq.s32.totalorder %s55, 0
      %p494 = por %p492, %p493
      %s496 = sadd.s32 %s495, 1
      %p499 = scmp.eq.s32.totalorder %s49, 1
      %p500 = scmp.ne.s32.totalorder %s495, %s497
      %p501 = scmp.eq.s32.totalorder %s49, 0
      %p502 = por %p500, %p501
      %p503 = scmp.ne.s32.totalorder %s495, %s497
      %p504 = scmp.eq.s32.totalorder %s54, 1
      %p505 = por %p503, %p504
      %p506 = scmp.ne.s32.totalorder %s497, %s498
      %p507 = scmp.eq.s32.totalorder %s54, 0
      %p508 = por %p506, %p507
      %p509 = scmp.ne.s32.totalorder %s497, %s498
      %p510 = scmp.eq.s32.totalorder %s55, 1
      %p511 = por %p509, %p510
      %p513 = scmp.ne.s32.totalorder %s498, %s512
      %p514 = scmp.eq.s32.totalorder %s55, 0
      %p515 = por %p513, %p514
      %s517 = sadd.s32 %s516, 1
      %p520 = scmp.eq.s32.totalorder %s49, 1
      %p521 = scmp.ne.s32.totalorder %s516, %s518
      %p522 = scmp.eq.s32.totalorder %s49, 0
      %p523 = por %p521, %p522
      %p524 = scmp.ne.s32.totalorder %s516, %s518
      %p525 = scmp.eq.s32.totalorder %s54, 1
      %p526 = por %p524, %p525
      %p527 = scmp.ne.s32.totalorder %s518, %s519
      %p528 = scmp.eq.s32.totalorder %s54, 0
      %p529 = por %p527, %p528
      %p530 = scmp.ne.s32.totalorder %s518, %s519
      %p531 = scmp.eq.s32.totalorder %s55, 1
      %p532 = por %p530, %p531
      %p534 = scmp.ne.s32.totalorder %s519, %s533
      %p535 = scmp.eq.s32.totalorder %s55, 0
      %p536 = por %p534, %p535
      %s538 = sadd.s32 %s537, 1
      %p541 = scmp.eq.s32.totalorder %s49, 1
      %p542 = scmp.ne.s32.totalorder %s537, %s539
      %p543 = scmp.eq.s32.totalorder %s49, 0
      %p544 = por %p542, %p543
      %p545 = scmp.ne.s32.totalorder %s537, %s539
      %p546 = scmp.eq.s32.totalorder %s54, 1
      %p547 = por %p545, %p546
      %p548 = scmp.ne.s32.totalorder %s539, %s540
      %p549 = scmp.eq.s32.totalorder %s54, 0
      %p550 = por %p548, %p549
      %p551 = scmp.ne.s32.totalorder %s539, %s540
      %p552 = scmp.eq.s32.totalorder %s55, 1
      %p553 = por %p551, %p552
      %p555 = scmp.ne.s32.totalorder %s540, %s554
      %p556 = scmp.eq.s32.totalorder %s55, 0
      %p557 = por %p555, %p556
      %p558 = scmp.le.s32.totalorder 1, %s49
      %p559 = scmp.lt.s32.totalorder %s49, 3
      %p560 = pnand %p558, %p559
      %p561 = pneg %p560
      // Predicated region
      $region9: #{vlm_forward.1} parent=5 // pred_check
        _
      $region10: #{vlm_forward.1} parent=5 // pred_check_branch
        %563 = sbr.rel (%p560) target = $region12
      $region11: #{vlm_forward.1} parent=5 // pred_region
        %s564 = ssub.s32 %s49, 1
        // Predicated region
        $region13: #{vlm_forward.1} parent=11 // pred_check
          %p565 = pneg %p70
        $region14: #{vlm_forward.1} parent=11 // pred_check_branch
          %567 = sbr.rel (%p565) target = $region16
        $region15: #{vlm_forward.1} parent=11 // pred_region
          %569 = vsyncadd [#allocation4], 0
          %s570 = sshll.u32 %s0, 4
          %s571 = int_to_ptr.hbm [resolvable:$true] %s570
          %s572 = sshll.u32 [#allocation3], 4
          %s573 = int_to_ptr.vmem [resolvable:$true] %s572
          %578 = dma.hbm_to_vmem [thread:$0]  %s571, 3072, %s573, [#allocation4], 768, 768, 48
        $region16: #{vlm_forward.1} parent=11 // pred_fallthru
          _
        // Predicated region
        $region17: #{vlm_forward.1} parent=11 // pred_check
          %p579 = pneg %p91
        $region18: #{vlm_forward.1} parent=11 // pred_check_branch
          %581 = sbr.rel (%p579) target = $region20
        $region19: #{vlm_forward.1} parent=11 // pred_region
          _
        $region20: #{vlm_forward.1} parent=11 // pred_fallthru
          _
        // Predicated region
        $region21: #{vlm_forward.1} parent=11 // pred_check
          %p582 = pneg %p112
        $region22: #{vlm_forward.1} parent=11 // pred_check_branch
          %584 = sbr.rel (%p582) target = $region24
        $region23: #{vlm_forward.1} parent=11 // pred_region
          %586 = vsyncadd [#allocation7], 0
          %s587 = sshll.u32 %s2, 4
          %s588 = int_to_ptr.hbm [resolvable:$true] %s587
          %s589 = sshll.u32 [#allocation6], 4
          %s590 = int_to_ptr.vmem [resolvable:$true] %s589
          %595 = dma.hbm_to_vmem [thread:$0]  %s588, 6144, %s590, [#allocation7], 64, 64, 4
        $region24: #{vlm_forward.1} parent=11 // pred_fallthru
          _
        // Predicated region
        $region25: #{vlm_forward.1} parent=11 // pred_check
          %p596 = pneg %p133
        $region26: #{vlm_forward.1} parent=11 // pred_check_branch
          %598 = sbr.rel (%p596) target = $region28
        $region27: #{vlm_forward.1} parent=11 // pred_region
          %600 = vsyncadd [#allocation7], 0
          %s602 = sshll.u32 %s3, 4
          %s603 = int_to_ptr.hbm [resolvable:$true] %s602
          %s604 = sshll.u32 [#allocation8], 4
          %s605 = int_to_ptr.vmem [resolvable:$true] %s604
          %607 = dma.hbm_to_vmem [thread:$0]  %s603, 16, %s605, [#allocation7]
        $region28: #{vlm_forward.1} parent=11 // pred_fallthru
          _
        // Predicated region
        $region29: #{vlm_forward.1} parent=11 // pred_check
          %p608 = pneg %p154
        $region30: #{vlm_forward.1} parent=11 // pred_check_branch
          %610 = sbr.rel (%p608) target = $region32
        $region31: #{vlm_forward.1} parent=11 // pred_region
          %612 = vsyncadd [#allocation10], 0
          %s614 = sshll.u32 %s4, 4
          %s615 = int_to_ptr.hbm [resolvable:$true] %s614
          %s616 = sshll.u32 [#allocation9], 4
          %s617 = int_to_ptr.vmem [resolvable:$true] %s616
          %619 = dma.hbm_to_vmem [thread:$0]  %s615, 16, %s617, [#allocation10]
        $region32: #{vlm_forward.1} parent=11 // pred_fallthru
          _
        // Predicated region
        $region33: #{vlm_forward.1} parent=11 // pred_check
          %p620 = pneg %p175
        $region34: #{vlm_forward.1} parent=11 // pred_check_branch
          %622 = sbr.rel (%p620) target = $region36
        $region35: #{vlm_forward.1} parent=11 // pred_region
          %624 = vsyncadd [#allocation10], 0
          %s626 = sshll.u32 %s5, 4
          %s627 = int_to_ptr.hbm [resolvable:$true] %s626
          %s628 = sshll.u32 [#allocation11], 4
          %s629 = int_to_ptr.vmem [resolvable:$true] %s628
          %631 = dma.hbm_to_vmem [thread:$0]  %s627, 16, %s629, [#allocation10]
        $region36: #{vlm_forward.1} parent=11 // pred_fallthru
          _
        // Predicated region
        $region37: #{vlm_forward.1} parent=11 // pred_check
          %p632 = pneg %p508
        $region38: #{vlm_forward.1} parent=11 // pred_check_branch
          %634 = sbr.rel (%p632) target = $region40
        $region39: #{vlm_forward.1} parent=11 // pred_region
          %636 = vsyncadd [#allocation31], 0
          %s637 = sshll.u32 %s18, 4
          %s638 = int_to_ptr.hbm [resolvable:$true] %s637
          %s639 = sshll.u32 [#allocation30], 4
          %s640 = int_to_ptr.vmem [resolvable:$true] %s639
          %645 = dma.hbm_to_vmem [thread:$0]  %s638, 1024, %s640, [#allocation31], 64, 64, 4
        $region40: #{vlm_forward.1} parent=11 // pred_fallthru
          _
        // Predicated region
        $region41: #{vlm_forward.1} parent=11 // pred_check
          %p646 = pneg %p529
        $region42: #{vlm_forward.1} parent=11 // pred_check_branch
          %648 = sbr.rel (%p646) target = $region44
        $region43: #{vlm_forward.1} parent=11 // pred_region
          %650 = vsyncadd [#allocation31], 0
          %s652 = sshll.u32 %s19, 4
          %s653 = int_to_ptr.hbm [resolvable:$true] %s652
          %s654 = sshll.u32 [#allocation32], 4
          %s655 = int_to_ptr.vmem [resolvable:$true] %s654
          %657 = dma.hbm_to_vmem [thread:$0]  %s653, 16, %s655, [#allocation31]
        $region44: #{vlm_forward.1} parent=11 // pred_fallthru
          _
      $region12: #{vlm_forward.1} parent=5 // pred_fallthru
        _
      %p658 = scmp.lt.s32.totalorder %s49, 2
      // Predicated region
      $region45: #{vlm_forward.1} parent=5 // pred_check
        %p659 = pneg %p658
      $region46: #{vlm_forward.1} parent=5 // pred_check_branch
        %661 = sbr.rel (%p659) target = $region48
      $region47: #{vlm_forward.1} parent=5 // pred_region
        // Predicated region
        $region49: #{vlm_forward.1} parent=47 // pred_check
          %p662 = pneg %p195
        $region50: #{vlm_forward.1} parent=47 // pred_check_branch
          %664 = sbr.rel (%p662) target = $region52
        $region51: #{vlm_forward.1} parent=47 // pred_region
          %s665 = sand.u32 %s49, 1
          %s666 = scalar_lea.sflag [#allocation13], %s665
          %s667 = sand.u32 %s185, 1
          %s668 = smul.addr %s667, 192
          %s669 = scalar_lea.vmem [#allocation12], %s668
          %671 = vsyncadd %s666, 0
          %s672 = smul.addr %s49, 48
          %s673 = smul.addr %s672, 4
          %s674 = scalar_lea.hbm %s6, %s673
          %s675 = sshll.u32 %s674, 4
          %s676 = int_to_ptr.hbm [resolvable:$true] %s675
          %s677 = sshll.u32 %s669, 4
          %s678 = int_to_ptr.vmem [resolvable:$true] %s677
          %683 = dma.hbm_to_vmem [thread:$0]  %s676, 3072, %s678, %s666, 192, 192, 12
        $region52: #{vlm_forward.1} parent=47 // pred_fallthru
          _
        // Predicated region
        $region53: #{vlm_forward.1} parent=47 // pred_check
          %p684 = pneg %p221
        $region54: #{vlm_forward.1} parent=47 // pred_check_branch
          %686 = sbr.rel (%p684) target = $region56
        $region55: #{vlm_forward.1} parent=47 // pred_region
          %s687 = sand.u32 %s49, 1
          %s688 = scalar_lea.sflag [#allocation13], %s687
          %s689 = sand.u32 %s211, 1
          %s690 = smul.addr %s689, 3
          %s691 = scalar_lea.vmem [#allocation14], %s690
          %693 = vsyncadd %s688, 0
          %s694 = smul.addr %s49, 3
          %s695 = scalar_lea.hbm %s7, %s694
          %s697 = sshll.u32 %s695, 4
          %s698 = int_to_ptr.hbm [resolvable:$true] %s697
          %s699 = sshll.u32 %s691, 4
          %s700 = int_to_ptr.vmem [resolvable:$true] %s699
          %702 = dma.hbm_to_vmem [thread:$0]  %s698, 48, %s700, %s688
        $region56: #{vlm_forward.1} parent=47 // pred_fallthru
          _
        // Predicated region
        $region57: #{vlm_forward.1} parent=47 // pred_check
          %p703 = pneg %p247
        $region58: #{vlm_forward.1} parent=47 // pred_check_branch
          %705 = sbr.rel (%p703) target = $region60
        $region59: #{vlm_forward.1} parent=47 // pred_region
          %s706 = sand.u32 %s49, 1
          %s707 = scalar_lea.sflag [#allocation16], %s706
          %s708 = sand.u32 %s237, 1
          %s709 = smul.addr %s708, 64
          %s710 = scalar_lea.vmem [#allocation15], %s709
          %712 = vsyncadd %s707, 0
          %s713 = smul.addr %s49, 16
          %s714 = smul.addr %s713, 4
          %s715 = scalar_lea.hbm %s8, %s714
          %s716 = sshll.u32 %s715, 4
          %s717 = int_to_ptr.hbm [resolvable:$true] %s716
          %s718 = sshll.u32 %s710, 4
          %s719 = int_to_ptr.vmem [resolvable:$true] %s718
          %724 = dma.hbm_to_vmem [thread:$0]  %s717, 1024, %s719, %s707, 64, 64, 4
        $region60: #{vlm_forward.1} parent=47 // pred_fallthru
          _
        // Predicated region
        $region61: #{vlm_forward.1} parent=47 // pred_check
          %p725 = pneg %p273
        $region62: #{vlm_forward.1} parent=47 // pred_check_branch
          %727 = sbr.rel (%p725) target = $region64
        $region63: #{vlm_forward.1} parent=47 // pred_region
          %s728 = sand.u32 %s49, 1
          %s729 = scalar_lea.sflag [#allocation16], %s728
          %s730 = sand.u32 %s263, 1
          %s731 = scalar_lea.vmem [#allocation17], %s730
          %733 = vsyncadd %s729, 0
          %s734 = scalar_lea.hbm %s9, %s49
          %s736 = sshll.u32 %s734, 4
          %s737 = int_to_ptr.hbm [resolvable:$true] %s736
          %s738 = sshll.u32 %s731, 4
          %s739 = int_to_ptr.vmem [resolvable:$true] %s738
          %741 = dma.hbm_to_vmem [thread:$0]  %s737, 16, %s739, %s729
        $region64: #{vlm_forward.1} parent=47 // pred_fallthru
          _
        // Predicated region
        $region65: #{vlm_forward.1} parent=47 // pred_check
          %p742 = pneg %p299
        $region66: #{vlm_forward.1} parent=47 // pred_check_branch
          %744 = sbr.rel (%p742) target = $region68
        $region67: #{vlm_forward.1} parent=47 // pred_region
          %s745 = sand.u32 %s49, 1
          %s746 = scalar_lea.sflag [#allocation19], %s745
          %s747 = sand.u32 %s289, 1
          %s748 = scalar_lea.vmem [#allocation18], %s747
          %750 = vsyncadd %s746, 0
          %s751 = scalar_lea.hbm %s10, %s49
          %s753 = sshll.u32 %s751, 4
          %s754 = int_to_ptr.hbm [resolvable:$true] %s753
          %s755 = sshll.u32 %s748, 4
          %s756 = int_to_ptr.vmem [resolvable:$true] %s755
          %758 = dma.hbm_to_vmem [thread:$0]  %s754, 16, %s756, %s746
        $region68: #{vlm_forward.1} parent=47 // pred_fallthru
          _
        // Predicated region
        $region69: #{vlm_forward.1} parent=47 // pred_check
          %p759 = pneg %p325
        $region70: #{vlm_forward.1} parent=47 // pred_check_branch
          %761 = sbr.rel (%p759) target = $region72
        $region71: #{vlm_forward.1} parent=47 // pred_region
          %s762 = sand.u32 %s49, 1
          %s763 = scalar_lea.sflag [#allocation19], %s762
          %s764 = sand.u32 %s315, 1
          %s765 = scalar_lea.vmem [#allocation20], %s764
          %767 = vsyncadd %s763, 0
          %s768 = scalar_lea.hbm %s11, %s49
          %s770 = sshll.u32 %s768, 4
          %s771 = int_to_ptr.hbm [resolvable:$true] %s770
          %s772 = sshll.u32 %s765, 4
          %s773 = int_to_ptr.vmem [resolvable:$true] %s772
          %775 = dma.hbm_to_vmem [thread:$0]  %s771, 16, %s773, %s763
        $region72: #{vlm_forward.1} parent=47 // pred_fallthru
          _
        // Predicated region
        $region73: #{vlm_forward.1} parent=47 // pred_check
          %p776 = pneg %p351
        $region74: #{vlm_forward.1} parent=47 // pred_check_branch
          %778 = sbr.rel (%p776) target = $region76
        $region75: #{vlm_forward.1} parent=47 // pred_region
          %s779 = sand.u32 %s49, 1
          %s780 = scalar_lea.sflag [#allocation22], %s779
          %s781 = sand.u32 %s341, 1
          %s782 = smul.addr %s781, 128
          %s783 = scalar_lea.vmem [#allocation21], %s782
          %785 = vsyncadd %s780, 0
          %s786 = smul.addr %s49, 32
          %s787 = smul.addr %s786, 4
          %s788 = scalar_lea.hbm %s12, %s787
          %s789 = sshll.u32 %s788, 4
          %s790 = int_to_ptr.hbm [resolvable:$true] %s789
          %s791 = sshll.u32 %s783, 4
          %s792 = int_to_ptr.vmem [resolvable:$true] %s791
          %797 = dma.hbm_to_vmem [thread:$0]  %s790, 2048, %s792, %s780, 128, 128, 8
        $region76: #{vlm_forward.1} parent=47 // pred_fallthru
          _
        // Predicated region
        $region77: #{vlm_forward.1} parent=47 // pred_check
          %p798 = pneg %p377
        $region78: #{vlm_forward.1} parent=47 // pred_check_branch
          %800 = sbr.rel (%p798) target = $region80
        $region79: #{vlm_forward.1} parent=47 // pred_region
          %s801 = sand.u32 %s49, 1
          %s802 = scalar_lea.sflag [#allocation22], %s801
          %s803 = sand.u32 %s367, 1
          %s804 = smul.addr %s803, 2
          %s805 = scalar_lea.vmem [#allocation23], %s804
          %807 = vsyncadd %s802, 0
          %s808 = smul.addr %s49, 2
          %s809 = scalar_lea.hbm %s13, %s808
          %s811 = sshll.u32 %s809, 4
          %s812 = int_to_ptr.hbm [resolvable:$true] %s811
          %s813 = sshll.u32 %s805, 4
          %s814 = int_to_ptr.vmem [resolvable:$true] %s813
          %816 = dma.hbm_to_vmem [thread:$0]  %s812, 32, %s814, %s802
        $region80: #{vlm_forward.1} parent=47 // pred_fallthru
          _
        // Predicated region
        $region81: #{vlm_forward.1} parent=47 // pred_check
          %p817 = pneg %p403
        $region82: #{vlm_forward.1} parent=47 // pred_check_branch
          %819 = sbr.rel (%p817) target = $region84
        $region83: #{vlm_forward.1} parent=47 // pred_region
          %s820 = sand.u32 %s49, 1
          %s821 = scalar_lea.sflag [#allocation25], %s820
          %s822 = sand.u32 %s393, 1
          %s823 = smul.addr %s822, 128
          %s824 = scalar_lea.vmem [#allocation24], %s823
          %826 = vsyncadd %s821, 0
          %s827 = smul.addr %s49, 32
          %s828 = smul.addr %s827, 4
          %s829 = scalar_lea.hbm %s14, %s828
          %s830 = sshll.u32 %s829, 4
          %s831 = int_to_ptr.hbm [resolvable:$true] %s830
          %s832 = sshll.u32 %s824, 4
          %s833 = int_to_ptr.vmem [resolvable:$true] %s832
          %838 = dma.hbm_to_vmem [thread:$0]  %s831, 2048, %s833, %s821, 64, 64, 4
        $region84: #{vlm_forward.1} parent=47 // pred_fallthru
          _
        // Predicated region
        $region85: #{vlm_forward.1} parent=47 // pred_check
          %p839 = pneg %p429
        $region86: #{vlm_forward.1} parent=47 // pred_check_branch
          %841 = sbr.rel (%p839) target = $region88
        $region87: #{vlm_forward.1} parent=47 // pred_region
          %s842 = sand.u32 %s49, 1
          %s843 = scalar_lea.sflag [#allocation25], %s842
          %s844 = sand.u32 %s419, 1
          %s845 = scalar_lea.vmem [#allocation26], %s844
          %847 = vsyncadd %s843, 0
          %s848 = scalar_lea.hbm %s15, %s49
          %s850 = sshll.u32 %s848, 4
          %s851 = int_to_ptr.hbm [resolvable:$true] %s850
          %s852 = sshll.u32 %s845, 4
          %s853 = int_to_ptr.vmem [resolvable:$true] %s852
          %855 = dma.hbm_to_vmem [thread:$0]  %s851, 16, %s853, %s843
        $region88: #{vlm_forward.1} parent=47 // pred_fallthru
          _
        // Predicated region
        $region89: #{vlm_forward.1} parent=47 // pred_check
          %p856 = pneg %p455
        $region90: #{vlm_forward.1} parent=47 // pred_check_branch
          %858 = sbr.rel (%p856) target = $region92
        $region91: #{vlm_forward.1} parent=47 // pred_region
          %s859 = sand.u32 %s49, 1
          %s860 = scalar_lea.sflag [#allocation28], %s859
          %s861 = sand.u32 %s445, 1
          %s862 = scalar_lea.vmem [#allocation27], %s861
          %864 = vsyncadd %s860, 0
          %s865 = scalar_lea.hbm %s16, %s49
          %s867 = sshll.u32 %s865, 4
          %s868 = int_to_ptr.hbm [resolvable:$true] %s867
          %s869 = sshll.u32 %s862, 4
          %s870 = int_to_ptr.vmem [resolvable:$true] %s869
          %872 = dma.hbm_to_vmem [thread:$0]  %s868, 16, %s870, %s860
        $region92: #{vlm_forward.1} parent=47 // pred_fallthru
          _
        // Predicated region
        $region93: #{vlm_forward.1} parent=47 // pred_check
          %p873 = pneg %p481
        $region94: #{vlm_forward.1} parent=47 // pred_check_branch
          %875 = sbr.rel (%p873) target = $region96
        $region95: #{vlm_forward.1} parent=47 // pred_region
          %s876 = sand.u32 %s49, 1
          %s877 = scalar_lea.sflag [#allocation28], %s876
          %s878 = sand.u32 %s471, 1
          %s879 = scalar_lea.vmem [#allocation29], %s878
          %881 = vsyncadd %s877, 0
          %s882 = scalar_lea.hbm %s17, %s49
          %s884 = sshll.u32 %s882, 4
          %s885 = int_to_ptr.hbm [resolvable:$true] %s884
          %s886 = sshll.u32 %s879, 4
          %s887 = int_to_ptr.vmem [resolvable:$true] %s886
          %889 = dma.hbm_to_vmem [thread:$0]  %s885, 16, %s887, %s877
        $region96: #{vlm_forward.1} parent=47 // pred_fallthru
          _
      $region48: #{vlm_forward.1} parent=5 // pred_fallthru
        _
      %p890 = scmp.le.s32.totalorder 1, %s49
      %p891 = scmp.lt.s32.totalorder %s49, 3
      %p892 = pnand %p890, %p891
      %p893 = pneg %p892
      // Predicated region
      $region97: #{vlm_forward.1} parent=5 // pred_check
        _
      $region98: #{vlm_forward.1} parent=5 // pred_check_branch
        %895 = sbr.rel (%p892) target = $region100
      $region99: #{vlm_forward.1} parent=5 // pred_region
        %s896 = ssub.s32 %s49, 1
        // Predicated region
        $region101: #{vlm_forward.1} parent=99 // pred_check
          %p897 = pneg %p70
        $region102: #{vlm_forward.1} parent=99 // pred_check_branch
          %899 = sbr.rel (%p897) target = $region104
        $region103: #{vlm_forward.1} parent=99 // pred_region
          %901 = dma.done [#allocation4], 3072
        $region104: #{vlm_forward.1} parent=99 // pred_fallthru
          _
        // Predicated region
        $region105: #{vlm_forward.1} parent=99 // pred_check
          %p902 = pneg %p112
        $region106: #{vlm_forward.1} parent=99 // pred_check_branch
          %904 = sbr.rel (%p902) target = $region108
        $region107: #{vlm_forward.1} parent=99 // pred_region
          %906 = dma.done [#allocation7], 6144
        $region108: #{vlm_forward.1} parent=99 // pred_fallthru
          _
        // Predicated region
        $region109: #{vlm_forward.1} parent=99 // pred_check
          %p907 = pneg %p133
        $region110: #{vlm_forward.1} parent=99 // pred_check_branch
          %909 = sbr.rel (%p907) target = $region112
        $region111: #{vlm_forward.1} parent=99 // pred_region
          %911 = dma.done [#allocation7], 16
        $region112: #{vlm_forward.1} parent=99 // pred_fallthru
          _
        // Predicated region
        $region113: #{vlm_forward.1} parent=99 // pred_check
          %p912 = pneg %p154
        $region114: #{vlm_forward.1} parent=99 // pred_check_branch
          %914 = sbr.rel (%p912) target = $region116
        $region115: #{vlm_forward.1} parent=99 // pred_region
          %916 = dma.done [#allocation10], 16
        $region116: #{vlm_forward.1} parent=99 // pred_fallthru
          _
        // Predicated region
        $region117: #{vlm_forward.1} parent=99 // pred_check
          %p917 = pneg %p175
        $region118: #{vlm_forward.1} parent=99 // pred_check_branch
          %919 = sbr.rel (%p917) target = $region120
        $region119: #{vlm_forward.1} parent=99 // pred_region
          %921 = dma.done [#allocation10], 16
        $region120: #{vlm_forward.1} parent=99 // pred_fallthru
          _
        %s922 = sand.u32 %s54, 1
        %s923 = scalar_lea.sflag [#allocation13], %s922
        %s924 = sand.u32 %s188, 1
        %s925 = smul.addr %s924, 192
        %s926 = scalar_lea.vmem [#allocation12], %s925
        // Predicated region
        $region121: #{vlm_forward.1} parent=99 // pred_check
          %p927 = pneg %p201
        $region122: #{vlm_forward.1} parent=99 // pred_check_branch
          %929 = sbr.rel (%p927) target = $region124
        $region123: #{vlm_forward.1} parent=99 // pred_region
          %931 = dma.done %s923, 3072
        $region124: #{vlm_forward.1} parent=99 // pred_fallthru
          _
        %s932 = sand.u32 %s54, 1
        %s933 = scalar_lea.sflag [#allocation13], %s932
        %s934 = sand.u32 %s214, 1
        %s935 = smul.addr %s934, 3
        %s936 = scalar_lea.vmem [#allocation14], %s935
        // Predicated region
        $region125: #{vlm_forward.1} parent=99 // pred_check
          %p937 = pneg %p227
        $region126: #{vlm_forward.1} parent=99 // pred_check_branch
          %939 = sbr.rel (%p937) target = $region128
        $region127: #{vlm_forward.1} parent=99 // pred_region
          %941 = dma.done %s933, 48
        $region128: #{vlm_forward.1} parent=99 // pred_fallthru
          _
        %s942 = sand.u32 %s54, 1
        %s943 = scalar_lea.sflag [#allocation16], %s942
        %s944 = sand.u32 %s240, 1
        %s945 = smul.addr %s944, 64
        %s946 = scalar_lea.vmem [#allocation15], %s945
        // Predicated region
        $region129: #{vlm_forward.1} parent=99 // pred_check
          %p947 = pneg %p253
        $region130: #{vlm_forward.1} parent=99 // pred_check_branch
          %949 = sbr.rel (%p947) target = $region132
        $region131: #{vlm_forward.1} parent=99 // pred_region
          %951 = dma.done %s943, 1024
        $region132: #{vlm_forward.1} parent=99 // pred_fallthru
          _
        %s952 = sand.u32 %s54, 1
        %s953 = scalar_lea.sflag [#allocation16], %s952
        %s954 = sand.u32 %s266, 1
        %s955 = scalar_lea.vmem [#allocation17], %s954
        // Predicated region
        $region133: #{vlm_forward.1} parent=99 // pred_check
          %p956 = pneg %p279
        $region134: #{vlm_forward.1} parent=99 // pred_check_branch
          %958 = sbr.rel (%p956) target = $region136
        $region135: #{vlm_forward.1} parent=99 // pred_region
          %960 = dma.done %s953, 16
        $region136: #{vlm_forward.1} parent=99 // pred_fallthru
          _
        %s961 = sand.u32 %s54, 1
        %s962 = scalar_lea.sflag [#allocation19], %s961
        %s963 = sand.u32 %s292, 1
        %s964 = scalar_lea.vmem [#allocation18], %s963
        // Predicated region
        $region137: #{vlm_forward.1} parent=99 // pred_check
          %p965 = pneg %p305
        $region138: #{vlm_forward.1} parent=99 // pred_check_branch
          %967 = sbr.rel (%p965) target = $region140
        $region139: #{vlm_forward.1} parent=99 // pred_region
          %969 = dma.done %s962, 16
        $region140: #{vlm_forward.1} parent=99 // pred_fallthru
          _
        %s970 = sand.u32 %s54, 1
        %s971 = scalar_lea.sflag [#allocation19], %s970
        %s972 = sand.u32 %s318, 1
        %s973 = scalar_lea.vmem [#allocation20], %s972
        // Predicated region
        $region141: #{vlm_forward.1} parent=99 // pred_check
          %p974 = pneg %p331
        $region142: #{vlm_forward.1} parent=99 // pred_check_branch
          %976 = sbr.rel (%p974) target = $region144
        $region143: #{vlm_forward.1} parent=99 // pred_region
          %978 = dma.done %s971, 16
        $region144: #{vlm_forward.1} parent=99 // pred_fallthru
          _
        %s979 = sand.u32 %s54, 1
        %s980 = scalar_lea.sflag [#allocation22], %s979
        %s981 = sand.u32 %s344, 1
        %s982 = smul.addr %s981, 128
        %s983 = scalar_lea.vmem [#allocation21], %s982
        // Predicated region
        $region145: #{vlm_forward.1} parent=99 // pred_check
          %p984 = pneg %p357
        $region146: #{vlm_forward.1} parent=99 // pred_check_branch
          %986 = sbr.rel (%p984) target = $region148
        $region147: #{vlm_forward.1} parent=99 // pred_region
          %988 = dma.done %s980, 2048
        $region148: #{vlm_forward.1} parent=99 // pred_fallthru
          _
        %s989 = sand.u32 %s54, 1
        %s990 = scalar_lea.sflag [#allocation22], %s989
        %s991 = sand.u32 %s370, 1
        %s992 = smul.addr %s991, 2
        %s993 = scalar_lea.vmem [#allocation23], %s992
        // Predicated region
        $region149: #{vlm_forward.1} parent=99 // pred_check
          %p994 = pneg %p383
        $region150: #{vlm_forward.1} parent=99 // pred_check_branch
          %996 = sbr.rel (%p994) target = $region152
        $region151: #{vlm_forward.1} parent=99 // pred_region
          %998 = dma.done %s990, 32
        $region152: #{vlm_forward.1} parent=99 // pred_fallthru
          _
        %s999 = sand.u32 %s54, 1
        %s1000 = scalar_lea.sflag [#allocation25], %s999
        %s1001 = sand.u32 %s396, 1
        %s1002 = smul.addr %s1001, 128
        %s1003 = scalar_lea.vmem [#allocation24], %s1002
        // Predicated region
        $region153: #{vlm_forward.1} parent=99 // pred_check
          %p1004 = pneg %p409
        $region154: #{vlm_forward.1} parent=99 // pred_check_branch
          %1006 = sbr.rel (%p1004) target = $region156
        $region155: #{vlm_forward.1} parent=99 // pred_region
          %1008 = dma.done %s1000, 2048
        $region156: #{vlm_forward.1} parent=99 // pred_fallthru
          _
        %s1009 = sand.u32 %s54, 1
        %s1010 = scalar_lea.sflag [#allocation25], %s1009
        %s1011 = sand.u32 %s422, 1
        %s1012 = scalar_lea.vmem [#allocation26], %s1011
        // Predicated region
        $region157: #{vlm_forward.1} parent=99 // pred_check
          %p1013 = pneg %p435
        $region158: #{vlm_forward.1} parent=99 // pred_check_branch
          %1015 = sbr.rel (%p1013) target = $region160
        $region159: #{vlm_forward.1} parent=99 // pred_region
          %1017 = dma.done %s1010, 16
        $region160: #{vlm_forward.1} parent=99 // pred_fallthru
          _
        %s1018 = sand.u32 %s54, 1
        %s1019 = scalar_lea.sflag [#allocation28], %s1018
        %s1020 = sand.u32 %s448, 1
        %s1021 = scalar_lea.vmem [#allocation27], %s1020
        // Predicated region
        $region161: #{vlm_forward.1} parent=99 // pred_check
          %p1022 = pneg %p461
        $region162: #{vlm_forward.1} parent=99 // pred_check_branch
          %1024 = sbr.rel (%p1022) target = $region164
        $region163: #{vlm_forward.1} parent=99 // pred_region
          %1026 = dma.done %s1019, 16
        $region164: #{vlm_forward.1} parent=99 // pred_fallthru
          _
        %s1027 = sand.u32 %s54, 1
        %s1028 = scalar_lea.sflag [#allocation28], %s1027
        %s1029 = sand.u32 %s474, 1
        %s1030 = scalar_lea.vmem [#allocation29], %s1029
        // Predicated region
        $region165: #{vlm_forward.1} parent=99 // pred_check
          %p1031 = pneg %p487
        $region166: #{vlm_forward.1} parent=99 // pred_check_branch
          %1033 = sbr.rel (%p1031) target = $region168
        $region167: #{vlm_forward.1} parent=99 // pred_region
          %1035 = dma.done %s1028, 16
        $region168: #{vlm_forward.1} parent=99 // pred_fallthru
          _
        // Predicated region
        $region169: #{vlm_forward.1} parent=99 // pred_check
          %p1036 = pneg %p508
        $region170: #{vlm_forward.1} parent=99 // pred_check_branch
          %1038 = sbr.rel (%p1036) target = $region172
        $region171: #{vlm_forward.1} parent=99 // pred_region
          %1040 = dma.done [#allocation31], 1024
        $region172: #{vlm_forward.1} parent=99 // pred_fallthru
          _
        // Predicated region
        $region173: #{vlm_forward.1} parent=99 // pred_check
          %p1041 = pneg %p529
        $region174: #{vlm_forward.1} parent=99 // pred_check_branch
          %1043 = sbr.rel (%p1041) target = $region176
        $region175: #{vlm_forward.1} parent=99 // pred_region
          %1045 = dma.done [#allocation31], 16
        $region176: #{vlm_forward.1} parent=99 // pred_fallthru
          _
        %p1046 = pneg %p70
        %p1047 = pneg %p67
        %p1048 = pneg %p91
        %p1049 = pneg %p88
        %p1050 = pneg %p112
        %p1051 = pneg %p109
        %p1052 = pneg %p133
        %p1053 = pneg %p130
        %p1054 = pneg %p154
        %p1055 = pneg %p151
        %p1056 = pneg %p175
        %p1057 = pneg %p172
        %s1058 = sand.u32 %s54, 1
        %s1059 = scalar_lea.sflag [#allocation13], %s1058
        %s1060 = sand.u32 %s188, 1
        %s1061 = smul.addr %s1060, 192
        %s1062 = scalar_lea.vmem [#allocation12], %s1061
        %p1063 = pneg %p201
        %p1064 = pneg %p198
        %s1065 = sand.u32 %s54, 1
        %s1066 = scalar_lea.sflag [#allocation13], %s1065
        %s1067 = sand.u32 %s214, 1
        %s1068 = smul.addr %s1067, 3
        %s1069 = scalar_lea.vmem [#allocation14], %s1068
        %p1070 = pneg %p227
        %p1071 = pneg %p224
        %s1072 = sand.u32 %s54, 1
        %s1073 = scalar_lea.sflag [#allocation16], %s1072
        %s1074 = sand.u32 %s240, 1
        %s1075 = smul.addr %s1074, 64
        %s1076 = scalar_lea.vmem [#allocation15], %s1075
        %p1077 = pneg %p253
        %p1078 = pneg %p250
        %s1079 = sand.u32 %s54, 1
        %s1080 = scalar_lea.sflag [#allocation16], %s1079
        %s1081 = sand.u32 %s266, 1
        %s1082 = scalar_lea.vmem [#allocation17], %s1081
        %p1083 = pneg %p279
        %p1084 = pneg %p276
        %s1085 = sand.u32 %s54, 1
        %s1086 = scalar_lea.sflag [#allocation19], %s1085
        %s1087 = sand.u32 %s292, 1
        %s1088 = scalar_lea.vmem [#allocation18], %s1087
        %p1089 = pneg %p305
        %p1090 = pneg %p302
        %s1091 = sand.u32 %s54, 1
        %s1092 = scalar_lea.sflag [#allocation19], %s1091
        %s1093 = sand.u32 %s318, 1
        %s1094 = scalar_lea.vmem [#allocation20], %s1093
        %p1095 = pneg %p331
        %p1096 = pneg %p328
        %s1097 = sand.u32 %s54, 1
        %s1098 = scalar_lea.sflag [#allocation22], %s1097
        %s1099 = sand.u32 %s344, 1
        %s1100 = smul.addr %s1099, 128
        %s1101 = scalar_lea.vmem [#allocation21], %s1100
        %p1102 = pneg %p357
        %p1103 = pneg %p354
        %s1104 = sand.u32 %s54, 1
        %s1105 = scalar_lea.sflag [#allocation22], %s1104
        %s1106 = sand.u32 %s370, 1
        %s1107 = smul.addr %s1106, 2
        %s1108 = scalar_lea.vmem [#allocation23], %s1107
        %p1109 = pneg %p383
        %p1110 = pneg %p380
        %s1111 = sand.u32 %s54, 1
        %s1112 = scalar_lea.sflag [#allocation25], %s1111
        %s1113 = sand.u32 %s396, 1
        %s1114 = smul.addr %s1113, 128
        %s1115 = scalar_lea.vmem [#allocation24], %s1114
        %p1116 = pneg %p409
        %p1117 = pneg %p406
        %s1118 = sand.u32 %s54, 1
        %s1119 = scalar_lea.sflag [#allocation25], %s1118
        %s1120 = sand.u32 %s422, 1
        %s1121 = scalar_lea.vmem [#allocation26], %s1120
        %p1122 = pneg %p435
        %p1123 = pneg %p432
        %s1124 = sand.u32 %s54, 1
        %s1125 = scalar_lea.sflag [#allocation28], %s1124
        %s1126 = sand.u32 %s448, 1
        %s1127 = scalar_lea.vmem [#allocation27], %s1126
        %p1128 = pneg %p461
        %p1129 = pneg %p458
        %s1130 = sand.u32 %s54, 1
        %s1131 = scalar_lea.sflag [#allocation28], %s1130
        %s1132 = sand.u32 %s474, 1
        %s1133 = scalar_lea.vmem [#allocation29], %s1132
        %p1134 = pneg %p487
        %p1135 = pneg %p484
        %p1136 = pneg %p508
        %p1137 = pneg %p505
        %p1138 = pneg %p529
        %p1139 = pneg %p526
        %p1140 = pneg %p550
        %p1141 = pneg %p547
        %p1143 = scmp.eq.s32.totalorder %s54, 0
        // Predicated region
        $region177: #{vlm_forward.1} parent=99 // pred_check
          %p1144 = pneg %p1143
        $region178: #{vlm_forward.1} parent=99 // pred_check_branch
          %1146 = sbr.rel (%p1144) target = $region180
        $region179: #{vlm_forward.1} parent=99 // pred_region
          %v1147 = vld [vmem:[#allocation3] sm:$0xff]
          %v1148 = vld [vmem:[#allocation3 + $0x8] sm:$0xff]
          %v1149 = vld [vmem:[#allocation3 + $0x10] sm:$0xff]
          %v1150 = vld [vmem:[#allocation3 + $0x18] sm:$0xff]
          %v1151 = vld [vmem:[#allocation3 + $0x20] sm:$0xff]
          %v1152 = vld [vmem:[#allocation3 + $0x28] sm:$0xff]
          %v1153 = vld [vmem:[#allocation3 + $0x30] sm:$0xff]
          %v1154 = vld [vmem:[#allocation3 + $0x38] sm:$0xff]
          %v1155 = vld [vmem:[#allocation3 + $0x40] sm:$0xff]
          %v1156 = vld [vmem:[#allocation3 + $0x48] sm:$0xff]
          %v1157 = vld [vmem:[#allocation3 + $0x50] sm:$0xff]
          %v1158 = vld [vmem:[#allocation3 + $0x58] sm:$0xff]
          %v1159 = vld [vmem:[#allocation3 + $0x60] sm:$0xff]
          %v1160 = vld [vmem:[#allocation3 + $0x68] sm:$0xff]
          %v1161 = vld [vmem:[#allocation3 + $0x70] sm:$0xff]
          %v1162 = vld [vmem:[#allocation3 + $0x78] sm:$0xff]
          %v1163 = vld [vmem:[#allocation3 + $0x80] sm:$0xff]
          %v1164 = vld [vmem:[#allocation3 + $0x88] sm:$0xff]
          %v1165 = vld [vmem:[#allocation3 + $0x90] sm:$0xff]
          %v1166 = vld [vmem:[#allocation3 + $0x98] sm:$0xff]
          %v1167 = vld [vmem:[#allocation3 + $0xa0] sm:$0xff]
          %v1168 = vld [vmem:[#allocation3 + $0xa8] sm:$0xff]
          %v1169 = vld [vmem:[#allocation3 + $0xb0] sm:$0xff]
          %v1170 = vld [vmem:[#allocation3 + $0xb8] sm:$0xff]
          %v1171 = vpack.c.bf16 %v1153, %v1147
          %v1172 = vpack.c.bf16 %v1154, %v1148
          %v1173 = vpack.c.bf16 %v1155, %v1149
          %v1174 = vpack.c.bf16 %v1156, %v1150
          %v1175 = vpack.c.bf16 %v1157, %v1151
          %v1176 = vpack.c.bf16 %v1158, %v1152
          %v1177 = vpack.c.bf16 %v1165, %v1159
          %v1178 = vpack.c.bf16 %v1166, %v1160
          %v1179 = vpack.c.bf16 %v1167, %v1161
          %v1180 = vpack.c.bf16 %v1168, %v1162
          %v1181 = vpack.c.bf16 %v1169, %v1163
          %v1182 = vpack.c.bf16 %v1170, %v1164
          %v1183 = vld [vmem:[#allocation6] sm:$0xf]
          %v1184 = vld [vmem:[#allocation6 + $0x4] sm:$0xf]
          %v1185 = vld [vmem:[#allocation6 + $0x8] sm:$0xf]
          %v1186 = vld [vmem:[#allocation6 + $0xc] sm:$0xf]
          %v1187 = vld [vmem:[#allocation6 + $0x10] sm:$0xf]
          %v1188 = vld [vmem:[#allocation6 + $0x14] sm:$0xf]
          %v1189 = vld [vmem:[#allocation6 + $0x18] sm:$0xf]
          %v1190 = vld [vmem:[#allocation6 + $0x1c] sm:$0xf]
          %v1191 = vld [vmem:[#allocation6 + $0x20] sm:$0xf]
          %v1192 = vld [vmem:[#allocation6 + $0x24] sm:$0xf]
          %v1193 = vld [vmem:[#allocation6 + $0x28] sm:$0xf]
          %v1194 = vld [vmem:[#allocation6 + $0x2c] sm:$0xf]
          %v1195 = vld [vmem:[#allocation6 + $0x30] sm:$0xf]
          %v1196 = vld [vmem:[#allocation6 + $0x34] sm:$0xf]
          %v1197 = vld [vmem:[#allocation6 + $0x38] sm:$0xf]
          %v1198 = vld [vmem:[#allocation6 + $0x3c] sm:$0xf]
          %v1199 = vld [vmem:[#allocation6 + $0x40] sm:$0xf]
          %v1200 = vld [vmem:[#allocation6 + $0x44] sm:$0xf]
          %v1201 = vld [vmem:[#allocation6 + $0x48] sm:$0xf]
          %v1202 = vld [vmem:[#allocation6 + $0x4c] sm:$0xf]
          %v1203 = vld [vmem:[#allocation6 + $0x50] sm:$0xf]
          %v1204 = vld [vmem:[#allocation6 + $0x54] sm:$0xf]
          %v1205 = vld [vmem:[#allocation6 + $0x58] sm:$0xf]
          %v1206 = vld [vmem:[#allocation6 + $0x5c] sm:$0xf]
          %v1207 = vld [vmem:[#allocation6 + $0x60] sm:$0xf]
          %v1208 = vld [vmem:[#allocation6 + $0x64] sm:$0xf]
          %v1209 = vld [vmem:[#allocation6 + $0x68] sm:$0xf]
          %v1210 = vld [vmem:[#allocation6 + $0x6c] sm:$0xf]
          %v1211 = vld [vmem:[#allocation6 + $0x70] sm:$0xf]
          %v1212 = vld [vmem:[#allocation6 + $0x74] sm:$0xf]
          %v1213 = vld [vmem:[#allocation6 + $0x78] sm:$0xf]
          %v1214 = vld [vmem:[#allocation6 + $0x7c] sm:$0xf]
          %v1215 = vld [vmem:[#allocation6 + $0x80] sm:$0xf]
          %v1216 = vld [vmem:[#allocation6 + $0x84] sm:$0xf]
          %v1217 = vld [vmem:[#allocation6 + $0x88] sm:$0xf]
          %v1218 = vld [vmem:[#allocation6 + $0x8c] sm:$0xf]
          %v1219 = vld [vmem:[#allocation6 + $0x90] sm:$0xf]
          %v1220 = vld [vmem:[#allocation6 + $0x94] sm:$0xf]
          %v1221 = vld [vmem:[#allocation6 + $0x98] sm:$0xf]
          %v1222 = vld [vmem:[#allocation6 + $0x9c] sm:$0xf]
          %v1223 = vld [vmem:[#allocation6 + $0xa0] sm:$0xf]
          %v1224 = vld [vmem:[#allocation6 + $0xa4] sm:$0xf]
          %v1225 = vld [vmem:[#allocation6 + $0xa8] sm:$0xf]
          %v1226 = vld [vmem:[#allocation6 + $0xac] sm:$0xf]
          %v1227 = vld [vmem:[#allocation6 + $0xb0] sm:$0xf]
          %v1228 = vld [vmem:[#allocation6 + $0xb4] sm:$0xf]
          %v1229 = vld [vmem:[#allocation6 + $0xb8] sm:$0xf]
          %v1230 = vld [vmem:[#allocation6 + $0xbc] sm:$0xf]
          %v1231 = vld [vmem:[#allocation6 + $0xc0] sm:$0xf]
          %v1232 = vld [vmem:[#allocation6 + $0xc4] sm:$0xf]
          %v1233 = vld [vmem:[#allocation6 + $0xc8] sm:$0xf]
          %v1234 = vld [vmem:[#allocation6 + $0xcc] sm:$0xf]
          %v1235 = vld [vmem:[#allocation6 + $0xd0] sm:$0xf]
          %v1236 = vld [vmem:[#allocation6 + $0xd4] sm:$0xf]
          %v1237 = vld [vmem:[#allocation6 + $0xd8] sm:$0xf]
          %v1238 = vld [vmem:[#allocation6 + $0xdc] sm:$0xf]
          %v1239 = vld [vmem:[#allocation6 + $0xe0] sm:$0xf]
          %v1240 = vld [vmem:[#allocation6 + $0xe4] sm:$0xf]
          %v1241 = vld [vmem:[#allocation6 + $0xe8] sm:$0xf]
          %v1242 = vld [vmem:[#allocation6 + $0xec] sm:$0xf]
          %v1243 = vld [vmem:[#allocation6 + $0xf0] sm:$0xf]
          %v1244 = vld [vmem:[#allocation6 + $0xf4] sm:$0xf]
          %v1245 = vld [vmem:[#allocation6 + $0xf8] sm:$0xf]
          %v1246 = vld [vmem:[#allocation6 + $0xfc] sm:$0xf]
          %v1247 = vld [vmem:[#allocation6 + $0x100] sm:$0xf]
          %v1248 = vld [vmem:[#allocation6 + $0x104] sm:$0xf]
          %v1249 = vld [vmem:[#allocation6 + $0x108] sm:$0xf]
          %v1250 = vld [vmem:[#allocation6 + $0x10c] sm:$0xf]
          %v1251 = vld [vmem:[#allocation6 + $0x110] sm:$0xf]
          %v1252 = vld [vmem:[#allocation6 + $0x114] sm:$0xf]
          %v1253 = vld [vmem:[#allocation6 + $0x118] sm:$0xf]
          %v1254 = vld [vmem:[#allocation6 + $0x11c] sm:$0xf]
          %v1255 = vld [vmem:[#allocation6 + $0x120] sm:$0xf]
          %v1256 = vld [vmem:[#allocation6 + $0x124] sm:$0xf]
          %v1257 = vld [vmem:[#allocation6 + $0x128] sm:$0xf]
          %v1258 = vld [vmem:[#allocation6 + $0x12c] sm:$0xf]
          %v1259 = vld [vmem:[#allocation6 + $0x130] sm:$0xf]
          %v1260 = vld [vmem:[#allocation6 + $0x134] sm:$0xf]
          %v1261 = vld [vmem:[#allocation6 + $0x138] sm:$0xf]
          %v1262 = vld [vmem:[#allocation6 + $0x13c] sm:$0xf]
          %v1263 = vld [vmem:[#allocation6 + $0x140] sm:$0xf]
          %v1264 = vld [vmem:[#allocation6 + $0x144] sm:$0xf]
          %v1265 = vld [vmem:[#allocation6 + $0x148] sm:$0xf]
          %v1266 = vld [vmem:[#allocation6 + $0x14c] sm:$0xf]
          %v1267 = vld [vmem:[#allocation6 + $0x150] sm:$0xf]
          %v1268 = vld [vmem:[#allocation6 + $0x154] sm:$0xf]
          %v1269 = vld [vmem:[#allocation6 + $0x158] sm:$0xf]
          %v1270 = vld [vmem:[#allocation6 + $0x15c] sm:$0xf]
          %v1271 = vld [vmem:[#allocation6 + $0x160] sm:$0xf]
          %v1272 = vld [vmem:[#allocation6 + $0x164] sm:$0xf]
          %v1273 = vld [vmem:[#allocation6 + $0x168] sm:$0xf]
          %v1274 = vld [vmem:[#allocation6 + $0x16c] sm:$0xf]
          %v1275 = vld [vmem:[#allocation6 + $0x170] sm:$0xf]
          %v1276 = vld [vmem:[#allocation6 + $0x174] sm:$0xf]
          %v1277 = vld [vmem:[#allocation6 + $0x178] sm:$0xf]
          %v1278 = vld [vmem:[#allocation6 + $0x17c] sm:$0xf]
          %v1279 = vld [vmem:[#allocation8] sm:$0x1]
          %v1281 = vperm.slane %v1279, 0
          %v1379 = vunpack.c.l.b16 %v1183
          %v1380 = vunpack.c.l.b16 %v1184
          %v1381 = vunpack.c.l.b16 %v1185
          %v1382 = vunpack.c.l.b16 %v1186
          %v1383 = vunpack.c.l.b16 %v1187
          %v1384 = vunpack.c.l.b16 %v1188
          %v1385 = vunpack.c.l.b16 %v1189
          %v1386 = vunpack.c.l.b16 %v1190
          %v1387 = vunpack.c.l.b16 %v1191
          %v1388 = vunpack.c.l.b16 %v1192
          %v1389 = vunpack.c.l.b16 %v1193
          %v1390 = vunpack.c.l.b16 %v1194
          %v1391 = vunpack.c.l.b16 %v1195
          %v1392 = vunpack.c.l.b16 %v1196
          %v1393 = vunpack.c.l.b16 %v1197
          %v1394 = vunpack.c.l.b16 %v1198
          %v1395 = vunpack.c.l.b16 %v1199
          %v1396 = vunpack.c.l.b16 %v1200
          %v1397 = vunpack.c.l.b16 %v1201
          %v1398 = vunpack.c.l.b16 %v1202
          %v1399 = vunpack.c.l.b16 %v1203
          %v1400 = vunpack.c.l.b16 %v1204
          %v1401 = vunpack.c.l.b16 %v1205
          %v1402 = vunpack.c.l.b16 %v1206
          %v1403 = vunpack.c.l.b16 %v1207
          %v1404 = vunpack.c.l.b16 %v1208
          %v1405 = vunpack.c.l.b16 %v1209
          %v1406 = vunpack.c.l.b16 %v1210
          %v1407 = vunpack.c.l.b16 %v1211
          %v1408 = vunpack.c.l.b16 %v1212
          %v1409 = vunpack.c.l.b16 %v1213
          %v1410 = vunpack.c.l.b16 %v1214
          %v1411 = vunpack.c.l.b16 %v1215
          %v1412 = vunpack.c.l.b16 %v1216
          %v1413 = vunpack.c.l.b16 %v1217
          %v1414 = vunpack.c.l.b16 %v1218
          %v1415 = vunpack.c.l.b16 %v1219
          %v1416 = vunpack.c.l.b16 %v1220
          %v1417 = vunpack.c.l.b16 %v1221
          %v1418 = vunpack.c.l.b16 %v1222
          %v1419 = vunpack.c.l.b16 %v1223
          %v1420 = vunpack.c.l.b16 %v1224
          %v1421 = vunpack.c.l.b16 %v1225
          %v1422 = vunpack.c.l.b16 %v1226
          %v1423 = vunpack.c.l.b16 %v1227
          %v1424 = vunpack.c.l.b16 %v1228
          %v1425 = vunpack.c.l.b16 %v1229
          %v1426 = vunpack.c.l.b16 %v1230
          %v1427 = vunpack.c.l.b16 %v1231
          %v1428 = vunpack.c.l.b16 %v1232
          %v1429 = vunpack.c.l.b16 %v1233
          %v1430 = vunpack.c.l.b16 %v1234
          %v1431 = vunpack.c.l.b16 %v1235
          %v1432 = vunpack.c.l.b16 %v1236
          %v1433 = vunpack.c.l.b16 %v1237
          %v1434 = vunpack.c.l.b16 %v1238
          %v1435 = vunpack.c.l.b16 %v1239
          %v1436 = vunpack.c.l.b16 %v1240
          %v1437 = vunpack.c.l.b16 %v1241
          %v1438 = vunpack.c.l.b16 %v1242
          %v1439 = vunpack.c.l.b16 %v1243
          %v1440 = vunpack.c.l.b16 %v1244
          %v1441 = vunpack.c.l.b16 %v1245
          %v1442 = vunpack.c.l.b16 %v1246
          %v1443 = vunpack.c.l.b16 %v1247
          %v1444 = vunpack.c.l.b16 %v1248
          %v1445 = vunpack.c.l.b16 %v1249
          %v1446 = vunpack.c.l.b16 %v1250
          %v1447 = vunpack.c.l.b16 %v1251
          %v1448 = vunpack.c.l.b16 %v1252
          %v1449 = vunpack.c.l.b16 %v1253
          %v1450 = vunpack.c.l.b16 %v1254
          %v1451 = vunpack.c.l.b16 %v1255
          %v1452 = vunpack.c.l.b16 %v1256
          %v1453 = vunpack.c.l.b16 %v1257
          %v1454 = vunpack.c.l.b16 %v1258
          %v1455 = vunpack.c.l.b16 %v1259
          %v1456 = vunpack.c.l.b16 %v1260
          %v1457 = vunpack.c.l.b16 %v1261
          %v1458 = vunpack.c.l.b16 %v1262
          %v1459 = vunpack.c.l.b16 %v1263
          %v1460 = vunpack.c.l.b16 %v1264
          %v1461 = vunpack.c.l.b16 %v1265
          %v1462 = vunpack.c.l.b16 %v1266
          %v1463 = vunpack.c.l.b16 %v1267
          %v1464 = vunpack.c.l.b16 %v1268
          %v1465 = vunpack.c.l.b16 %v1269
          %v1466 = vunpack.c.l.b16 %v1270
          %v1467 = vunpack.c.l.b16 %v1271
          %v1468 = vunpack.c.l.b16 %v1272
          %v1469 = vunpack.c.l.b16 %v1273
          %v1470 = vunpack.c.l.b16 %v1274
          %v1471 = vunpack.c.l.b16 %v1275
          %v1472 = vunpack.c.l.b16 %v1276
          %v1473 = vunpack.c.l.b16 %v1277
          %v1474 = vunpack.c.l.b16 %v1278
          %v1475 = vpack.c.b16 %v1380, %v1379
          %v1476 = vpack.c.b16 %v1382, %v1381
          %v1477 = vpack.c.b16 %v1384, %v1383
          %v1478 = vpack.c.b16 %v1386, %v1385
          %v1479 = vpack.c.b16 %v1388, %v1387
          %v1480 = vpack.c.b16 %v1390, %v1389
          %v1481 = vpack.c.b16 %v1392, %v1391
          %v1482 = vpack.c.b16 %v1394, %v1393
          %v1483 = vpack.c.b16 %v1396, %v1395
          %v1484 = vpack.c.b16 %v1398, %v1397
          %v1485 = vpack.c.b16 %v1400, %v1399
          %v1486 = vpack.c.b16 %v1402, %v1401
          %v1487 = vpack.c.b16 %v1404, %v1403
          %v1488 = vpack.c.b16 %v1406, %v1405
          %v1489 = vpack.c.b16 %v1408, %v1407
          %v1490 = vpack.c.b16 %v1410, %v1409
          %v1491 = vpack.c.b16 %v1412, %v1411
          %v1492 = vpack.c.b16 %v1414, %v1413
          %v1493 = vpack.c.b16 %v1416, %v1415
          %v1494 = vpack.c.b16 %v1418, %v1417
          %v1495 = vpack.c.b16 %v1420, %v1419
          %v1496 = vpack.c.b16 %v1422, %v1421
          %v1497 = vpack.c.b16 %v1424, %v1423
          %v1498 = vpack.c.b16 %v1426, %v1425
          %v1499 = vpack.c.b16 %v1428, %v1427
          %v1500 = vpack.c.b16 %v1430, %v1429
          %v1501 = vpack.c.b16 %v1432, %v1431
          %v1502 = vpack.c.b16 %v1434, %v1433
          %v1503 = vpack.c.b16 %v1436, %v1435
          %v1504 = vpack.c.b16 %v1438, %v1437
          %v1505 = vpack.c.b16 %v1440, %v1439
          %v1506 = vpack.c.b16 %v1442, %v1441
          %v1507 = vpack.c.b16 %v1444, %v1443
          %v1508 = vpack.c.b16 %v1446, %v1445
          %v1509 = vpack.c.b16 %v1448, %v1447
          %v1510 = vpack.c.b16 %v1450, %v1449
          %v1511 = vpack.c.b16 %v1452, %v1451
          %v1512 = vpack.c.b16 %v1454, %v1453
          %v1513 = vpack.c.b16 %v1456, %v1455
          %v1514 = vpack.c.b16 %v1458, %v1457
          %v1515 = vpack.c.b16 %v1460, %v1459
          %v1516 = vpack.c.b16 %v1462, %v1461
          %v1517 = vpack.c.b16 %v1464, %v1463
          %v1518 = vpack.c.b16 %v1466, %v1465
          %v1519 = vpack.c.b16 %v1468, %v1467
          %v1520 = vpack.c.b16 %v1470, %v1469
          %v1521 = vpack.c.b16 %v1472, %v1471
          %v1522 = vpack.c.b16 %v1474, %v1473
          %1571 = vmatpush.bf16.msra.mxu0 %v1482
          %1572 = vmatpush.bf16.msra.mxu0 %v1481
          %1573 = vmatpush.bf16.msra.mxu0 %v1480
          %1574 = vmatpush.bf16.msra.mxu0 %v1479
          %1575 = vmatpush.bf16.msra.mxu0 %v1478
          %1576 = vmatpush.bf16.msra.mxu0 %v1477
          %1577 = vmatpush.bf16.msra.mxu0 %v1476
          %1578 = vmatpush.bf16.msra.mxu0 %v1475
          %1579 = vmatmul.bf16.gmra.mxu0 %v1171
          %v1580 = vpop.f32.mrf.mxu0
          %v1581 = vadd.f32 %v1281, %v1580
          %v1582 = vpop.f32.mrf.mxu0
          %v1583 = vadd.f32 %v1281, %v1582
          %1584 = vmatmul.bf16.gmra.mxu0 %v1177
          %v1585 = vpop.f32.mrf.mxu0
          %v1586 = vadd.f32 %v1281, %v1585
          %v1587 = vpop.f32.mrf.mxu0
          %v1588 = vadd.f32 %v1281, %v1587
          %1589 = vdwg.mxu0
          %1590 = vmatpush.bf16.msra.mxu0 %v1490
          %1591 = vmatpush.bf16.msra.mxu0 %v1489
          %1592 = vmatpush.bf16.msra.mxu0 %v1488
          %1593 = vmatpush.bf16.msra.mxu0 %v1487
          %1594 = vmatpush.bf16.msra.mxu0 %v1486
          %1595 = vmatpush.bf16.msra.mxu0 %v1485
          %1596 = vmatpush.bf16.msra.mxu0 %v1484
          %1597 = vmatpush.bf16.msra.mxu0 %v1483
          %1598 = vmatmul.bf16.gmra.mxu0 %v1172
          %v1599 = vpop.f32.mrf.mxu0
          %v1600 = vadd.f32 %v1581, %v1599
          %v1601 = vpop.f32.mrf.mxu0
          %v1602 = vadd.f32 %v1583, %v1601
          %1603 = vmatmul.bf16.gmra.mxu0 %v1178
          %v1604 = vpop.f32.mrf.mxu0
          %v1605 = vadd.f32 %v1586, %v1604
          %v1606 = vpop.f32.mrf.mxu0
          %v1607 = vadd.f32 %v1588, %v1606
          %1608 = vdwg.mxu0
          %1609 = vmatpush.bf16.msra.mxu0 %v1498
          %1610 = vmatpush.bf16.msra.mxu0 %v1497
          %1611 = vmatpush.bf16.msra.mxu0 %v1496
          %1612 = vmatpush.bf16.msra.mxu0 %v1495
          %1613 = vmatpush.bf16.msra.mxu0 %v1494
          %1614 = vmatpush.bf16.msra.mxu0 %v1493
          %1615 = vmatpush.bf16.msra.mxu0 %v1492
          %1616 = vmatpush.bf16.msra.mxu0 %v1491
          %1617 = vmatmul.bf16.gmra.mxu0 %v1173
          %v1618 = vpop.f32.mrf.mxu0
          %v1619 = vadd.f32 %v1600, %v1618
          %v1620 = vpop.f32.mrf.mxu0
          %v1621 = vadd.f32 %v1602, %v1620
          %1622 = vmatmul.bf16.gmra.mxu0 %v1179
          %v1623 = vpop.f32.mrf.mxu0
          %v1624 = vadd.f32 %v1605, %v1623
          %v1625 = vpop.f32.mrf.mxu0
          %v1626 = vadd.f32 %v1607, %v1625
          %1627 = vdwg.mxu0
          %1628 = vmatpush.bf16.msra.mxu0 %v1506
          %1629 = vmatpush.bf16.msra.mxu0 %v1505
          %1630 = vmatpush.bf16.msra.mxu0 %v1504
          %1631 = vmatpush.bf16.msra.mxu0 %v1503
          %1632 = vmatpush.bf16.msra.mxu0 %v1502
          %1633 = vmatpush.bf16.msra.mxu0 %v1501
          %1634 = vmatpush.bf16.msra.mxu0 %v1500
          %1635 = vmatpush.bf16.msra.mxu0 %v1499
          %1636 = vmatmul.bf16.gmra.mxu0 %v1174
          %v1637 = vpop.f32.mrf.mxu0
          %v1638 = vadd.f32 %v1619, %v1637
          %v1639 = vpop.f32.mrf.mxu0
          %v1640 = vadd.f32 %v1621, %v1639
          %1641 = vmatmul.bf16.gmra.mxu0 %v1180
          %v1642 = vpop.f32.mrf.mxu0
          %v1643 = vadd.f32 %v1624, %v1642
          %v1644 = vpop.f32.mrf.mxu0
          %v1645 = vadd.f32 %v1626, %v1644
          %1646 = vdwg.mxu0
          %1647 = vmatpush.bf16.msra.mxu0 %v1514
          %1648 = vmatpush.bf16.msra.mxu0 %v1513
          %1649 = vmatpush.bf16.msra.mxu0 %v1512
          %1650 = vmatpush.bf16.msra.mxu0 %v1511
          %1651 = vmatpush.bf16.msra.mxu0 %v1510
          %1652 = vmatpush.bf16.msra.mxu0 %v1509
          %1653 = vmatpush.bf16.msra.mxu0 %v1508
          %1654 = vmatpush.bf16.msra.mxu0 %v1507
          %1655 = vmatmul.bf16.gmra.mxu0 %v1175
          %v1656 = vpop.f32.mrf.mxu0
          %v1657 = vadd.f32 %v1638, %v1656
          %v1658 = vpop.f32.mrf.mxu0
          %v1659 = vadd.f32 %v1640, %v1658
          %1660 = vmatmul.bf16.gmra.mxu0 %v1181
          %v1661 = vpop.f32.mrf.mxu0
          %v1662 = vadd.f32 %v1643, %v1661
          %v1663 = vpop.f32.mrf.mxu0
          %v1664 = vadd.f32 %v1645, %v1663
          %1665 = vdwg.mxu0
          %1666 = vmatpush.bf16.msra.mxu0 %v1522
          %1667 = vmatpush.bf16.msra.mxu0 %v1521
          %1668 = vmatpush.bf16.msra.mxu0 %v1520
          %1669 = vmatpush.bf16.msra.mxu0 %v1519
          %1670 = vmatpush.bf16.msra.mxu0 %v1518
          %1671 = vmatpush.bf16.msra.mxu0 %v1517
          %1672 = vmatpush.bf16.msra.mxu0 %v1516
          %1673 = vmatpush.bf16.msra.mxu0 %v1515
          %1674 = vmatmul.bf16.gmra.mxu0 %v1176
          %v1675 = vpop.f32.mrf.mxu0
          %v1676 = vadd.f32 %v1657, %v1675
          %v1677 = vpop.f32.mrf.mxu0
          %v1678 = vadd.f32 %v1659, %v1677
          %1679 = vmatmul.bf16.gmra.mxu0 %v1182
          %v1680 = vpop.f32.mrf.mxu0
          %v1681 = vadd.f32 %v1662, %v1680
          %v1682 = vpop.f32.mrf.mxu0
          %v1683 = vadd.f32 %v1664, %v1682
          %1684 = vdwg.mxu0
          %v1685 = vld [vmem:[#allocation9] sm:$0x1]
          %v1686 = vld [vmem:[#allocation11] sm:$0x1]
          %1687 = vadd.xlane.f32.xlu0 %v1676
          %v1688 = vpop.xlane.xlu0 %1687
          %1689 = vadd.xlane.f32.xlu0 %v1678
          %v1690 = vpop.xlane.xlu0 %1689
          %1691 = vadd.xlane.f32.xlu0 %v1681
          %v1692 = vpop.xlane.xlu0 %1691
          %1693 = vadd.xlane.f32.xlu0 %v1683
          %v1694 = vpop.xlane.xlu0 %1693
          %v1695 = vrcp.pop 128.0
          %v1696 = vmul.f32 128.0, %v1695
          %v1697 = vsub.f32 1.0, %v1696
          %v1698 = vmul.f32 %v1695, %v1697
          %v1699 = vadd.f32 %v1695, %v1698
          %vm1700 = vweird.f32 %v1695
          %v1701 = vsel %vm1700, %v1695, %v1699
          %v1702 = vmul.f32 %v1688, %v1701
          %v1703 = vmul.f32 %v1690, %v1701
          %v1704 = vmul.f32 %v1692, %v1701
          %v1705 = vmul.f32 %v1694, %v1701
          %v1706 = vsub.f32 %v1676, %v1702
          %v1707 = vsub.f32 %v1678, %v1703
          %v1708 = vsub.f32 %v1681, %v1704
          %v1709 = vsub.f32 %v1683, %v1705
          %v1710 = vmul.f32 %v1706, %v1706
          %v1711 = vmul.f32 %v1707, %v1707
          %v1712 = vmul.f32 %v1708, %v1708
          %v1713 = vmul.f32 %v1709, %v1709
          %1714 = vadd.xlane.f32.xlu0 %v1710
          %v1715 = vpop.xlane.xlu0 %1714
          %1716 = vadd.xlane.f32.xlu0 %v1711
          %v1717 = vpop.xlane.xlu0 %1716
          %1718 = vadd.xlane.f32.xlu0 %v1712
          %v1719 = vpop.xlane.xlu0 %1718
          %1720 = vadd.xlane.f32.xlu0 %v1713
          %v1721 = vpop.xlane.xlu0 %1720
          %v1722 = vmul.f32 %v1715, %v1701
          %v1723 = vmul.f32 %v1717, %v1701
          %v1724 = vmul.f32 %v1719, %v1701
          %v1725 = vmul.f32 %v1721, %v1701
          %v1726 = vadd.f32 %v1722, 1e-05
          %v1727 = vadd.f32 %v1723, 1e-05
          %v1728 = vadd.f32 %v1724, 1e-05
          %v1729 = vadd.f32 %v1725, 1e-05
          %v1730 = vrsqrt.pop %v1726
          %v1731 = vmul.f32 %v1730, %v1726
          %v1732 = vmul.f32 %v1731, %v1730
          %v1733 = vmul.f32 0.5, %v1732
          %v1734 = vsub.f32 1.5, %v1733
          %v1735 = vmul.f32 %v1730, %v1734
          %vm1736 = vweird.f32 %v1726
          %vm1737 = vweird.f32 %v1730
          %vm1738 = vmor %vm1736, %vm1737
          %v1739 = vsel %vm1738, %v1730, %v1735
          %v1740 = vrsqrt.pop %v1727
          %v1741 = vmul.f32 %v1740, %v1727
          %v1742 = vmul.f32 %v1741, %v1740
          %v1743 = vmul.f32 0.5, %v1742
          %v1744 = vsub.f32 1.5, %v1743
          %v1745 = vmul.f32 %v1740, %v1744
          %vm1746 = vweird.f32 %v1727
          %vm1747 = vweird.f32 %v1740
          %vm1748 = vmor %vm1746, %vm1747
          %v1749 = vsel %vm1748, %v1740, %v1745
          %v1750 = vrsqrt.pop %v1728
          %v1751 = vmul.f32 %v1750, %v1728
          %v1752 = vmul.f32 %v1751, %v1750
          %v1753 = vmul.f32 0.5, %v1752
          %v1754 = vsub.f32 1.5, %v1753
          %v1755 = vmul.f32 %v1750, %v1754
          %vm1756 = vweird.f32 %v1728
          %vm1757 = vweird.f32 %v1750
          %vm1758 = vmor %vm1756, %vm1757
          %v1759 = vsel %vm1758, %v1750, %v1755
          %v1760 = vrsqrt.pop %v1729
          %v1761 = vmul.f32 %v1760, %v1729
          %v1762 = vmul.f32 %v1761, %v1760
          %v1763 = vmul.f32 0.5, %v1762
          %v1764 = vsub.f32 1.5, %v1763
          %v1765 = vmul.f32 %v1760, %v1764
          %vm1766 = vweird.f32 %v1729
          %vm1767 = vweird.f32 %v1760
          %vm1768 = vmor %vm1766, %vm1767
          %v1769 = vsel %vm1768, %v1760, %v1765
          %v1770 = vmul.f32 %v1706, %v1739
          %v1771 = vmul.f32 %v1707, %v1749
          %v1772 = vmul.f32 %v1708, %v1759
          %v1773 = vmul.f32 %v1709, %v1769
          %v1775 = vperm.slane %v1685, 0
          %v1777 = vmul.f32 %v1770, %v1775
          %v1778 = vmul.f32 %v1771, %v1775
          %v1779 = vmul.f32 %v1772, %v1775
          %v1780 = vmul.f32 %v1773, %v1775
          %v1782 = vperm.slane %v1686, 0
          %v1784 = vadd.f32 %v1777, %v1782
          %v1785 = vadd.f32 %v1778, %v1782
          %v1786 = vadd.f32 %v1779, %v1782
          %v1787 = vadd.f32 %v1780, %v1782
          %v1788 = vld [vmem:[%s1] sm:$0xff]
          %v1789 = vld [vmem:[%s1 + $0x8] sm:$0xff]
          %1790 = vadd.xlane.f32.xlu0 %v1788
          %v1791 = vpop.xlane.xlu0 %1790
          %1792 = vadd.xlane.f32.xlu0 %v1789
          %v1793 = vpop.xlane.xlu0 %1792
          %v1794 = vmul.f32 %v1791, %v1701
          %v1795 = vmul.f32 %v1793, %v1701
          %v1796 = vsub.f32 %v1788, %v1794
          %v1797 = vsub.f32 %v1789, %v1795
          %v1798 = vmul.f32 %v1796, %v1796
          %v1799 = vmul.f32 %v1797, %v1797
          %1800 = vadd.xlane.f32.xlu0 %v1798
          %v1801 = vpop.xlane.xlu0 %1800
          %1802 = vadd.xlane.f32.xlu0 %v1799
          %v1803 = vpop.xlane.xlu0 %1802
          %v1804 = vmul.f32 %v1801, %v1701
          %v1805 = vmul.f32 %v1803, %v1701
          %v1806 = vadd.f32 %v1804, 1e-05
          %v1807 = vadd.f32 %v1805, 1e-05
          %v1808 = vrsqrt.pop %v1806
          %v1809 = vmul.f32 %v1808, %v1806
          %v1810 = vmul.f32 %v1809, %v1808
          %v1811 = vmul.f32 0.5, %v1810
          %v1812 = vsub.f32 1.5, %v1811
          %v1813 = vmul.f32 %v1808, %v1812
          %vm1814 = vweird.f32 %v1806
          %vm1815 = vweird.f32 %v1808
          %vm1816 = vmor %vm1814, %vm1815
          %v1817 = vsel %vm1816, %v1808, %v1813
          %v1818 = vrsqrt.pop %v1807
          %v1819 = vmul.f32 %v1818, %v1807
          %v1820 = vmul.f32 %v1819, %v1818
          %v1821 = vmul.f32 0.5, %v1820
          %v1822 = vsub.f32 1.5, %v1821
          %v1823 = vmul.f32 %v1818, %v1822
          %vm1824 = vweird.f32 %v1807
          %vm1825 = vweird.f32 %v1818
          %vm1826 = vmor %vm1824, %vm1825
          %v1827 = vsel %vm1826, %v1818, %v1823
          %v1828 = vmul.f32 %v1796, %v1817
          %v1829 = vmul.f32 %v1797, %v1827
          %v1830 = vmul.f32 %v1828, %v1775
          %v1831 = vmul.f32 %v1829, %v1775
          %v1832 = vadd.f32 %v1830, %v1782
          %v1833 = vadd.f32 %v1831, %v1782
          %1834 = vst [vmem:[#allocation2] sm:$0xff] %v1784
          %1835 = vst [vmem:[#allocation2 + $0x8] sm:$0xff] %v1785
          %1836 = vst [vmem:[#allocation2 + $0x10] sm:$0xff] %v1832
          %1837 = vst [vmem:[#allocation2 + $0x18] sm:$0xff] %v1832
          %1838 = vst [vmem:[#allocation2 + $0x20] sm:$0xff] %v1786
          %1839 = vst [vmem:[#allocation2 + $0x28] sm:$0xff] %v1787
          %1840 = vst [vmem:[#allocation2 + $0x30] sm:$0xff] %v1833
          %1841 = vst [vmem:[#allocation2 + $0x38] sm:$0xff] %v1833
        $region180: #{vlm_forward.1} parent=99 // pred_fallthru
          _
        %v1842 = vld [vmem:[#allocation2] sm:$0xff]
        %v1843 = vld [vmem:[#allocation2 + $0x8] sm:$0xff]
        %v1844 = vld [vmem:[#allocation2 + $0x10] sm:$0xff]
        %v1845 = vld [vmem:[#allocation2 + $0x18] sm:$0xff]
        %v1846 = vld [vmem:[#allocation2 + $0x20] sm:$0xff]
        %v1847 = vld [vmem:[#allocation2 + $0x28] sm:$0xff]
        %v1848 = vld [vmem:[#allocation2 + $0x30] sm:$0xff]
        %v1849 = vld [vmem:[#allocation2 + $0x38] sm:$0xff]
        %v1850 = vpack.c.bf16 %v1843, %v1842
        %v1851 = vpack.c.bf16 %v1845, %v1844
        %v1852 = vpack.c.bf16 %v1847, %v1846
        %v1853 = vpack.c.bf16 %v1849, %v1848
        %v1854 = vld [vmem:[%s926] sm:$0xff]
        %v1855 = vld [vmem:[%s926 + $0x8] sm:$0xf]
        %v1856 = vld [vmem:[%s926 + $0xc] sm:$0xff]
        %v1857 = vld [vmem:[%s926 + $0x14] sm:$0xf]
        %v1858 = vld [vmem:[%s926 + $0x18] sm:$0xff]
        %v1859 = vld [vmem:[%s926 + $0x20] sm:$0xf]
        %v1860 = vld [vmem:[%s926 + $0x24] sm:$0xff]
        %v1861 = vld [vmem:[%s926 + $0x2c] sm:$0xf]
        %v1862 = vld [vmem:[%s926 + $0x30] sm:$0xff]
        %v1863 = vld [vmem:[%s926 + $0x38] sm:$0xf]
        %v1864 = vld [vmem:[%s926 + $0x3c] sm:$0xff]
        %v1865 = vld [vmem:[%s926 + $0x44] sm:$0xf]
        %v1866 = vld [vmem:[%s926 + $0x48] sm:$0xff]
        %v1867 = vld [vmem:[%s926 + $0x50] sm:$0xf]
        %v1868 = vld [vmem:[%s926 + $0x54] sm:$0xff]
        %v1869 = vld [vmem:[%s926 + $0x5c] sm:$0xf]
        %v1870 = vld [vmem:[%s926 + $0x60] sm:$0xff]
        %v1871 = vld [vmem:[%s926 + $0x68] sm:$0xf]
        %v1872 = vld [vmem:[%s926 + $0x6c] sm:$0xff]
        %v1873 = vld [vmem:[%s926 + $0x74] sm:$0xf]
        %v1874 = vld [vmem:[%s926 + $0x78] sm:$0xff]
        %v1875 = vld [vmem:[%s926 + $0x80] sm:$0xf]
        %v1876 = vld [vmem:[%s926 + $0x84] sm:$0xff]
        %v1877 = vld [vmem:[%s926 + $0x8c] sm:$0xf]
        %v1878 = vld [vmem:[%s926 + $0x90] sm:$0xff]
        %v1879 = vld [vmem:[%s926 + $0x98] sm:$0xf]
        %v1880 = vld [vmem:[%s926 + $0x9c] sm:$0xff]
        %v1881 = vld [vmem:[%s926 + $0xa4] sm:$0xf]
        %v1882 = vld [vmem:[%s926 + $0xa8] sm:$0xff]
        %v1883 = vld [vmem:[%s926 + $0xb0] sm:$0xf]
        %v1884 = vld [vmem:[%s926 + $0xb4] sm:$0xff]
        %v1885 = vld [vmem:[%s926 + $0xbc] sm:$0xf]
        %v1886 = vld [vmem:[%s936] sm:$0x7]
        %v1888 = vperm.slane %v1886, 0
        %v1889 = vperm.slane %v1886, 1
        %v1890 = vperm.slane %v1886, 2
        %v1926 = vunpack.c.l.b16 %v1854
        %v1927 = vunpack.c.h.b16 %v1854
        %v1928 = vunpack.c.l.b16 %v1855
        %v1929 = vunpack.c.l.b16 %v1856
        %v1930 = vunpack.c.h.b16 %v1856
        %v1931 = vunpack.c.l.b16 %v1857
        %v1932 = vunpack.c.l.b16 %v1858
        %v1933 = vunpack.c.h.b16 %v1858
        %v1934 = vunpack.c.l.b16 %v1859
        %v1935 = vunpack.c.l.b16 %v1860
        %v1936 = vunpack.c.h.b16 %v1860
        %v1937 = vunpack.c.l.b16 %v1861
        %v1938 = vunpack.c.l.b16 %v1862
        %v1939 = vunpack.c.h.b16 %v1862
        %v1940 = vunpack.c.l.b16 %v1863
        %v1941 = vunpack.c.l.b16 %v1864
        %v1942 = vunpack.c.h.b16 %v1864
        %v1943 = vunpack.c.l.b16 %v1865
        %v1944 = vunpack.c.l.b16 %v1866
        %v1945 = vunpack.c.h.b16 %v1866
        %v1946 = vunpack.c.l.b16 %v1867
        %v1947 = vunpack.c.l.b16 %v1868
        %v1948 = vunpack.c.h.b16 %v1868
        %v1949 = vunpack.c.l.b16 %v1869
        %v1950 = vunpack.c.l.b16 %v1870
        %v1951 = vunpack.c.h.b16 %v1870
        %v1952 = vunpack.c.l.b16 %v1871
        %v1953 = vunpack.c.l.b16 %v1872
        %v1954 = vunpack.c.h.b16 %v1872
        %v1955 = vunpack.c.l.b16 %v1873
        %v1956 = vunpack.c.l.b16 %v1874
        %v1957 = vunpack.c.h.b16 %v1874
        %v1958 = vunpack.c.l.b16 %v1875
        %v1959 = vunpack.c.l.b16 %v1876
        %v1960 = vunpack.c.h.b16 %v1876
        %v1961 = vunpack.c.l.b16 %v1877
        %v1962 = vunpack.c.l.b16 %v1878
        %v1963 = vunpack.c.h.b16 %v1878
        %v1964 = vunpack.c.l.b16 %v1879
        %v1965 = vunpack.c.l.b16 %v1880
        %v1966 = vunpack.c.h.b16 %v1880
        %v1967 = vunpack.c.l.b16 %v1881
        %v1968 = vunpack.c.l.b16 %v1882
        %v1969 = vunpack.c.h.b16 %v1882
        %v1970 = vunpack.c.l.b16 %v1883
        %v1971 = vunpack.c.l.b16 %v1884
        %v1972 = vunpack.c.h.b16 %v1884
        %v1973 = vunpack.c.l.b16 %v1885
        %v1974 = vpack.c.b16 %v1929, %v1926
        %v1975 = vpack.c.b16 %v1930, %v1927
        %v1976 = vpack.c.b16 %v1931, %v1928
        %v1977 = vpack.c.b16 %v1935, %v1932
        %v1978 = vpack.c.b16 %v1936, %v1933
        %v1979 = vpack.c.b16 %v1937, %v1934
        %v1980 = vpack.c.b16 %v1941, %v1938
        %v1981 = vpack.c.b16 %v1942, %v1939
        %v1982 = vpack.c.b16 %v1943, %v1940
        %v1983 = vpack.c.b16 %v1947, %v1944
        %v1984 = vpack.c.b16 %v1948, %v1945
        %v1985 = vpack.c.b16 %v1949, %v1946
        %v1986 = vpack.c.b16 %v1953, %v1950
        %v1987 = vpack.c.b16 %v1954, %v1951
        %v1988 = vpack.c.b16 %v1955, %v1952
        %v1989 = vpack.c.b16 %v1959, %v1956
        %v1990 = vpack.c.b16 %v1960, %v1957
        %v1991 = vpack.c.b16 %v1961, %v1958
        %v1992 = vpack.c.b16 %v1965, %v1962
        %v1993 = vpack.c.b16 %v1966, %v1963
        %v1994 = vpack.c.b16 %v1967, %v1964
        %v1995 = vpack.c.b16 %v1971, %v1968
        %v1996 = vpack.c.b16 %v1972, %v1969
        %v1997 = vpack.c.b16 %v1973, %v1970
        %2022 = vmatpush.bf16.msra.mxu0 %v1995
        %2023 = vmatpush.bf16.msra.mxu0 %v1992
        %2024 = vmatpush.bf16.msra.mxu0 %v1989
        %2025 = vmatpush.bf16.msra.mxu0 %v1986
        %2026 = vmatpush.bf16.msra.mxu0 %v1983
        %2027 = vmatpush.bf16.msra.mxu0 %v1980
        %2028 = vmatpush.bf16.msra.mxu0 %v1977
        %2029 = vmatpush.bf16.msra.mxu0 %v1974
        %2030 = vmatmul.bf16.gmra.mxu0 %v1850
        %v2031 = vpop.f32.mrf.mxu0
        %v2032 = vadd.f32 %v1888, %v2031
        %v2033 = vpop.f32.mrf.mxu0
        %v2034 = vadd.f32 %v1888, %v2033
        %2035 = vmatmul.bf16.gmra.mxu0 %v1851
        %v2036 = vpop.f32.mrf.mxu0
        %v2037 = vadd.f32 %v1888, %v2036
        %v2038 = vpop.f32.mrf.mxu0
        %v2039 = vadd.f32 %v1888, %v2038
        %2040 = vmatmul.bf16.gmra.mxu0 %v1852
        %v2041 = vpop.f32.mrf.mxu0
        %v2042 = vadd.f32 %v1888, %v2041
        %v2043 = vpop.f32.mrf.mxu0
        %v2044 = vadd.f32 %v1888, %v2043
        %2045 = vmatmul.bf16.gmra.mxu0 %v1853
        %v2046 = vpop.f32.mrf.mxu0
        %v2047 = vadd.f32 %v1888, %v2046
        %v2048 = vpop.f32.mrf.mxu0
        %v2049 = vadd.f32 %v1888, %v2048
        %2050 = vdwg.mxu0
        %2051 = vmatpush.bf16.msra.mxu0 %v1996
        %2052 = vmatpush.bf16.msra.mxu0 %v1993
        %2053 = vmatpush.bf16.msra.mxu0 %v1990
        %2054 = vmatpush.bf16.msra.mxu0 %v1987
        %2055 = vmatpush.bf16.msra.mxu0 %v1984
        %2056 = vmatpush.bf16.msra.mxu0 %v1981
        %2057 = vmatpush.bf16.msra.mxu0 %v1978
        %2058 = vmatpush.bf16.msra.mxu0 %v1975
        %2059 = vmatmul.bf16.gmra.mxu0 %v1850
        %v2060 = vpop.f32.mrf.mxu0
        %v2061 = vadd.f32 %v1889, %v2060
        %v2062 = vpop.f32.mrf.mxu0
        %v2063 = vadd.f32 %v1889, %v2062
        %2064 = vmatmul.bf16.gmra.mxu0 %v1851
        %v2065 = vpop.f32.mrf.mxu0
        %v2066 = vadd.f32 %v1889, %v2065
        %v2067 = vpop.f32.mrf.mxu0
        %v2068 = vadd.f32 %v1889, %v2067
        %2069 = vmatmul.bf16.gmra.mxu0 %v1852
        %v2070 = vpop.f32.mrf.mxu0
        %v2071 = vadd.f32 %v1889, %v2070
        %v2072 = vpop.f32.mrf.mxu0
        %v2073 = vadd.f32 %v1889, %v2072
        %2074 = vmatmul.bf16.gmra.mxu0 %v1853
        %v2075 = vpop.f32.mrf.mxu0
        %v2076 = vadd.f32 %v1889, %v2075
        %v2077 = vpop.f32.mrf.mxu0
        %v2078 = vadd.f32 %v1889, %v2077
        %2079 = vdwg.mxu0
        %2080 = vmatpush.bf16.msra.mxu0 %v1997
        %2081 = vmatpush.bf16.msra.mxu0 %v1994
        %2082 = vmatpush.bf16.msra.mxu0 %v1991
        %2083 = vmatpush.bf16.msra.mxu0 %v1988
        %2084 = vmatpush.bf16.msra.mxu0 %v1985
        %2085 = vmatpush.bf16.msra.mxu0 %v1982
        %2086 = vmatpush.bf16.msra.mxu0 %v1979
        %2087 = vmatpush.bf16.msra.mxu0 %v1976
        %2088 = vmatmul.bf16.gmra.mxu0 %v1850
        %v2089 = vpop.f32.mrf.mxu0
        %v2090 = vadd.f32 %v1890, %v2089
        %v2091 = vpop.f32.mrf.mxu0
        %v2092 = vadd.f32 %v1890, %v2091
        %2093 = vmatmul.bf16.gmra.mxu0 %v1851
        %v2094 = vpop.f32.mrf.mxu0
        %v2095 = vadd.f32 %v1890, %v2094
        %v2096 = vpop.f32.mrf.mxu0
        %v2097 = vadd.f32 %v1890, %v2096
        %2098 = vmatmul.bf16.gmra.mxu0 %v1852
        %v2099 = vpop.f32.mrf.mxu0
        %v2100 = vadd.f32 %v1890, %v2099
        %v2101 = vpop.f32.mrf.mxu0
        %v2102 = vadd.f32 %v1890, %v2101
        %2103 = vmatmul.bf16.gmra.mxu0 %v1853
        %v2104 = vpop.f32.mrf.mxu0
        %v2105 = vadd.f32 %v1890, %v2104
        %v2106 = vpop.f32.mrf.mxu0
        %v2107 = vadd.f32 %v1890, %v2106
        %2108 = vdwg.mxu0
        %v2109 = vld [vmem:[%s946] sm:$0xf]
        %v2110 = vld [vmem:[%s946 + $0x4] sm:$0xf]
        %v2111 = vld [vmem:[%s946 + $0x8] sm:$0xf]
        %v2112 = vld [vmem:[%s946 + $0xc] sm:$0xf]
        %v2113 = vld [vmem:[%s946 + $0x10] sm:$0xf]
        %v2114 = vld [vmem:[%s946 + $0x14] sm:$0xf]
        %v2115 = vld [vmem:[%s946 + $0x18] sm:$0xf]
        %v2116 = vld [vmem:[%s946 + $0x1c] sm:$0xf]
        %v2117 = vld [vmem:[%s946 + $0x20] sm:$0xf]
        %v2118 = vld [vmem:[%s946 + $0x24] sm:$0xf]
        %v2119 = vld [vmem:[%s946 + $0x28] sm:$0xf]
        %v2120 = vld [vmem:[%s946 + $0x2c] sm:$0xf]
        %v2121 = vld [vmem:[%s946 + $0x30] sm:$0xf]
        %v2122 = vld [vmem:[%s946 + $0x34] sm:$0xf]
        %v2123 = vld [vmem:[%s946 + $0x38] sm:$0xf]
        %v2124 = vld [vmem:[%s946 + $0x3c] sm:$0xf]
        %v2125 = vpack.c.bf16 %v2032, %v2032
        %v2126 = vpack.c.bf16 %v2034, %v2034
        %v2127 = vpack.c.bf16 %v2037, %v2037
        %v2128 = vpack.c.bf16 %v2039, %v2039
        %v2129 = vpack.c.bf16 %v2042, %v2042
        %v2130 = vpack.c.bf16 %v2044, %v2044
        %v2131 = vpack.c.bf16 %v2047, %v2047
        %v2132 = vpack.c.bf16 %v2049, %v2049
        %v2133 = vpack.c.bf16 %v2061, %v2061
        %v2134 = vpack.c.bf16 %v2063, %v2063
        %v2135 = vpack.c.bf16 %v2066, %v2066
        %v2136 = vpack.c.bf16 %v2068, %v2068
        %v2137 = vpack.c.bf16 %v2071, %v2071
        %v2138 = vpack.c.bf16 %v2073, %v2073
        %v2139 = vpack.c.bf16 %v2076, %v2076
        %v2140 = vpack.c.bf16 %v2078, %v2078
        %v2141 = vpack.c.bf16 %v2090, %v2090
        %v2142 = vpack.c.bf16 %v2092, %v2092
        %v2143 = vpack.c.bf16 %v2095, %v2095
        %v2144 = vpack.c.bf16 %v2097, %v2097
        %v2145 = vpack.c.bf16 %v2100, %v2100
        %v2146 = vpack.c.bf16 %v2102, %v2102
        %v2147 = vpack.c.bf16 %v2105, %v2105
        %v2148 = vpack.c.bf16 %v2107, %v2107
        %v2153 = vunpack.c.l.b16 %v2125
        %v2154 = vunpack.c.l.b16 %v2126
        %v2155 = vunpack.c.l.b16 %v2127
        %v2156 = vunpack.c.l.b16 %v2128
        %v2157 = vpack.c.b16 %v2154, %v2153
        %v2158 = vpack.c.b16 %v2156, %v2155
        %v2163 = vunpack.c.l.b16 %v2133
        %v2164 = vunpack.c.l.b16 %v2134
        %v2165 = vunpack.c.l.b16 %v2135
        %v2166 = vunpack.c.l.b16 %v2136
        %v2167 = vpack.c.b16 %v2164, %v2163
        %v2168 = vpack.c.b16 %v2166, %v2165
        %vm2169 = vcmask 261120
        %v2171 = vsel %vm2169, %v2157, 0
        %v2174 = vsel %vm2169, %v2158, 0
        %v2177 = vsel %vm2169, %v2167, 0
        %v2180 = vsel %vm2169, %v2168, 0
        %2182 = vmatpush.bf16.xpose.msra.mxu0 0
        %2183 = vmatpush.bf16.xpose.msra.mxu0 0
        %2184 = vmatpush.bf16.xpose.msra.mxu0 0
        %2185 = vmatpush.bf16.xpose.msra.mxu0 0
        %2186 = vmatpush.bf16.xpose.msra.mxu0 0
        %2187 = vmatpush.bf16.xpose.msra.mxu0 0
        %2188 = vmatpush.bf16.xpose.msra.mxu0 %v2180
        %2189 = vmatpush.bf16.xpose.msra.mxu0 %v2177
        %2190 = vmatmul.bf16.gmra.mxu0 %v2171
        %v2191 = vpop.f32.mrf.mxu0
        %v2192 = vadd.f32 0.0, %v2191
        %v2193 = vpop.f32.mrf.mxu0
        %v2194 = vadd.f32 0.0, %v2193
        %2195 = vmatmul.bf16.gmra.mxu0 %v2174
        %v2196 = vpop.f32.mrf.mxu0
        %v2197 = vadd.f32 0.0, %v2196
        %v2198 = vpop.f32.mrf.mxu0
        %v2199 = vadd.f32 0.0, %v2198
        %2200 = vdwg.mxu0
        %v2205 = vunpack.c.l.b16 %v2129
        %v2206 = vunpack.c.l.b16 %v2130
        %v2207 = vunpack.c.l.b16 %v2131
        %v2208 = vunpack.c.l.b16 %v2132
        %v2209 = vpack.c.b16 %v2206, %v2205
        %v2210 = vpack.c.b16 %v2208, %v2207
        %v2215 = vunpack.c.l.b16 %v2137
        %v2216 = vunpack.c.l.b16 %v2138
        %v2217 = vunpack.c.l.b16 %v2139
        %v2218 = vunpack.c.l.b16 %v2140
        %v2219 = vpack.c.b16 %v2216, %v2215
        %v2220 = vpack.c.b16 %v2218, %v2217
        %v2222 = vsel %vm2169, %v2209, 0
        %v2225 = vsel %vm2169, %v2210, 0
        %v2228 = vsel %vm2169, %v2219, 0
        %v2231 = vsel %vm2169, %v2220, 0
        %2233 = vmatpush.bf16.xpose.msra.mxu0 0
        %2234 = vmatpush.bf16.xpose.msra.mxu0 0
        %2235 = vmatpush.bf16.xpose.msra.mxu0 0
        %2236 = vmatpush.bf16.xpose.msra.mxu0 0
        %2237 = vmatpush.bf16.xpose.msra.mxu0 0
        %2238 = vmatpush.bf16.xpose.msra.mxu0 0
        %2239 = vmatpush.bf16.xpose.msra.mxu0 %v2231
        %2240 = vmatpush.bf16.xpose.msra.mxu0 %v2228
        %2241 = vmatmul.bf16.gmra.mxu0 %v2222
        %v2242 = vpop.f32.mrf.mxu0
        %v2243 = vadd.f32 0.0, %v2242
        %v2244 = vpop.f32.mrf.mxu0
        %v2245 = vadd.f32 0.0, %v2244
        %2246 = vmatmul.bf16.gmra.mxu0 %v2225
        %v2247 = vpop.f32.mrf.mxu0
        %v2248 = vadd.f32 0.0, %v2247
        %v2249 = vpop.f32.mrf.mxu0
        %v2250 = vadd.f32 0.0, %v2249
        %2251 = vdwg.mxu0
        %v2252 = vmul.f32 %v2192, 0.17677669
        %v2253 = vmul.f32 %v2194, 0.17677669
        %v2254 = vmul.f32 %v2197, 0.17677669
        %v2255 = vmul.f32 %v2199, 0.17677669
        %v2256 = vmul.f32 %v2243, 0.17677669
        %v2257 = vmul.f32 %v2245, 0.17677669
        %v2258 = vmul.f32 %v2248, 0.17677669
        %v2259 = vmul.f32 %v2250, 0.17677669
        %v2260 = vsel %vm2169, %v2252, -inf
        %2261 = vmax.xlane.f32.xlu0 %v2260
        %v2262 = vpop.xlane.xlu0 %2261
        %v2263 = vsel %vm2169, %v2253, -inf
        %2264 = vmax.xlane.f32.xlu0 %v2263
        %v2265 = vpop.xlane.xlu0 %2264
        %v2266 = vsel %vm2169, %v2254, -inf
        %2267 = vmax.xlane.f32.xlu0 %v2266
        %v2268 = vpop.xlane.xlu0 %2267
        %v2269 = vsel %vm2169, %v2255, -inf
        %2270 = vmax.xlane.f32.xlu0 %v2269
        %v2271 = vpop.xlane.xlu0 %2270
        %v2272 = vsel %vm2169, %v2256, -inf
        %2273 = vmax.xlane.f32.xlu0 %v2272
        %v2274 = vpop.xlane.xlu0 %2273
        %v2275 = vsel %vm2169, %v2257, -inf
        %2276 = vmax.xlane.f32.xlu0 %v2275
        %v2277 = vpop.xlane.xlu0 %2276
        %v2278 = vsel %vm2169, %v2258, -inf
        %2279 = vmax.xlane.f32.xlu0 %v2278
        %v2280 = vpop.xlane.xlu0 %2279
        %v2281 = vsel %vm2169, %v2259, -inf
        %2282 = vmax.xlane.f32.xlu0 %v2281
        %v2283 = vpop.xlane.xlu0 %2282
        %v2284 = vsub.f32 %v2252, %v2262
        %v2285 = vsub.f32 %v2253, %v2265
        %v2286 = vsub.f32 %v2254, %v2268
        %v2287 = vsub.f32 %v2255, %v2271
        %v2288 = vsub.f32 %v2256, %v2274
        %v2289 = vsub.f32 %v2257, %v2277
        %v2290 = vsub.f32 %v2258, %v2280
        %v2291 = vsub.f32 %v2259, %v2283
        %v2292 = vmul.f32 %v2284, 1.442695
        %v2293 = vpow.pop %v2292
        %v2294 = vmul.f32 %v2285, 1.442695
        %v2295 = vpow.pop %v2294
        %v2296 = vmul.f32 %v2286, 1.442695
        %v2297 = vpow.pop %v2296
        %v2298 = vmul.f32 %v2287, 1.442695
        %v2299 = vpow.pop %v2298
        %v2300 = vmul.f32 %v2288, 1.442695
        %v2301 = vpow.pop %v2300
        %v2302 = vmul.f32 %v2289, 1.442695
        %v2303 = vpow.pop %v2302
        %v2304 = vmul.f32 %v2290, 1.442695
        %v2305 = vpow.pop %v2304
        %v2306 = vmul.f32 %v2291, 1.442695
        %v2307 = vpow.pop %v2306
        %v2308 = vsel %vm2169, %v2293, 0.0
        %2309 = vadd.xlane.f32.xlu0 %v2308
        %v2310 = vpop.xlane.xlu0 %2309
        %v2311 = vsel %vm2169, %v2295, 0.0
        %2312 = vadd.xlane.f32.xlu0 %v2311
        %v2313 = vpop.xlane.xlu0 %2312
        %v2314 = vsel %vm2169, %v2297, 0.0
        %2315 = vadd.xlane.f32.xlu0 %v2314
        %v2316 = vpop.xlane.xlu0 %2315
        %v2317 = vsel %vm2169, %v2299, 0.0
        %2318 = vadd.xlane.f32.xlu0 %v2317
        %v2319 = vpop.xlane.xlu0 %2318
        %v2320 = vsel %vm2169, %v2301, 0.0
        %2321 = vadd.xlane.f32.xlu0 %v2320
        %v2322 = vpop.xlane.xlu0 %2321
        %v2323 = vsel %vm2169, %v2303, 0.0
        %2324 = vadd.xlane.f32.xlu0 %v2323
        %v2325 = vpop.xlane.xlu0 %2324
        %v2326 = vsel %vm2169, %v2305, 0.0
        %2327 = vadd.xlane.f32.xlu0 %v2326
        %v2328 = vpop.xlane.xlu0 %2327
        %v2329 = vsel %vm2169, %v2307, 0.0
        %2330 = vadd.xlane.f32.xlu0 %v2329
        %v2331 = vpop.xlane.xlu0 %2330
        %v2332 = vrcp.pop %v2310
        %v2333 = vmul.f32 %v2310, %v2332
        %v2334 = vsub.f32 1.0, %v2333
        %v2335 = vmul.f32 %v2332, %v2334
        %v2336 = vadd.f32 %v2332, %v2335
        %vm2337 = vweird.f32 %v2310
        %vm2338 = vweird.f32 %v2332
        %vm2339 = vmor %vm2337, %vm2338
        %v2340 = vsel %vm2339, %v2332, %v2336
        %v2341 = vand.u32 2147483647, %v2310
        %vm2342 = vcmp.eq.f32.partialorder %v2341, 8.507059e+37
        %v2343 = vand.u32 %v2310, 2147483648
        %v2344 = vor.u32 1.1754944e-38, %v2343
        %v2345 = vsel %vm2342, %v2344, %v2340
        %v2346 = vmul.f32 %v2293, %v2345
        %v2347 = vrcp.pop %v2313
        %v2348 = vmul.f32 %v2313, %v2347
        %v2349 = vsub.f32 1.0, %v2348
        %v2350 = vmul.f32 %v2347, %v2349
        %v2351 = vadd.f32 %v2347, %v2350
        %vm2352 = vweird.f32 %v2313
        %vm2353 = vweird.f32 %v2347
        %vm2354 = vmor %vm2352, %vm2353
        %v2355 = vsel %vm2354, %v2347, %v2351
        %v2356 = vand.u32 2147483647, %v2313
        %vm2357 = vcmp.eq.f32.partialorder %v2356, 8.507059e+37
        %v2358 = vand.u32 %v2313, 2147483648
        %v2359 = vor.u32 1.1754944e-38, %v2358
        %v2360 = vsel %vm2357, %v2359, %v2355
        %v2361 = vmul.f32 %v2295, %v2360
        %v2362 = vrcp.pop %v2316
        %v2363 = vmul.f32 %v2316, %v2362
        %v2364 = vsub.f32 1.0, %v2363
        %v2365 = vmul.f32 %v2362, %v2364
        %v2366 = vadd.f32 %v2362, %v2365
        %vm2367 = vweird.f32 %v2316
        %vm2368 = vweird.f32 %v2362
        %vm2369 = vmor %vm2367, %vm2368
        %v2370 = vsel %vm2369, %v2362, %v2366
        %v2371 = vand.u32 2147483647, %v2316
        %vm2372 = vcmp.eq.f32.partialorder %v2371, 8.507059e+37
        %v2373 = vand.u32 %v2316, 2147483648
        %v2374 = vor.u32 1.1754944e-38, %v2373
        %v2375 = vsel %vm2372, %v2374, %v2370
        %v2376 = vmul.f32 %v2297, %v2375
        %v2377 = vrcp.pop %v2319
        %v2378 = vmul.f32 %v2319, %v2377
        %v2379 = vsub.f32 1.0, %v2378
        %v2380 = vmul.f32 %v2377, %v2379
        %v2381 = vadd.f32 %v2377, %v2380
        %vm2382 = vweird.f32 %v2319
        %vm2383 = vweird.f32 %v2377
        %vm2384 = vmor %vm2382, %vm2383
        %v2385 = vsel %vm2384, %v2377, %v2381
        %v2386 = vand.u32 2147483647, %v2319
        %vm2387 = vcmp.eq.f32.partialorder %v2386, 8.507059e+37
        %v2388 = vand.u32 %v2319, 2147483648
        %v2389 = vor.u32 1.1754944e-38, %v2388
        %v2390 = vsel %vm2387, %v2389, %v2385
        %v2391 = vmul.f32 %v2299, %v2390
        %v2392 = vrcp.pop %v2322
        %v2393 = vmul.f32 %v2322, %v2392
        %v2394 = vsub.f32 1.0, %v2393
        %v2395 = vmul.f32 %v2392, %v2394
        %v2396 = vadd.f32 %v2392, %v2395
        %vm2397 = vweird.f32 %v2322
        %vm2398 = vweird.f32 %v2392
        %vm2399 = vmor %vm2397, %vm2398
        %v2400 = vsel %vm2399, %v2392, %v2396
        %v2401 = vand.u32 2147483647, %v2322
        %vm2402 = vcmp.eq.f32.partialorder %v2401, 8.507059e+37
        %v2403 = vand.u32 %v2322, 2147483648
        %v2404 = vor.u32 1.1754944e-38, %v2403
        %v2405 = vsel %vm2402, %v2404, %v2400
        %v2406 = vmul.f32 %v2301, %v2405
        %v2407 = vrcp.pop %v2325
        %v2408 = vmul.f32 %v2325, %v2407
        %v2409 = vsub.f32 1.0, %v2408
        %v2410 = vmul.f32 %v2407, %v2409
        %v2411 = vadd.f32 %v2407, %v2410
        %vm2412 = vweird.f32 %v2325
        %vm2413 = vweird.f32 %v2407
        %vm2414 = vmor %vm2412, %vm2413
        %v2415 = vsel %vm2414, %v2407, %v2411
        %v2416 = vand.u32 2147483647, %v2325
        %vm2417 = vcmp.eq.f32.partialorder %v2416, 8.507059e+37
        %v2418 = vand.u32 %v2325, 2147483648
        %v2419 = vor.u32 1.1754944e-38, %v2418
        %v2420 = vsel %vm2417, %v2419, %v2415
        %v2421 = vmul.f32 %v2303, %v2420
        %v2422 = vrcp.pop %v2328
        %v2423 = vmul.f32 %v2328, %v2422
        %v2424 = vsub.f32 1.0, %v2423
        %v2425 = vmul.f32 %v2422, %v2424
        %v2426 = vadd.f32 %v2422, %v2425
        %vm2427 = vweird.f32 %v2328
        %vm2428 = vweird.f32 %v2422
        %vm2429 = vmor %vm2427, %vm2428
        %v2430 = vsel %vm2429, %v2422, %v2426
        %v2431 = vand.u32 2147483647, %v2328
        %vm2432 = vcmp.eq.f32.partialorder %v2431, 8.507059e+37
        %v2433 = vand.u32 %v2328, 2147483648
        %v2434 = vor.u32 1.1754944e-38, %v2433
        %v2435 = vsel %vm2432, %v2434, %v2430
        %v2436 = vmul.f32 %v2305, %v2435
        %v2437 = vrcp.pop %v2331
        %v2438 = vmul.f32 %v2331, %v2437
        %v2439 = vsub.f32 1.0, %v2438
        %v2440 = vmul.f32 %v2437, %v2439
        %v2441 = vadd.f32 %v2437, %v2440
        %vm2442 = vweird.f32 %v2331
        %vm2443 = vweird.f32 %v2437
        %vm2444 = vmor %vm2442, %vm2443
        %v2445 = vsel %vm2444, %v2437, %v2441
        %v2446 = vand.u32 2147483647, %v2331
        %vm2447 = vcmp.eq.f32.partialorder %v2446, 8.507059e+37
        %v2448 = vand.u32 %v2331, 2147483648
        %v2449 = vor.u32 1.1754944e-38, %v2448
        %v2450 = vsel %vm2447, %v2449, %v2445
        %v2451 = vmul.f32 %v2307, %v2450
        %v2452 = vpack.c.bf16 %v2346, %v2346
        %v2453 = vpack.c.bf16 %v2361, %v2361
        %v2454 = vpack.c.bf16 %v2376, %v2376
        %v2455 = vpack.c.bf16 %v2391, %v2391
        %v2456 = vpack.c.bf16 %v2406, %v2406
        %v2457 = vpack.c.bf16 %v2421, %v2421
        %v2458 = vpack.c.bf16 %v2436, %v2436
        %v2459 = vpack.c.bf16 %v2451, %v2451
        %v2464 = vunpack.c.l.b16 %v2452
        %v2465 = vunpack.c.l.b16 %v2453
        %v2466 = vunpack.c.l.b16 %v2454
        %v2467 = vunpack.c.l.b16 %v2455
        %v2468 = vpack.c.b16 %v2465, %v2464
        %v2469 = vpack.c.b16 %v2467, %v2466
        %v2474 = vunpack.c.l.b16 %v2141
        %v2475 = vunpack.c.l.b16 %v2142
        %v2476 = vunpack.c.l.b16 %v2143
        %v2477 = vunpack.c.l.b16 %v2144
        %v2478 = vpack.c.b16 %v2475, %v2474
        %v2479 = vpack.c.b16 %v2477, %v2476
        %v2483 = vsel %vm2169, %v2468, 0
        %v2486 = vsel %vm2169, %v2469, 0
        %2488 = vmatpush.bf16.msra.mxu0 0
        %2489 = vmatpush.bf16.msra.mxu0 0
        %2490 = vmatpush.bf16.msra.mxu0 0
        %2491 = vmatpush.bf16.msra.mxu0 0
        %2492 = vmatpush.bf16.msra.mxu0 0
        %2493 = vmatpush.bf16.msra.mxu0 0
        %2494 = vmatpush.bf16.msra.mxu0 %v2479
        %2495 = vmatpush.bf16.msra.mxu0 %v2478
        %2496 = vmatmul.bf16.gmra.mxu0 %v2483
        %v2497 = vpop.f32.mrf.mxu0
        %v2498 = vadd.f32 0.0, %v2497
        %v2499 = vpop.f32.mrf.mxu0
        %v2500 = vadd.f32 0.0, %v2499
        %2501 = vmatmul.bf16.gmra.mxu0 %v2486
        %v2502 = vpop.f32.mrf.mxu0
        %v2503 = vadd.f32 0.0, %v2502
        %v2504 = vpop.f32.mrf.mxu0
        %v2505 = vadd.f32 0.0, %v2504
        %2506 = vdwg.mxu0
        %v2511 = vunpack.c.l.b16 %v2456
        %v2512 = vunpack.c.l.b16 %v2457
        %v2513 = vunpack.c.l.b16 %v2458
        %v2514 = vunpack.c.l.b16 %v2459
        %v2515 = vpack.c.b16 %v2512, %v2511
        %v2516 = vpack.c.b16 %v2514, %v2513
        %v2521 = vunpack.c.l.b16 %v2145
        %v2522 = vunpack.c.l.b16 %v2146
        %v2523 = vunpack.c.l.b16 %v2147
        %v2524 = vunpack.c.l.b16 %v2148
        %v2525 = vpack.c.b16 %v2522, %v2521
        %v2526 = vpack.c.b16 %v2524, %v2523
        %v2530 = vsel %vm2169, %v2515, 0
        %v2533 = vsel %vm2169, %v2516, 0
        %2535 = vmatpush.bf16.msra.mxu0 0
        %2536 = vmatpush.bf16.msra.mxu0 0
        %2537 = vmatpush.bf16.msra.mxu0 0
        %2538 = vmatpush.bf16.msra.mxu0 0
        %2539 = vmatpush.bf16.msra.mxu0 0
        %2540 = vmatpush.bf16.msra.mxu0 0
        %2541 = vmatpush.bf16.msra.mxu0 %v2526
        %2542 = vmatpush.bf16.msra.mxu0 %v2525
        %2543 = vmatmul.bf16.gmra.mxu0 %v2530
        %v2544 = vpop.f32.mrf.mxu0
        %v2545 = vadd.f32 0.0, %v2544
        %v2546 = vpop.f32.mrf.mxu0
        %v2547 = vadd.f32 0.0, %v2546
        %2548 = vmatmul.bf16.gmra.mxu0 %v2533
        %v2549 = vpop.f32.mrf.mxu0
        %v2550 = vadd.f32 0.0, %v2549
        %v2551 = vpop.f32.mrf.mxu0
        %v2552 = vadd.f32 0.0, %v2551
        %2553 = vdwg.mxu0
        %v2554 = vpack.c.bf16 %v2500, %v2498
        %v2555 = vpack.c.bf16 %v2505, %v2503
        %v2556 = vpack.c.bf16 %v2547, %v2545
        %v2557 = vpack.c.bf16 %v2552, %v2550
        %2558 = vrot.lane.b32.xlu0 %v2157, 96
        %v2559 = vpop.permute.xlu0 %2558
        %2560 = vrot.lane.b32.xlu0 %v2158, 96
        %v2561 = vpop.permute.xlu0 %2560
        %2562 = vrot.lane.b32.xlu0 %v2167, 96
        %v2563 = vpop.permute.xlu0 %2562
        %2564 = vrot.lane.b32.xlu0 %v2168, 96
        %v2565 = vpop.permute.xlu0 %2564
        %v2567 = vsel %vm2169, %v2559, 0
        %v2570 = vsel %vm2169, %v2561, 0
        %v2573 = vsel %vm2169, %v2563, 0
        %v2576 = vsel %vm2169, %v2565, 0
        %2578 = vmatpush.bf16.xpose.msra.mxu0 0
        %2579 = vmatpush.bf16.xpose.msra.mxu0 0
        %2580 = vmatpush.bf16.xpose.msra.mxu0 0
        %2581 = vmatpush.bf16.xpose.msra.mxu0 0
        %2582 = vmatpush.bf16.xpose.msra.mxu0 0
        %2583 = vmatpush.bf16.xpose.msra.mxu0 0
        %2584 = vmatpush.bf16.xpose.msra.mxu0 %v2576
        %2585 = vmatpush.bf16.xpose.msra.mxu0 %v2573
        %2586 = vmatmul.bf16.gmra.mxu0 %v2567
        %v2587 = vpop.f32.mrf.mxu0
        %v2588 = vadd.f32 0.0, %v2587
        %v2589 = vpop.f32.mrf.mxu0
        %v2590 = vadd.f32 0.0, %v2589
        %2591 = vmatmul.bf16.gmra.mxu0 %v2570
        %v2592 = vpop.f32.mrf.mxu0
        %v2593 = vadd.f32 0.0, %v2592
        %v2594 = vpop.f32.mrf.mxu0
        %v2595 = vadd.f32 0.0, %v2594
        %2596 = vdwg.mxu0
        %2597 = vrot.lane.b32.xlu0 %v2209, 96
        %v2598 = vpop.permute.xlu0 %2597
        %2599 = vrot.lane.b32.xlu0 %v2210, 96
        %v2600 = vpop.permute.xlu0 %2599
        %2601 = vrot.lane.b32.xlu0 %v2219, 96
        %v2602 = vpop.permute.xlu0 %2601
        %2603 = vrot.lane.b32.xlu0 %v2220, 96
        %v2604 = vpop.permute.xlu0 %2603
        %v2606 = vsel %vm2169, %v2598, 0
        %v2609 = vsel %vm2169, %v2600, 0
        %v2612 = vsel %vm2169, %v2602, 0
        %v2615 = vsel %vm2169, %v2604, 0
        %2617 = vmatpush.bf16.xpose.msra.mxu0 0
        %2618 = vmatpush.bf16.xpose.msra.mxu0 0
        %2619 = vmatpush.bf16.xpose.msra.mxu0 0
        %2620 = vmatpush.bf16.xpose.msra.mxu0 0
        %2621 = vmatpush.bf16.xpose.msra.mxu0 0
        %2622 = vmatpush.bf16.xpose.msra.mxu0 0
        %2623 = vmatpush.bf16.xpose.msra.mxu0 %v2615
        %2624 = vmatpush.bf16.xpose.msra.mxu0 %v2612
        %2625 = vmatmul.bf16.gmra.mxu0 %v2606
        %v2626 = vpop.f32.mrf.mxu0
        %v2627 = vadd.f32 0.0, %v2626
        %v2628 = vpop.f32.mrf.mxu0
        %v2629 = vadd.f32 0.0, %v2628
        %2630 = vmatmul.bf16.gmra.mxu0 %v2609
        %v2631 = vpop.f32.mrf.mxu0
        %v2632 = vadd.f32 0.0, %v2631
        %v2633 = vpop.f32.mrf.mxu0
        %v2634 = vadd.f32 0.0, %v2633
        %2635 = vdwg.mxu0
        %v2636 = vmul.f32 %v2588, 0.17677669
        %v2637 = vmul.f32 %v2590, 0.17677669
        %v2638 = vmul.f32 %v2593, 0.17677669
        %v2639 = vmul.f32 %v2595, 0.17677669
        %v2640 = vmul.f32 %v2627, 0.17677669
        %v2641 = vmul.f32 %v2629, 0.17677669
        %v2642 = vmul.f32 %v2632, 0.17677669
        %v2643 = vmul.f32 %v2634, 0.17677669
        %v2644 = vsel %vm2169, %v2636, -inf
        %2645 = vmax.xlane.f32.xlu0 %v2644
        %v2646 = vpop.xlane.xlu0 %2645
        %v2647 = vsel %vm2169, %v2637, -inf
        %2648 = vmax.xlane.f32.xlu0 %v2647
        %v2649 = vpop.xlane.xlu0 %2648
        %v2650 = vsel %vm2169, %v2638, -inf
        %2651 = vmax.xlane.f32.xlu0 %v2650
        %v2652 = vpop.xlane.xlu0 %2651
        %v2653 = vsel %vm2169, %v2639, -inf
        %2654 = vmax.xlane.f32.xlu0 %v2653
        %v2655 = vpop.xlane.xlu0 %2654
        %v2656 = vsel %vm2169, %v2640, -inf
        %2657 = vmax.xlane.f32.xlu0 %v2656
        %v2658 = vpop.xlane.xlu0 %2657
        %v2659 = vsel %vm2169, %v2641, -inf
        %2660 = vmax.xlane.f32.xlu0 %v2659
        %v2661 = vpop.xlane.xlu0 %2660
        %v2662 = vsel %vm2169, %v2642, -inf
        %2663 = vmax.xlane.f32.xlu0 %v2662
        %v2664 = vpop.xlane.xlu0 %2663
        %v2665 = vsel %vm2169, %v2643, -inf
        %2666 = vmax.xlane.f32.xlu0 %v2665
        %v2667 = vpop.xlane.xlu0 %2666
        %v2668 = vsub.f32 %v2636, %v2646
        %v2669 = vsub.f32 %v2637, %v2649
        %v2670 = vsub.f32 %v2638, %v2652
        %v2671 = vsub.f32 %v2639, %v2655
        %v2672 = vsub.f32 %v2640, %v2658
        %v2673 = vsub.f32 %v2641, %v2661
        %v2674 = vsub.f32 %v2642, %v2664
        %v2675 = vsub.f32 %v2643, %v2667
        %v2676 = vmul.f32 %v2668, 1.442695
        %v2677 = vpow.pop %v2676
        %v2678 = vmul.f32 %v2669, 1.442695
        %v2679 = vpow.pop %v2678
        %v2680 = vmul.f32 %v2670, 1.442695
        %v2681 = vpow.pop %v2680
        %v2682 = vmul.f32 %v2671, 1.442695
        %v2683 = vpow.pop %v2682
        %v2684 = vmul.f32 %v2672, 1.442695
        %v2685 = vpow.pop %v2684
        %v2686 = vmul.f32 %v2673, 1.442695
        %v2687 = vpow.pop %v2686
        %v2688 = vmul.f32 %v2674, 1.442695
        %v2689 = vpow.pop %v2688
        %v2690 = vmul.f32 %v2675, 1.442695
        %v2691 = vpow.pop %v2690
        %v2692 = vsel %vm2169, %v2677, 0.0
        %2693 = vadd.xlane.f32.xlu0 %v2692
        %v2694 = vpop.xlane.xlu0 %2693
        %v2695 = vsel %vm2169, %v2679, 0.0
        %2696 = vadd.xlane.f32.xlu0 %v2695
        %v2697 = vpop.xlane.xlu0 %2696
        %v2698 = vsel %vm2169, %v2681, 0.0
        %2699 = vadd.xlane.f32.xlu0 %v2698
        %v2700 = vpop.xlane.xlu0 %2699
        %v2701 = vsel %vm2169, %v2683, 0.0
        %2702 = vadd.xlane.f32.xlu0 %v2701
        %v2703 = vpop.xlane.xlu0 %2702
        %v2704 = vsel %vm2169, %v2685, 0.0
        %2705 = vadd.xlane.f32.xlu0 %v2704
        %v2706 = vpop.xlane.xlu0 %2705
        %v2707 = vsel %vm2169, %v2687, 0.0
        %2708 = vadd.xlane.f32.xlu0 %v2707
        %v2709 = vpop.xlane.xlu0 %2708
        %v2710 = vsel %vm2169, %v2689, 0.0
        %2711 = vadd.xlane.f32.xlu0 %v2710
        %v2712 = vpop.xlane.xlu0 %2711
        %v2713 = vsel %vm2169, %v2691, 0.0
        %2714 = vadd.xlane.f32.xlu0 %v2713
        %v2715 = vpop.xlane.xlu0 %2714
        %v2716 = vrcp.pop %v2694
        %v2717 = vmul.f32 %v2694, %v2716
        %v2718 = vsub.f32 1.0, %v2717
        %v2719 = vmul.f32 %v2716, %v2718
        %v2720 = vadd.f32 %v2716, %v2719
        %vm2721 = vweird.f32 %v2694
        %vm2722 = vweird.f32 %v2716
        %vm2723 = vmor %vm2721, %vm2722
        %v2724 = vsel %vm2723, %v2716, %v2720
        %v2725 = vand.u32 2147483647, %v2694
        %vm2726 = vcmp.eq.f32.partialorder %v2725, 8.507059e+37
        %v2727 = vand.u32 %v2694, 2147483648
        %v2728 = vor.u32 1.1754944e-38, %v2727
        %v2729 = vsel %vm2726, %v2728, %v2724
        %v2730 = vmul.f32 %v2677, %v2729
        %v2731 = vrcp.pop %v2697
        %v2732 = vmul.f32 %v2697, %v2731
        %v2733 = vsub.f32 1.0, %v2732
        %v2734 = vmul.f32 %v2731, %v2733
        %v2735 = vadd.f32 %v2731, %v2734
        %vm2736 = vweird.f32 %v2697
        %vm2737 = vweird.f32 %v2731
        %vm2738 = vmor %vm2736, %vm2737
        %v2739 = vsel %vm2738, %v2731, %v2735
        %v2740 = vand.u32 2147483647, %v2697
        %vm2741 = vcmp.eq.f32.partialorder %v2740, 8.507059e+37
        %v2742 = vand.u32 %v2697, 2147483648
        %v2743 = vor.u32 1.1754944e-38, %v2742
        %v2744 = vsel %vm2741, %v2743, %v2739
        %v2745 = vmul.f32 %v2679, %v2744
        %v2746 = vrcp.pop %v2700
        %v2747 = vmul.f32 %v2700, %v2746
        %v2748 = vsub.f32 1.0, %v2747
        %v2749 = vmul.f32 %v2746, %v2748
        %v2750 = vadd.f32 %v2746, %v2749
        %vm2751 = vweird.f32 %v2700
        %vm2752 = vweird.f32 %v2746
        %vm2753 = vmor %vm2751, %vm2752
        %v2754 = vsel %vm2753, %v2746, %v2750
        %v2755 = vand.u32 2147483647, %v2700
        %vm2756 = vcmp.eq.f32.partialorder %v2755, 8.507059e+37
        %v2757 = vand.u32 %v2700, 2147483648
        %v2758 = vor.u32 1.1754944e-38, %v2757
        %v2759 = vsel %vm2756, %v2758, %v2754
        %v2760 = vmul.f32 %v2681, %v2759
        %v2761 = vrcp.pop %v2703
        %v2762 = vmul.f32 %v2703, %v2761
        %v2763 = vsub.f32 1.0, %v2762
        %v2764 = vmul.f32 %v2761, %v2763
        %v2765 = vadd.f32 %v2761, %v2764
        %vm2766 = vweird.f32 %v2703
        %vm2767 = vweird.f32 %v2761
        %vm2768 = vmor %vm2766, %vm2767
        %v2769 = vsel %vm2768, %v2761, %v2765
        %v2770 = vand.u32 2147483647, %v2703
        %vm2771 = vcmp.eq.f32.partialorder %v2770, 8.507059e+37
        %v2772 = vand.u32 %v2703, 2147483648
        %v2773 = vor.u32 1.1754944e-38, %v2772
        %v2774 = vsel %vm2771, %v2773, %v2769
        %v2775 = vmul.f32 %v2683, %v2774
        %v2776 = vrcp.pop %v2706
        %v2777 = vmul.f32 %v2706, %v2776
        %v2778 = vsub.f32 1.0, %v2777
        %v2779 = vmul.f32 %v2776, %v2778
        %v2780 = vadd.f32 %v2776, %v2779
        %vm2781 = vweird.f32 %v2706
        %vm2782 = vweird.f32 %v2776
        %vm2783 = vmor %vm2781, %vm2782
        %v2784 = vsel %vm2783, %v2776, %v2780
        %v2785 = vand.u32 2147483647, %v2706
        %vm2786 = vcmp.eq.f32.partialorder %v2785, 8.507059e+37
        %v2787 = vand.u32 %v2706, 2147483648
        %v2788 = vor.u32 1.1754944e-38, %v2787
        %v2789 = vsel %vm2786, %v2788, %v2784
        %v2790 = vmul.f32 %v2685, %v2789
        %v2791 = vrcp.pop %v2709
        %v2792 = vmul.f32 %v2709, %v2791
        %v2793 = vsub.f32 1.0, %v2792
        %v2794 = vmul.f32 %v2791, %v2793
        %v2795 = vadd.f32 %v2791, %v2794
        %vm2796 = vweird.f32 %v2709
        %vm2797 = vweird.f32 %v2791
        %vm2798 = vmor %vm2796, %vm2797
        %v2799 = vsel %vm2798, %v2791, %v2795
        %v2800 = vand.u32 2147483647, %v2709
        %vm2801 = vcmp.eq.f32.partialorder %v2800, 8.507059e+37
        %v2802 = vand.u32 %v2709, 2147483648
        %v2803 = vor.u32 1.1754944e-38, %v2802
        %v2804 = vsel %vm2801, %v2803, %v2799
        %v2805 = vmul.f32 %v2687, %v2804
        %v2806 = vrcp.pop %v2712
        %v2807 = vmul.f32 %v2712, %v2806
        %v2808 = vsub.f32 1.0, %v2807
        %v2809 = vmul.f32 %v2806, %v2808
        %v2810 = vadd.f32 %v2806, %v2809
        %vm2811 = vweird.f32 %v2712
        %vm2812 = vweird.f32 %v2806
        %vm2813 = vmor %vm2811, %vm2812
        %v2814 = vsel %vm2813, %v2806, %v2810
        %v2815 = vand.u32 2147483647, %v2712
        %vm2816 = vcmp.eq.f32.partialorder %v2815, 8.507059e+37
        %v2817 = vand.u32 %v2712, 2147483648
        %v2818 = vor.u32 1.1754944e-38, %v2817
        %v2819 = vsel %vm2816, %v2818, %v2814
        %v2820 = vmul.f32 %v2689, %v2819
        %v2821 = vrcp.pop %v2715
        %v2822 = vmul.f32 %v2715, %v2821
        %v2823 = vsub.f32 1.0, %v2822
        %v2824 = vmul.f32 %v2821, %v2823
        %v2825 = vadd.f32 %v2821, %v2824
        %vm2826 = vweird.f32 %v2715
        %vm2827 = vweird.f32 %v2821
        %vm2828 = vmor %vm2826, %vm2827
        %v2829 = vsel %vm2828, %v2821, %v2825
        %v2830 = vand.u32 2147483647, %v2715
        %vm2831 = vcmp.eq.f32.partialorder %v2830, 8.507059e+37
        %v2832 = vand.u32 %v2715, 2147483648
        %v2833 = vor.u32 1.1754944e-38, %v2832
        %v2834 = vsel %vm2831, %v2833, %v2829
        %v2835 = vmul.f32 %v2691, %v2834
        %v2836 = vpack.c.bf16 %v2730, %v2730
        %v2837 = vpack.c.bf16 %v2745, %v2745
        %v2838 = vpack.c.bf16 %v2760, %v2760
        %v2839 = vpack.c.bf16 %v2775, %v2775
        %v2840 = vpack.c.bf16 %v2790, %v2790
        %v2841 = vpack.c.bf16 %v2805, %v2805
        %v2842 = vpack.c.bf16 %v2820, %v2820
        %v2843 = vpack.c.bf16 %v2835, %v2835
        %v2848 = vunpack.c.l.b16 %v2836
        %v2849 = vunpack.c.l.b16 %v2837
        %v2850 = vunpack.c.l.b16 %v2838
        %v2851 = vunpack.c.l.b16 %v2839
        %v2852 = vpack.c.b16 %v2849, %v2848
        %v2853 = vpack.c.b16 %v2851, %v2850
        %2854 = vrot.lane.b32.xlu0 %v2478, 96
        %v2855 = vpop.permute.xlu0 %2854
        %2856 = vrot.lane.b32.xlu0 %v2479, 96
        %v2857 = vpop.permute.xlu0 %2856
        %v2861 = vsel %vm2169, %v2852, 0
        %v2864 = vsel %vm2169, %v2853, 0
        %2866 = vmatpush.bf16.msra.mxu0 0
        %2867 = vmatpush.bf16.msra.mxu0 0
        %2868 = vmatpush.bf16.msra.mxu0 0
        %2869 = vmatpush.bf16.msra.mxu0 0
        %2870 = vmatpush.bf16.msra.mxu0 0
        %2871 = vmatpush.bf16.msra.mxu0 0
        %2872 = vmatpush.bf16.msra.mxu0 %v2857
        %2873 = vmatpush.bf16.msra.mxu0 %v2855
        %2874 = vmatmul.bf16.gmra.mxu0 %v2861
        %v2875 = vpop.f32.mrf.mxu0
        %v2876 = vadd.f32 0.0, %v2875
        %v2877 = vpop.f32.mrf.mxu0
        %v2878 = vadd.f32 0.0, %v2877
        %2879 = vmatmul.bf16.gmra.mxu0 %v2864
        %v2880 = vpop.f32.mrf.mxu0
        %v2881 = vadd.f32 0.0, %v2880
        %v2882 = vpop.f32.mrf.mxu0
        %v2883 = vadd.f32 0.0, %v2882
        %2884 = vdwg.mxu0
        %v2889 = vunpack.c.l.b16 %v2840
        %v2890 = vunpack.c.l.b16 %v2841
        %v2891 = vunpack.c.l.b16 %v2842
        %v2892 = vunpack.c.l.b16 %v2843
        %v2893 = vpack.c.b16 %v2890, %v2889
        %v2894 = vpack.c.b16 %v2892, %v2891
        %2895 = vrot.lane.b32.xlu0 %v2525, 96
        %v2896 = vpop.permute.xlu0 %2895
        %2897 = vrot.lane.b32.xlu0 %v2526, 96
        %v2898 = vpop.permute.xlu0 %2897
        %v2902 = vsel %vm2169, %v2893, 0
        %v2905 = vsel %vm2169, %v2894, 0
        %2907 = vmatpush.bf16.msra.mxu0 0
        %2908 = vmatpush.bf16.msra.mxu0 0
        %2909 = vmatpush.bf16.msra.mxu0 0
        %2910 = vmatpush.bf16.msra.mxu0 0
        %2911 = vmatpush.bf16.msra.mxu0 0
        %2912 = vmatpush.bf16.msra.mxu0 0
        %2913 = vmatpush.bf16.msra.mxu0 %v2898
        %2914 = vmatpush.bf16.msra.mxu0 %v2896
        %2915 = vmatmul.bf16.gmra.mxu0 %v2902
        %v2916 = vpop.f32.mrf.mxu0
        %v2917 = vadd.f32 0.0, %v2916
        %v2918 = vpop.f32.mrf.mxu0
        %v2919 = vadd.f32 0.0, %v2918
        %2920 = vmatmul.bf16.gmra.mxu0 %v2905
        %v2921 = vpop.f32.mrf.mxu0
        %v2922 = vadd.f32 0.0, %v2921
        %v2923 = vpop.f32.mrf.mxu0
        %v2924 = vadd.f32 0.0, %v2923
        %2925 = vdwg.mxu0
        %v2926 = vpack.c.bf16 %v2878, %v2876
        %v2927 = vpack.c.bf16 %v2883, %v2881
        %v2928 = vpack.c.bf16 %v2919, %v2917
        %v2929 = vpack.c.bf16 %v2924, %v2922
        %v2934 = vunpack.c.l.b16 %v2113
        %v2935 = vunpack.c.l.b16 %v2114
        %v2936 = vunpack.c.l.b16 %v2115
        %v2937 = vunpack.c.l.b16 %v2116
        %v2938 = vpack.c.b16 %v2935, %v2934
        %v2939 = vpack.c.b16 %v2937, %v2936
        %v2943 = vsel %vm2169, %v2926, 0
        %v2946 = vsel %vm2169, %v2927, 0
        %v2949 = vsel %vm2169, %v2928, 0
        %v2952 = vsel %vm2169, %v2929, 0
        %2954 = vmatpush.bf16.msra.mxu0 0
        %2955 = vmatpush.bf16.msra.mxu0 0
        %2956 = vmatpush.bf16.msra.mxu0 0
        %2957 = vmatpush.bf16.msra.mxu0 0
        %2958 = vmatpush.bf16.msra.mxu0 0
        %2959 = vmatpush.bf16.msra.mxu0 0
        %2960 = vmatpush.bf16.msra.mxu0 %v2939
        %2961 = vmatpush.bf16.msra.mxu0 %v2938
        %2962 = vmatmul.bf16.gmra.mxu0 %v2943
        %v2963 = vpop.f32.mrf.mxu0
        %v2964 = vadd.f32 0.0, %v2963
        %v2965 = vpop.f32.mrf.mxu0
        %v2966 = vadd.f32 0.0, %v2965
        %2967 = vmatmul.bf16.gmra.mxu0 %v2946
        %v2968 = vpop.f32.mrf.mxu0
        %v2969 = vadd.f32 0.0, %v2968
        %v2970 = vpop.f32.mrf.mxu0
        %v2971 = vadd.f32 0.0, %v2970
        %2972 = vmatmul.bf16.gmra.mxu0 %v2949
        %v2973 = vpop.f32.mrf.mxu0
        %v2974 = vadd.f32 0.0, %v2973
        %v2975 = vpop.f32.mrf.mxu0
        %v2976 = vadd.f32 0.0, %v2975
        %2977 = vmatmul.bf16.gmra.mxu0 %v2952
        %v2978 = vpop.f32.mrf.mxu0
        %v2979 = vadd.f32 0.0, %v2978
        %v2980 = vpop.f32.mrf.mxu0
        %v2981 = vadd.f32 0.0, %v2980
        %2982 = vdwg.mxu0
        %v2987 = vunpack.c.l.b16 %v2109
        %v2988 = vunpack.c.l.b16 %v2110
        %v2989 = vunpack.c.l.b16 %v2111
        %v2990 = vunpack.c.l.b16 %v2112
        %v2991 = vpack.c.b16 %v2988, %v2987
        %v2992 = vpack.c.b16 %v2990, %v2989
        %v2996 = vsel %vm2169, %v2554, 0
        %v2999 = vsel %vm2169, %v2555, 0
        %v3002 = vsel %vm2169, %v2556, 0
        %v3005 = vsel %vm2169, %v2557, 0
        %3007 = vmatpush.bf16.msra.mxu0 0
        %3008 = vmatpush.bf16.msra.mxu0 0
        %3009 = vmatpush.bf16.msra.mxu0 0
        %3010 = vmatpush.bf16.msra.mxu0 0
        %3011 = vmatpush.bf16.msra.mxu0 0
        %3012 = vmatpush.bf16.msra.mxu0 0
        %3013 = vmatpush.bf16.msra.mxu0 %v2992
        %3014 = vmatpush.bf16.msra.mxu0 %v2991
        %3015 = vmatmul.bf16.gmra.mxu0 %v2996
        %v3016 = vpop.f32.mrf.mxu0
        %v3017 = vadd.f32 %v2964, %v3016
        %v3018 = vpop.f32.mrf.mxu0
        %v3019 = vadd.f32 %v2966, %v3018
        %3020 = vmatmul.bf16.gmra.mxu0 %v2999
        %v3021 = vpop.f32.mrf.mxu0
        %v3022 = vadd.f32 %v2969, %v3021
        %v3023 = vpop.f32.mrf.mxu0
        %v3024 = vadd.f32 %v2971, %v3023
        %3025 = vmatmul.bf16.gmra.mxu0 %v3002
        %v3026 = vpop.f32.mrf.mxu0
        %v3027 = vadd.f32 %v2974, %v3026
        %v3028 = vpop.f32.mrf.mxu0
        %v3029 = vadd.f32 %v2976, %v3028
        %3030 = vmatmul.bf16.gmra.mxu0 %v3005
        %v3031 = vpop.f32.mrf.mxu0
        %v3032 = vadd.f32 %v2979, %v3031
        %v3033 = vpop.f32.mrf.mxu0
        %v3034 = vadd.f32 %v2981, %v3033
        %3035 = vdwg.mxu0
        %3036 = vrot.lane.b32.xlu0 %v2157, 64
        %v3037 = vpop.permute.xlu0 %3036
        %3038 = vrot.lane.b32.xlu0 %v2158, 64
        %v3039 = vpop.permute.xlu0 %3038
        %3040 = vrot.lane.b32.xlu0 %v2167, 64
        %v3041 = vpop.permute.xlu0 %3040
        %3042 = vrot.lane.b32.xlu0 %v2168, 64
        %v3043 = vpop.permute.xlu0 %3042
        %v3045 = vsel %vm2169, %v3037, 0
        %v3048 = vsel %vm2169, %v3039, 0
        %v3051 = vsel %vm2169, %v3041, 0
        %v3054 = vsel %vm2169, %v3043, 0
        %3056 = vmatpush.bf16.xpose.msra.mxu0 0
        %3057 = vmatpush.bf16.xpose.msra.mxu0 0
        %3058 = vmatpush.bf16.xpose.msra.mxu0 0
        %3059 = vmatpush.bf16.xpose.msra.mxu0 0
        %3060 = vmatpush.bf16.xpose.msra.mxu0 0
        %3061 = vmatpush.bf16.xpose.msra.mxu0 0
        %3062 = vmatpush.bf16.xpose.msra.mxu0 %v3054
        %3063 = vmatpush.bf16.xpose.msra.mxu0 %v3051
        %3064 = vmatmul.bf16.gmra.mxu0 %v3045
        %v3065 = vpop.f32.mrf.mxu0
        %v3066 = vadd.f32 0.0, %v3065
        %v3067 = vpop.f32.mrf.mxu0
        %v3068 = vadd.f32 0.0, %v3067
        %3069 = vmatmul.bf16.gmra.mxu0 %v3048
        %v3070 = vpop.f32.mrf.mxu0
        %v3071 = vadd.f32 0.0, %v3070
        %v3072 = vpop.f32.mrf.mxu0
        %v3073 = vadd.f32 0.0, %v3072
        %3074 = vdwg.mxu0
        %3075 = vrot.lane.b32.xlu0 %v2209, 64
        %v3076 = vpop.permute.xlu0 %3075
        %3077 = vrot.lane.b32.xlu0 %v2210, 64
        %v3078 = vpop.permute.xlu0 %3077
        %3079 = vrot.lane.b32.xlu0 %v2219, 64
        %v3080 = vpop.permute.xlu0 %3079
        %3081 = vrot.lane.b32.xlu0 %v2220, 64
        %v3082 = vpop.permute.xlu0 %3081
        %v3084 = vsel %vm2169, %v3076, 0
        %v3087 = vsel %vm2169, %v3078, 0
        %v3090 = vsel %vm2169, %v3080, 0
        %v3093 = vsel %vm2169, %v3082, 0
        %3095 = vmatpush.bf16.xpose.msra.mxu0 0
        %3096 = vmatpush.bf16.xpose.msra.mxu0 0
        %3097 = vmatpush.bf16.xpose.msra.mxu0 0
        %3098 = vmatpush.bf16.xpose.msra.mxu0 0
        %3099 = vmatpush.bf16.xpose.msra.mxu0 0
        %3100 = vmatpush.bf16.xpose.msra.mxu0 0
        %3101 = vmatpush.bf16.xpose.msra.mxu0 %v3093
        %3102 = vmatpush.bf16.xpose.msra.mxu0 %v3090
        %3103 = vmatmul.bf16.gmra.mxu0 %v3084
        %v3104 = vpop.f32.mrf.mxu0
        %v3105 = vadd.f32 0.0, %v3104
        %v3106 = vpop.f32.mrf.mxu0
        %v3107 = vadd.f32 0.0, %v3106
        %3108 = vmatmul.bf16.gmra.mxu0 %v3087
        %v3109 = vpop.f32.mrf.mxu0
        %v3110 = vadd.f32 0.0, %v3109
        %v3111 = vpop.f32.mrf.mxu0
        %v3112 = vadd.f32 0.0, %v3111
        %3113 = vdwg.mxu0
        %v3114 = vmul.f32 %v3066, 0.17677669
        %v3115 = vmul.f32 %v3068, 0.17677669
        %v3116 = vmul.f32 %v3071, 0.17677669
        %v3117 = vmul.f32 %v3073, 0.17677669
        %v3118 = vmul.f32 %v3105, 0.17677669
        %v3119 = vmul.f32 %v3107, 0.17677669
        %v3120 = vmul.f32 %v3110, 0.17677669
        %v3121 = vmul.f32 %v3112, 0.17677669
        %v3122 = vsel %vm2169, %v3114, -inf
        %3123 = vmax.xlane.f32.xlu0 %v3122
        %v3124 = vpop.xlane.xlu0 %3123
        %v3125 = vsel %vm2169, %v3115, -inf
        %3126 = vmax.xlane.f32.xlu0 %v3125
        %v3127 = vpop.xlane.xlu0 %3126
        %v3128 = vsel %vm2169, %v3116, -inf
        %3129 = vmax.xlane.f32.xlu0 %v3128
        %v3130 = vpop.xlane.xlu0 %3129
        %v3131 = vsel %vm2169, %v3117, -inf
        %3132 = vmax.xlane.f32.xlu0 %v3131
        %v3133 = vpop.xlane.xlu0 %3132
        %v3134 = vsel %vm2169, %v3118, -inf
        %3135 = vmax.xlane.f32.xlu0 %v3134
        %v3136 = vpop.xlane.xlu0 %3135
        %v3137 = vsel %vm2169, %v3119, -inf
        %3138 = vmax.xlane.f32.xlu0 %v3137
        %v3139 = vpop.xlane.xlu0 %3138
        %v3140 = vsel %vm2169, %v3120, -inf
        %3141 = vmax.xlane.f32.xlu0 %v3140
        %v3142 = vpop.xlane.xlu0 %3141
        %v3143 = vsel %vm2169, %v3121, -inf
        %3144 = vmax.xlane.f32.xlu0 %v3143
        %v3145 = vpop.xlane.xlu0 %3144
        %v3146 = vsub.f32 %v3114, %v3124
        %v3147 = vsub.f32 %v3115, %v3127
        %v3148 = vsub.f32 %v3116, %v3130
        %v3149 = vsub.f32 %v3117, %v3133
        %v3150 = vsub.f32 %v3118, %v3136
        %v3151 = vsub.f32 %v3119, %v3139
        %v3152 = vsub.f32 %v3120, %v3142
        %v3153 = vsub.f32 %v3121, %v3145
        %v3154 = vmul.f32 %v3146, 1.442695
        %v3155 = vpow.pop %v3154
        %v3156 = vmul.f32 %v3147, 1.442695
        %v3157 = vpow.pop %v3156
        %v3158 = vmul.f32 %v3148, 1.442695
        %v3159 = vpow.pop %v3158
        %v3160 = vmul.f32 %v3149, 1.442695
        %v3161 = vpow.pop %v3160
        %v3162 = vmul.f32 %v3150, 1.442695
        %v3163 = vpow.pop %v3162
        %v3164 = vmul.f32 %v3151, 1.442695
        %v3165 = vpow.pop %v3164
        %v3166 = vmul.f32 %v3152, 1.442695
        %v3167 = vpow.pop %v3166
        %v3168 = vmul.f32 %v3153, 1.442695
        %v3169 = vpow.pop %v3168
        %v3170 = vsel %vm2169, %v3155, 0.0
        %3171 = vadd.xlane.f32.xlu0 %v3170
        %v3172 = vpop.xlane.xlu0 %3171
        %v3173 = vsel %vm2169, %v3157, 0.0
        %3174 = vadd.xlane.f32.xlu0 %v3173
        %v3175 = vpop.xlane.xlu0 %3174
        %v3176 = vsel %vm2169, %v3159, 0.0
        %3177 = vadd.xlane.f32.xlu0 %v3176
        %v3178 = vpop.xlane.xlu0 %3177
        %v3179 = vsel %vm2169, %v3161, 0.0
        %3180 = vadd.xlane.f32.xlu0 %v3179
        %v3181 = vpop.xlane.xlu0 %3180
        %v3182 = vsel %vm2169, %v3163, 0.0
        %3183 = vadd.xlane.f32.xlu0 %v3182
        %v3184 = vpop.xlane.xlu0 %3183
        %v3185 = vsel %vm2169, %v3165, 0.0
        %3186 = vadd.xlane.f32.xlu0 %v3185
        %v3187 = vpop.xlane.xlu0 %3186
        %v3188 = vsel %vm2169, %v3167, 0.0
        %3189 = vadd.xlane.f32.xlu0 %v3188
        %v3190 = vpop.xlane.xlu0 %3189
        %v3191 = vsel %vm2169, %v3169, 0.0
        %3192 = vadd.xlane.f32.xlu0 %v3191
        %v3193 = vpop.xlane.xlu0 %3192
        %v3194 = vrcp.pop %v3172
        %v3195 = vmul.f32 %v3172, %v3194
        %v3196 = vsub.f32 1.0, %v3195
        %v3197 = vmul.f32 %v3194, %v3196
        %v3198 = vadd.f32 %v3194, %v3197
        %vm3199 = vweird.f32 %v3172
        %vm3200 = vweird.f32 %v3194
        %vm3201 = vmor %vm3199, %vm3200
        %v3202 = vsel %vm3201, %v3194, %v3198
        %v3203 = vand.u32 2147483647, %v3172
        %vm3204 = vcmp.eq.f32.partialorder %v3203, 8.507059e+37
        %v3205 = vand.u32 %v3172, 2147483648
        %v3206 = vor.u32 1.1754944e-38, %v3205
        %v3207 = vsel %vm3204, %v3206, %v3202
        %v3208 = vmul.f32 %v3155, %v3207
        %v3209 = vrcp.pop %v3175
        %v3210 = vmul.f32 %v3175, %v3209
        %v3211 = vsub.f32 1.0, %v3210
        %v3212 = vmul.f32 %v3209, %v3211
        %v3213 = vadd.f32 %v3209, %v3212
        %vm3214 = vweird.f32 %v3175
        %vm3215 = vweird.f32 %v3209
        %vm3216 = vmor %vm3214, %vm3215
        %v3217 = vsel %vm3216, %v3209, %v3213
        %v3218 = vand.u32 2147483647, %v3175
        %vm3219 = vcmp.eq.f32.partialorder %v3218, 8.507059e+37
        %v3220 = vand.u32 %v3175, 2147483648
        %v3221 = vor.u32 1.1754944e-38, %v3220
        %v3222 = vsel %vm3219, %v3221, %v3217
        %v3223 = vmul.f32 %v3157, %v3222
        %v3224 = vrcp.pop %v3178
        %v3225 = vmul.f32 %v3178, %v3224
        %v3226 = vsub.f32 1.0, %v3225
        %v3227 = vmul.f32 %v3224, %v3226
        %v3228 = vadd.f32 %v3224, %v3227
        %vm3229 = vweird.f32 %v3178
        %vm3230 = vweird.f32 %v3224
        %vm3231 = vmor %vm3229, %vm3230
        %v3232 = vsel %vm3231, %v3224, %v3228
        %v3233 = vand.u32 2147483647, %v3178
        %vm3234 = vcmp.eq.f32.partialorder %v3233, 8.507059e+37
        %v3235 = vand.u32 %v3178, 2147483648
        %v3236 = vor.u32 1.1754944e-38, %v3235
        %v3237 = vsel %vm3234, %v3236, %v3232
        %v3238 = vmul.f32 %v3159, %v3237
        %v3239 = vrcp.pop %v3181
        %v3240 = vmul.f32 %v3181, %v3239
        %v3241 = vsub.f32 1.0, %v3240
        %v3242 = vmul.f32 %v3239, %v3241
        %v3243 = vadd.f32 %v3239, %v3242
        %vm3244 = vweird.f32 %v3181
        %vm3245 = vweird.f32 %v3239
        %vm3246 = vmor %vm3244, %vm3245
        %v3247 = vsel %vm3246, %v3239, %v3243
        %v3248 = vand.u32 2147483647, %v3181
        %vm3249 = vcmp.eq.f32.partialorder %v3248, 8.507059e+37
        %v3250 = vand.u32 %v3181, 2147483648
        %v3251 = vor.u32 1.1754944e-38, %v3250
        %v3252 = vsel %vm3249, %v3251, %v3247
        %v3253 = vmul.f32 %v3161, %v3252
        %v3254 = vrcp.pop %v3184
        %v3255 = vmul.f32 %v3184, %v3254
        %v3256 = vsub.f32 1.0, %v3255
        %v3257 = vmul.f32 %v3254, %v3256
        %v3258 = vadd.f32 %v3254, %v3257
        %vm3259 = vweird.f32 %v3184
        %vm3260 = vweird.f32 %v3254
        %vm3261 = vmor %vm3259, %vm3260
        %v3262 = vsel %vm3261, %v3254, %v3258
        %v3263 = vand.u32 2147483647, %v3184
        %vm3264 = vcmp.eq.f32.partialorder %v3263, 8.507059e+37
        %v3265 = vand.u32 %v3184, 2147483648
        %v3266 = vor.u32 1.1754944e-38, %v3265
        %v3267 = vsel %vm3264, %v3266, %v3262
        %v3268 = vmul.f32 %v3163, %v3267
        %v3269 = vrcp.pop %v3187
        %v3270 = vmul.f32 %v3187, %v3269
        %v3271 = vsub.f32 1.0, %v3270
        %v3272 = vmul.f32 %v3269, %v3271
        %v3273 = vadd.f32 %v3269, %v3272
        %vm3274 = vweird.f32 %v3187
        %vm3275 = vweird.f32 %v3269
        %vm3276 = vmor %vm3274, %vm3275
        %v3277 = vsel %vm3276, %v3269, %v3273
        %v3278 = vand.u32 2147483647, %v3187
        %vm3279 = vcmp.eq.f32.partialorder %v3278, 8.507059e+37
        %v3280 = vand.u32 %v3187, 2147483648
        %v3281 = vor.u32 1.1754944e-38, %v3280
        %v3282 = vsel %vm3279, %v3281, %v3277
        %v3283 = vmul.f32 %v3165, %v3282
        %v3284 = vrcp.pop %v3190
        %v3285 = vmul.f32 %v3190, %v3284
        %v3286 = vsub.f32 1.0, %v3285
        %v3287 = vmul.f32 %v3284, %v3286
        %v3288 = vadd.f32 %v3284, %v3287
        %vm3289 = vweird.f32 %v3190
        %vm3290 = vweird.f32 %v3284
        %vm3291 = vmor %vm3289, %vm3290
        %v3292 = vsel %vm3291, %v3284, %v3288
        %v3293 = vand.u32 2147483647, %v3190
        %vm3294 = vcmp.eq.f32.partialorder %v3293, 8.507059e+37
        %v3295 = vand.u32 %v3190, 2147483648
        %v3296 = vor.u32 1.1754944e-38, %v3295
        %v3297 = vsel %vm3294, %v3296, %v3292
        %v3298 = vmul.f32 %v3167, %v3297
        %v3299 = vrcp.pop %v3193
        %v3300 = vmul.f32 %v3193, %v3299
        %v3301 = vsub.f32 1.0, %v3300
        %v3302 = vmul.f32 %v3299, %v3301
        %v3303 = vadd.f32 %v3299, %v3302
        %vm3304 = vweird.f32 %v3193
        %vm3305 = vweird.f32 %v3299
        %vm3306 = vmor %vm3304, %vm3305
        %v3307 = vsel %vm3306, %v3299, %v3303
        %v3308 = vand.u32 2147483647, %v3193
        %vm3309 = vcmp.eq.f32.partialorder %v3308, 8.507059e+37
        %v3310 = vand.u32 %v3193, 2147483648
        %v3311 = vor.u32 1.1754944e-38, %v3310
        %v3312 = vsel %vm3309, %v3311, %v3307
        %v3313 = vmul.f32 %v3169, %v3312
        %v3314 = vpack.c.bf16 %v3208, %v3208
        %v3315 = vpack.c.bf16 %v3223, %v3223
        %v3316 = vpack.c.bf16 %v3238, %v3238
        %v3317 = vpack.c.bf16 %v3253, %v3253
        %v3318 = vpack.c.bf16 %v3268, %v3268
        %v3319 = vpack.c.bf16 %v3283, %v3283
        %v3320 = vpack.c.bf16 %v3298, %v3298
        %v3321 = vpack.c.bf16 %v3313, %v3313
        %v3326 = vunpack.c.l.b16 %v3314
        %v3327 = vunpack.c.l.b16 %v3315
        %v3328 = vunpack.c.l.b16 %v3316
        %v3329 = vunpack.c.l.b16 %v3317
        %v3330 = vpack.c.b16 %v3327, %v3326
        %v3331 = vpack.c.b16 %v3329, %v3328
        %3332 = vrot.lane.b32.xlu0 %v2478, 64
        %v3333 = vpop.permute.xlu0 %3332
        %3334 = vrot.lane.b32.xlu0 %v2479, 64
        %v3335 = vpop.permute.xlu0 %3334
        %v3339 = vsel %vm2169, %v3330, 0
        %v3342 = vsel %vm2169, %v3331, 0
        %3344 = vmatpush.bf16.msra.mxu0 0
        %3345 = vmatpush.bf16.msra.mxu0 0
        %3346 = vmatpush.bf16.msra.mxu0 0
        %3347 = vmatpush.bf16.msra.mxu0 0
        %3348 = vmatpush.bf16.msra.mxu0 0
        %3349 = vmatpush.bf16.msra.mxu0 0
        %3350 = vmatpush.bf16.msra.mxu0 %v3335
        %3351 = vmatpush.bf16.msra.mxu0 %v3333
        %3352 = vmatmul.bf16.gmra.mxu0 %v3339
        %v3353 = vpop.f32.mrf.mxu0
        %v3354 = vadd.f32 0.0, %v3353
        %v3355 = vpop.f32.mrf.mxu0
        %v3356 = vadd.f32 0.0, %v3355
        %3357 = vmatmul.bf16.gmra.mxu0 %v3342
        %v3358 = vpop.f32.mrf.mxu0
        %v3359 = vadd.f32 0.0, %v3358
        %v3360 = vpop.f32.mrf.mxu0
        %v3361 = vadd.f32 0.0, %v3360
        %3362 = vdwg.mxu0
        %v3367 = vunpack.c.l.b16 %v3318
        %v3368 = vunpack.c.l.b16 %v3319
        %v3369 = vunpack.c.l.b16 %v3320
        %v3370 = vunpack.c.l.b16 %v3321
        %v3371 = vpack.c.b16 %v3368, %v3367
        %v3372 = vpack.c.b16 %v3370, %v3369
        %3373 = vrot.lane.b32.xlu0 %v2525, 64
        %v3374 = vpop.permute.xlu0 %3373
        %3375 = vrot.lane.b32.xlu0 %v2526, 64
        %v3376 = vpop.permute.xlu0 %3375
        %v3380 = vsel %vm2169, %v3371, 0
        %v3383 = vsel %vm2169, %v3372, 0
        %3385 = vmatpush.bf16.msra.mxu0 0
        %3386 = vmatpush.bf16.msra.mxu0 0
        %3387 = vmatpush.bf16.msra.mxu0 0
        %3388 = vmatpush.bf16.msra.mxu0 0
        %3389 = vmatpush.bf16.msra.mxu0 0
        %3390 = vmatpush.bf16.msra.mxu0 0
        %3391 = vmatpush.bf16.msra.mxu0 %v3376
        %3392 = vmatpush.bf16.msra.mxu0 %v3374
        %3393 = vmatmul.bf16.gmra.mxu0 %v3380
        %v3394 = vpop.f32.mrf.mxu0
        %v3395 = vadd.f32 0.0, %v3394
        %v3396 = vpop.f32.mrf.mxu0
        %v3397 = vadd.f32 0.0, %v3396
        %3398 = vmatmul.bf16.gmra.mxu0 %v3383
        %v3399 = vpop.f32.mrf.mxu0
        %v3400 = vadd.f32 0.0, %v3399
        %v3401 = vpop.f32.mrf.mxu0
        %v3402 = vadd.f32 0.0, %v3401
        %3403 = vdwg.mxu0
        %v3404 = vpack.c.bf16 %v3356, %v3354
        %v3405 = vpack.c.bf16 %v3361, %v3359
        %v3406 = vpack.c.bf16 %v3397, %v3395
        %v3407 = vpack.c.bf16 %v3402, %v3400
        %v3412 = vunpack.c.l.b16 %v2117
        %v3413 = vunpack.c.l.b16 %v2118
        %v3414 = vunpack.c.l.b16 %v2119
        %v3415 = vunpack.c.l.b16 %v2120
        %v3416 = vpack.c.b16 %v3413, %v3412
        %v3417 = vpack.c.b16 %v3415, %v3414
        %v3421 = vsel %vm2169, %v3404, 0
        %v3424 = vsel %vm2169, %v3405, 0
        %v3427 = vsel %vm2169, %v3406, 0
        %v3430 = vsel %vm2169, %v3407, 0
        %3432 = vmatpush.bf16.msra.mxu0 0
        %3433 = vmatpush.bf16.msra.mxu0 0
        %3434 = vmatpush.bf16.msra.mxu0 0
        %3435 = vmatpush.bf16.msra.mxu0 0
        %3436 = vmatpush.bf16.msra.mxu0 0
        %3437 = vmatpush.bf16.msra.mxu0 0
        %3438 = vmatpush.bf16.msra.mxu0 %v3417
        %3439 = vmatpush.bf16.msra.mxu0 %v3416
        %3440 = vmatmul.bf16.gmra.mxu0 %v3421
        %v3441 = vpop.f32.mrf.mxu0
        %v3442 = vadd.f32 0.0, %v3441
        %v3443 = vpop.f32.mrf.mxu0
        %v3444 = vadd.f32 0.0, %v3443
        %3445 = vmatmul.bf16.gmra.mxu0 %v3424
        %v3446 = vpop.f32.mrf.mxu0
        %v3447 = vadd.f32 0.0, %v3446
        %v3448 = vpop.f32.mrf.mxu0
        %v3449 = vadd.f32 0.0, %v3448
        %3450 = vmatmul.bf16.gmra.mxu0 %v3427
        %v3451 = vpop.f32.mrf.mxu0
        %v3452 = vadd.f32 0.0, %v3451
        %v3453 = vpop.f32.mrf.mxu0
        %v3454 = vadd.f32 0.0, %v3453
        %3455 = vmatmul.bf16.gmra.mxu0 %v3430
        %v3456 = vpop.f32.mrf.mxu0
        %v3457 = vadd.f32 0.0, %v3456
        %v3458 = vpop.f32.mrf.mxu0
        %v3459 = vadd.f32 0.0, %v3458
        %3460 = vdwg.mxu0
        %v3461 = vadd.f32 %v3017, %v3442
        %v3462 = vadd.f32 %v3019, %v3444
        %v3463 = vadd.f32 %v3022, %v3447
        %v3464 = vadd.f32 %v3024, %v3449
        %v3465 = vadd.f32 %v3027, %v3452
        %v3466 = vadd.f32 %v3029, %v3454
        %v3467 = vadd.f32 %v3032, %v3457
        %v3468 = vadd.f32 %v3034, %v3459
        %3469 = vrot.lane.b32.xlu0 %v2157, 32
        %v3470 = vpop.permute.xlu0 %3469
        %3471 = vrot.lane.b32.xlu0 %v2158, 32
        %v3472 = vpop.permute.xlu0 %3471
        %3473 = vrot.lane.b32.xlu0 %v2167, 32
        %v3474 = vpop.permute.xlu0 %3473
        %3475 = vrot.lane.b32.xlu0 %v2168, 32
        %v3476 = vpop.permute.xlu0 %3475
        %v3478 = vsel %vm2169, %v3470, 0
        %v3481 = vsel %vm2169, %v3472, 0
        %v3484 = vsel %vm2169, %v3474, 0
        %v3487 = vsel %vm2169, %v3476, 0
        %3489 = vmatpush.bf16.xpose.msra.mxu0 0
        %3490 = vmatpush.bf16.xpose.msra.mxu0 0
        %3491 = vmatpush.bf16.xpose.msra.mxu0 0
        %3492 = vmatpush.bf16.xpose.msra.mxu0 0
        %3493 = vmatpush.bf16.xpose.msra.mxu0 0
        %3494 = vmatpush.bf16.xpose.msra.mxu0 0
        %3495 = vmatpush.bf16.xpose.msra.mxu0 %v3487
        %3496 = vmatpush.bf16.xpose.msra.mxu0 %v3484
        %3497 = vmatmul.bf16.gmra.mxu0 %v3478
        %v3498 = vpop.f32.mrf.mxu0
        %v3499 = vadd.f32 0.0, %v3498
        %v3500 = vpop.f32.mrf.mxu0
        %v3501 = vadd.f32 0.0, %v3500
        %3502 = vmatmul.bf16.gmra.mxu0 %v3481
        %v3503 = vpop.f32.mrf.mxu0
        %v3504 = vadd.f32 0.0, %v3503
        %v3505 = vpop.f32.mrf.mxu0
        %v3506 = vadd.f32 0.0, %v3505
        %3507 = vdwg.mxu0
        %3508 = vrot.lane.b32.xlu0 %v2209, 32
        %v3509 = vpop.permute.xlu0 %3508
        %3510 = vrot.lane.b32.xlu0 %v2210, 32
        %v3511 = vpop.permute.xlu0 %3510
        %3512 = vrot.lane.b32.xlu0 %v2219, 32
        %v3513 = vpop.permute.xlu0 %3512
        %3514 = vrot.lane.b32.xlu0 %v2220, 32
        %v3515 = vpop.permute.xlu0 %3514
        %v3517 = vsel %vm2169, %v3509, 0
        %v3520 = vsel %vm2169, %v3511, 0
        %v3523 = vsel %vm2169, %v3513, 0
        %v3526 = vsel %vm2169, %v3515, 0
        %3528 = vmatpush.bf16.xpose.msra.mxu0 0
        %3529 = vmatpush.bf16.xpose.msra.mxu0 0
        %3530 = vmatpush.bf16.xpose.msra.mxu0 0
        %3531 = vmatpush.bf16.xpose.msra.mxu0 0
        %3532 = vmatpush.bf16.xpose.msra.mxu0 0
        %3533 = vmatpush.bf16.xpose.msra.mxu0 0
        %3534 = vmatpush.bf16.xpose.msra.mxu0 %v3526
        %3535 = vmatpush.bf16.xpose.msra.mxu0 %v3523
        %3536 = vmatmul.bf16.gmra.mxu0 %v3517
        %v3537 = vpop.f32.mrf.mxu0
        %v3538 = vadd.f32 0.0, %v3537
        %v3539 = vpop.f32.mrf.mxu0
        %v3540 = vadd.f32 0.0, %v3539
        %3541 = vmatmul.bf16.gmra.mxu0 %v3520
        %v3542 = vpop.f32.mrf.mxu0
        %v3543 = vadd.f32 0.0, %v3542
        %v3544 = vpop.f32.mrf.mxu0
        %v3545 = vadd.f32 0.0, %v3544
        %3546 = vdwg.mxu0
        %v3547 = vmul.f32 %v3499, 0.17677669
        %v3548 = vmul.f32 %v3501, 0.17677669
        %v3549 = vmul.f32 %v3504, 0.17677669
        %v3550 = vmul.f32 %v3506, 0.17677669
        %v3551 = vmul.f32 %v3538, 0.17677669
        %v3552 = vmul.f32 %v3540, 0.17677669
        %v3553 = vmul.f32 %v3543, 0.17677669
        %v3554 = vmul.f32 %v3545, 0.17677669
        %v3555 = vsel %vm2169, %v3547, -inf
        %3556 = vmax.xlane.f32.xlu0 %v3555
        %v3557 = vpop.xlane.xlu0 %3556
        %v3558 = vsel %vm2169, %v3548, -inf
        %3559 = vmax.xlane.f32.xlu0 %v3558
        %v3560 = vpop.xlane.xlu0 %3559
        %v3561 = vsel %vm2169, %v3549, -inf
        %3562 = vmax.xlane.f32.xlu0 %v3561
        %v3563 = vpop.xlane.xlu0 %3562
        %v3564 = vsel %vm2169, %v3550, -inf
        %3565 = vmax.xlane.f32.xlu0 %v3564
        %v3566 = vpop.xlane.xlu0 %3565
        %v3567 = vsel %vm2169, %v3551, -inf
        %3568 = vmax.xlane.f32.xlu0 %v3567
        %v3569 = vpop.xlane.xlu0 %3568
        %v3570 = vsel %vm2169, %v3552, -inf
        %3571 = vmax.xlane.f32.xlu0 %v3570
        %v3572 = vpop.xlane.xlu0 %3571
        %v3573 = vsel %vm2169, %v3553, -inf
        %3574 = vmax.xlane.f32.xlu0 %v3573
        %v3575 = vpop.xlane.xlu0 %3574
        %v3576 = vsel %vm2169, %v3554, -inf
        %3577 = vmax.xlane.f32.xlu0 %v3576
        %v3578 = vpop.xlane.xlu0 %3577
        %v3579 = vsub.f32 %v3547, %v3557
        %v3580 = vsub.f32 %v3548, %v3560
        %v3581 = vsub.f32 %v3549, %v3563
        %v3582 = vsub.f32 %v3550, %v3566
        %v3583 = vsub.f32 %v3551, %v3569
        %v3584 = vsub.f32 %v3552, %v3572
        %v3585 = vsub.f32 %v3553, %v3575
        %v3586 = vsub.f32 %v3554, %v3578
        %v3587 = vmul.f32 %v3579, 1.442695
        %v3588 = vpow.pop %v3587
        %v3589 = vmul.f32 %v3580, 1.442695
        %v3590 = vpow.pop %v3589
        %v3591 = vmul.f32 %v3581, 1.442695
        %v3592 = vpow.pop %v3591
        %v3593 = vmul.f32 %v3582, 1.442695
        %v3594 = vpow.pop %v3593
        %v3595 = vmul.f32 %v3583, 1.442695
        %v3596 = vpow.pop %v3595
        %v3597 = vmul.f32 %v3584, 1.442695
        %v3598 = vpow.pop %v3597
        %v3599 = vmul.f32 %v3585, 1.442695
        %v3600 = vpow.pop %v3599
        %v3601 = vmul.f32 %v3586, 1.442695
        %v3602 = vpow.pop %v3601
        %v3603 = vsel %vm2169, %v3588, 0.0
        %3604 = vadd.xlane.f32.xlu0 %v3603
        %v3605 = vpop.xlane.xlu0 %3604
        %v3606 = vsel %vm2169, %v3590, 0.0
        %3607 = vadd.xlane.f32.xlu0 %v3606
        %v3608 = vpop.xlane.xlu0 %3607
        %v3609 = vsel %vm2169, %v3592, 0.0
        %3610 = vadd.xlane.f32.xlu0 %v3609
        %v3611 = vpop.xlane.xlu0 %3610
        %v3612 = vsel %vm2169, %v3594, 0.0
        %3613 = vadd.xlane.f32.xlu0 %v3612
        %v3614 = vpop.xlane.xlu0 %3613
        %v3615 = vsel %vm2169, %v3596, 0.0
        %3616 = vadd.xlane.f32.xlu0 %v3615
        %v3617 = vpop.xlane.xlu0 %3616
        %v3618 = vsel %vm2169, %v3598, 0.0
        %3619 = vadd.xlane.f32.xlu0 %v3618
        %v3620 = vpop.xlane.xlu0 %3619
        %v3621 = vsel %vm2169, %v3600, 0.0
        %3622 = vadd.xlane.f32.xlu0 %v3621
        %v3623 = vpop.xlane.xlu0 %3622
        %v3624 = vsel %vm2169, %v3602, 0.0
        %3625 = vadd.xlane.f32.xlu0 %v3624
        %v3626 = vpop.xlane.xlu0 %3625
        %v3627 = vrcp.pop %v3605
        %v3628 = vmul.f32 %v3605, %v3627
        %v3629 = vsub.f32 1.0, %v3628
        %v3630 = vmul.f32 %v3627, %v3629
        %v3631 = vadd.f32 %v3627, %v3630
        %vm3632 = vweird.f32 %v3605
        %vm3633 = vweird.f32 %v3627
        %vm3634 = vmor %vm3632, %vm3633
        %v3635 = vsel %vm3634, %v3627, %v3631
        %v3636 = vand.u32 2147483647, %v3605
        %vm3637 = vcmp.eq.f32.partialorder %v3636, 8.507059e+37
        %v3638 = vand.u32 %v3605, 2147483648
        %v3639 = vor.u32 1.1754944e-38, %v3638
        %v3640 = vsel %vm3637, %v3639, %v3635
        %v3641 = vmul.f32 %v3588, %v3640
        %v3642 = vrcp.pop %v3608
        %v3643 = vmul.f32 %v3608, %v3642
        %v3644 = vsub.f32 1.0, %v3643
        %v3645 = vmul.f32 %v3642, %v3644
        %v3646 = vadd.f32 %v3642, %v3645
        %vm3647 = vweird.f32 %v3608
        %vm3648 = vweird.f32 %v3642
        %vm3649 = vmor %vm3647, %vm3648
        %v3650 = vsel %vm3649, %v3642, %v3646
        %v3651 = vand.u32 2147483647, %v3608
        %vm3652 = vcmp.eq.f32.partialorder %v3651, 8.507059e+37
        %v3653 = vand.u32 %v3608, 2147483648
        %v3654 = vor.u32 1.1754944e-38, %v3653
        %v3655 = vsel %vm3652, %v3654, %v3650
        %v3656 = vmul.f32 %v3590, %v3655
        %v3657 = vrcp.pop %v3611
        %v3658 = vmul.f32 %v3611, %v3657
        %v3659 = vsub.f32 1.0, %v3658
        %v3660 = vmul.f32 %v3657, %v3659
        %v3661 = vadd.f32 %v3657, %v3660
        %vm3662 = vweird.f32 %v3611
        %vm3663 = vweird.f32 %v3657
        %vm3664 = vmor %vm3662, %vm3663
        %v3665 = vsel %vm3664, %v3657, %v3661
        %v3666 = vand.u32 2147483647, %v3611
        %vm3667 = vcmp.eq.f32.partialorder %v3666, 8.507059e+37
        %v3668 = vand.u32 %v3611, 2147483648
        %v3669 = vor.u32 1.1754944e-38, %v3668
        %v3670 = vsel %vm3667, %v3669, %v3665
        %v3671 = vmul.f32 %v3592, %v3670
        %v3672 = vrcp.pop %v3614
        %v3673 = vmul.f32 %v3614, %v3672
        %v3674 = vsub.f32 1.0, %v3673
        %v3675 = vmul.f32 %v3672, %v3674
        %v3676 = vadd.f32 %v3672, %v3675
        %vm3677 = vweird.f32 %v3614
        %vm3678 = vweird.f32 %v3672
        %vm3679 = vmor %vm3677, %vm3678
        %v3680 = vsel %vm3679, %v3672, %v3676
        %v3681 = vand.u32 2147483647, %v3614
        %vm3682 = vcmp.eq.f32.partialorder %v3681, 8.507059e+37
        %v3683 = vand.u32 %v3614, 2147483648
        %v3684 = vor.u32 1.1754944e-38, %v3683
        %v3685 = vsel %vm3682, %v3684, %v3680
        %v3686 = vmul.f32 %v3594, %v3685
        %v3687 = vrcp.pop %v3617
        %v3688 = vmul.f32 %v3617, %v3687
        %v3689 = vsub.f32 1.0, %v3688
        %v3690 = vmul.f32 %v3687, %v3689
        %v3691 = vadd.f32 %v3687, %v3690
        %vm3692 = vweird.f32 %v3617
        %vm3693 = vweird.f32 %v3687
        %vm3694 = vmor %vm3692, %vm3693
        %v3695 = vsel %vm3694, %v3687, %v3691
        %v3696 = vand.u32 2147483647, %v3617
        %vm3697 = vcmp.eq.f32.partialorder %v3696, 8.507059e+37
        %v3698 = vand.u32 %v3617, 2147483648
        %v3699 = vor.u32 1.1754944e-38, %v3698
        %v3700 = vsel %vm3697, %v3699, %v3695
        %v3701 = vmul.f32 %v3596, %v3700
        %v3702 = vrcp.pop %v3620
        %v3703 = vmul.f32 %v3620, %v3702
        %v3704 = vsub.f32 1.0, %v3703
        %v3705 = vmul.f32 %v3702, %v3704
        %v3706 = vadd.f32 %v3702, %v3705
        %vm3707 = vweird.f32 %v3620
        %vm3708 = vweird.f32 %v3702
        %vm3709 = vmor %vm3707, %vm3708
        %v3710 = vsel %vm3709, %v3702, %v3706
        %v3711 = vand.u32 2147483647, %v3620
        %vm3712 = vcmp.eq.f32.partialorder %v3711, 8.507059e+37
        %v3713 = vand.u32 %v3620, 2147483648
        %v3714 = vor.u32 1.1754944e-38, %v3713
        %v3715 = vsel %vm3712, %v3714, %v3710
        %v3716 = vmul.f32 %v3598, %v3715
        %v3717 = vrcp.pop %v3623
        %v3718 = vmul.f32 %v3623, %v3717
        %v3719 = vsub.f32 1.0, %v3718
        %v3720 = vmul.f32 %v3717, %v3719
        %v3721 = vadd.f32 %v3717, %v3720
        %vm3722 = vweird.f32 %v3623
        %vm3723 = vweird.f32 %v3717
        %vm3724 = vmor %vm3722, %vm3723
        %v3725 = vsel %vm3724, %v3717, %v3721
        %v3726 = vand.u32 2147483647, %v3623
        %vm3727 = vcmp.eq.f32.partialorder %v3726, 8.507059e+37
        %v3728 = vand.u32 %v3623, 2147483648
        %v3729 = vor.u32 1.1754944e-38, %v3728
        %v3730 = vsel %vm3727, %v3729, %v3725
        %v3731 = vmul.f32 %v3600, %v3730
        %v3732 = vrcp.pop %v3626
        %v3733 = vmul.f32 %v3626, %v3732
        %v3734 = vsub.f32 1.0, %v3733
        %v3735 = vmul.f32 %v3732, %v3734
        %v3736 = vadd.f32 %v3732, %v3735
        %vm3737 = vweird.f32 %v3626
        %vm3738 = vweird.f32 %v3732
        %vm3739 = vmor %vm3737, %vm3738
        %v3740 = vsel %vm3739, %v3732, %v3736
        %v3741 = vand.u32 2147483647, %v3626
        %vm3742 = vcmp.eq.f32.partialorder %v3741, 8.507059e+37
        %v3743 = vand.u32 %v3626, 2147483648
        %v3744 = vor.u32 1.1754944e-38, %v3743
        %v3745 = vsel %vm3742, %v3744, %v3740
        %v3746 = vmul.f32 %v3602, %v3745
        %v3747 = vpack.c.bf16 %v3641, %v3641
        %v3748 = vpack.c.bf16 %v3656, %v3656
        %v3749 = vpack.c.bf16 %v3671, %v3671
        %v3750 = vpack.c.bf16 %v3686, %v3686
        %v3751 = vpack.c.bf16 %v3701, %v3701
        %v3752 = vpack.c.bf16 %v3716, %v3716
        %v3753 = vpack.c.bf16 %v3731, %v3731
        %v3754 = vpack.c.bf16 %v3746, %v3746
        %v3759 = vunpack.c.l.b16 %v3747
        %v3760 = vunpack.c.l.b16 %v3748
        %v3761 = vunpack.c.l.b16 %v3749
        %v3762 = vunpack.c.l.b16 %v3750
        %v3763 = vpack.c.b16 %v3760, %v3759
        %v3764 = vpack.c.b16 %v3762, %v3761
        %3765 = vrot.lane.b32.xlu0 %v2478, 32
        %v3766 = vpop.permute.xlu0 %3765
        %3767 = vrot.lane.b32.xlu0 %v2479, 32
        %v3768 = vpop.permute.xlu0 %3767
        %v3772 = vsel %vm2169, %v3763, 0
        %v3775 = vsel %vm2169, %v3764, 0
        %3777 = vmatpush.bf16.msra.mxu0 0
        %3778 = vmatpush.bf16.msra.mxu0 0
        %3779 = vmatpush.bf16.msra.mxu0 0
        %3780 = vmatpush.bf16.msra.mxu0 0
        %3781 = vmatpush.bf16.msra.mxu0 0
        %3782 = vmatpush.bf16.msra.mxu0 0
        %3783 = vmatpush.bf16.msra.mxu0 %v3768
        %3784 = vmatpush.bf16.msra.mxu0 %v3766
        %3785 = vmatmul.bf16.gmra.mxu0 %v3772
        %v3786 = vpop.f32.mrf.mxu0
        %v3787 = vadd.f32 0.0, %v3786
        %v3788 = vpop.f32.mrf.mxu0
        %v3789 = vadd.f32 0.0, %v3788
        %3790 = vmatmul.bf16.gmra.mxu0 %v3775
        %v3791 = vpop.f32.mrf.mxu0
        %v3792 = vadd.f32 0.0, %v3791
        %v3793 = vpop.f32.mrf.mxu0
        %v3794 = vadd.f32 0.0, %v3793
        %3795 = vdwg.mxu0
        %v3800 = vunpack.c.l.b16 %v3751
        %v3801 = vunpack.c.l.b16 %v3752
        %v3802 = vunpack.c.l.b16 %v3753
        %v3803 = vunpack.c.l.b16 %v3754
        %v3804 = vpack.c.b16 %v3801, %v3800
        %v3805 = vpack.c.b16 %v3803, %v3802
        %3806 = vrot.lane.b32.xlu0 %v2525, 32
        %v3807 = vpop.permute.xlu0 %3806
        %3808 = vrot.lane.b32.xlu0 %v2526, 32
        %v3809 = vpop.permute.xlu0 %3808
        %v3813 = vsel %vm2169, %v3804, 0
        %v3816 = vsel %vm2169, %v3805, 0
        %3818 = vmatpush.bf16.msra.mxu0 0
        %3819 = vmatpush.bf16.msra.mxu0 0
        %3820 = vmatpush.bf16.msra.mxu0 0
        %3821 = vmatpush.bf16.msra.mxu0 0
        %3822 = vmatpush.bf16.msra.mxu0 0
        %3823 = vmatpush.bf16.msra.mxu0 0
        %3824 = vmatpush.bf16.msra.mxu0 %v3809
        %3825 = vmatpush.bf16.msra.mxu0 %v3807
        %3826 = vmatmul.bf16.gmra.mxu0 %v3813
        %v3827 = vpop.f32.mrf.mxu0
        %v3828 = vadd.f32 0.0, %v3827
        %v3829 = vpop.f32.mrf.mxu0
        %v3830 = vadd.f32 0.0, %v3829
        %3831 = vmatmul.bf16.gmra.mxu0 %v3816
        %v3832 = vpop.f32.mrf.mxu0
        %v3833 = vadd.f32 0.0, %v3832
        %v3834 = vpop.f32.mrf.mxu0
        %v3835 = vadd.f32 0.0, %v3834
        %3836 = vdwg.mxu0
        %v3837 = vpack.c.bf16 %v3789, %v3787
        %v3838 = vpack.c.bf16 %v3794, %v3792
        %v3839 = vpack.c.bf16 %v3830, %v3828
        %v3840 = vpack.c.bf16 %v3835, %v3833
        %v3845 = vunpack.c.l.b16 %v2121
        %v3846 = vunpack.c.l.b16 %v2122
        %v3847 = vunpack.c.l.b16 %v2123
        %v3848 = vunpack.c.l.b16 %v2124
        %v3849 = vpack.c.b16 %v3846, %v3845
        %v3850 = vpack.c.b16 %v3848, %v3847
        %v3854 = vsel %vm2169, %v3837, 0
        %v3857 = vsel %vm2169, %v3838, 0
        %v3860 = vsel %vm2169, %v3839, 0
        %v3863 = vsel %vm2169, %v3840, 0
        %3865 = vmatpush.bf16.msra.mxu0 0
        %3866 = vmatpush.bf16.msra.mxu0 0
        %3867 = vmatpush.bf16.msra.mxu0 0
        %3868 = vmatpush.bf16.msra.mxu0 0
        %3869 = vmatpush.bf16.msra.mxu0 0
        %3870 = vmatpush.bf16.msra.mxu0 0
        %3871 = vmatpush.bf16.msra.mxu0 %v3850
        %3872 = vmatpush.bf16.msra.mxu0 %v3849
        %3873 = vmatmul.bf16.gmra.mxu0 %v3854
        %v3874 = vpop.f32.mrf.mxu0
        %v3875 = vadd.f32 0.0, %v3874
        %v3876 = vpop.f32.mrf.mxu0
        %v3877 = vadd.f32 0.0, %v3876
        %3878 = vmatmul.bf16.gmra.mxu0 %v3857
        %v3879 = vpop.f32.mrf.mxu0
        %v3880 = vadd.f32 0.0, %v3879
        %v3881 = vpop.f32.mrf.mxu0
        %v3882 = vadd.f32 0.0, %v3881
        %3883 = vmatmul.bf16.gmra.mxu0 %v3860
        %v3884 = vpop.f32.mrf.mxu0
        %v3885 = vadd.f32 0.0, %v3884
        %v3886 = vpop.f32.mrf.mxu0
        %v3887 = vadd.f32 0.0, %v3886
        %3888 = vmatmul.bf16.gmra.mxu0 %v3863
        %v3889 = vpop.f32.mrf.mxu0
        %v3890 = vadd.f32 0.0, %v3889
        %v3891 = vpop.f32.mrf.mxu0
        %v3892 = vadd.f32 0.0, %v3891
        %3893 = vdwg.mxu0
        %v3894 = vadd.f32 %v3461, %v3875
        %v3895 = vadd.f32 %v3462, %v3877
        %v3896 = vadd.f32 %v3463, %v3880
        %v3897 = vadd.f32 %v3464, %v3882
        %v3898 = vadd.f32 %v3465, %v3885
        %v3899 = vadd.f32 %v3466, %v3887
        %v3900 = vadd.f32 %v3467, %v3890
        %v3901 = vadd.f32 %v3468, %v3892
        %v3902 = vld [vmem:[%s955] sm:$0x1]
        %v3904 = vperm.slane %v3902, 0
        %v3906 = vadd.f32 %v3894, %v3904
        %v3907 = vadd.f32 %v3895, %v3904
        %v3908 = vadd.f32 %v3896, %v3904
        %v3909 = vadd.f32 %v3897, %v3904
        %v3910 = vadd.f32 %v3898, %v3904
        %v3911 = vadd.f32 %v3899, %v3904
        %v3912 = vadd.f32 %v3900, %v3904
        %v3913 = vadd.f32 %v3901, %v3904
        %v3914 = vadd.f32 %v1842, %v3906
        %v3915 = vadd.f32 %v1843, %v3907
        %v3916 = vadd.f32 %v1844, %v3908
        %v3917 = vadd.f32 %v1845, %v3909
        %v3918 = vadd.f32 %v1846, %v3910
        %v3919 = vadd.f32 %v1847, %v3911
        %v3920 = vadd.f32 %v1848, %v3912
        %v3921 = vadd.f32 %v1849, %v3913
        %v3922 = vld [vmem:[%s964] sm:$0x1]
        %v3923 = vld [vmem:[%s973] sm:$0x1]
        %3924 = vadd.xlane.f32.xlu0 %v3914
        %v3925 = vpop.xlane.xlu0 %3924
        %3926 = vadd.xlane.f32.xlu0 %v3915
        %v3927 = vpop.xlane.xlu0 %3926
        %3928 = vadd.xlane.f32.xlu0 %v3916
        %v3929 = vpop.xlane.xlu0 %3928
        %3930 = vadd.xlane.f32.xlu0 %v3917
        %v3931 = vpop.xlane.xlu0 %3930
        %3932 = vadd.xlane.f32.xlu0 %v3918
        %v3933 = vpop.xlane.xlu0 %3932
        %3934 = vadd.xlane.f32.xlu0 %v3919
        %v3935 = vpop.xlane.xlu0 %3934
        %3936 = vadd.xlane.f32.xlu0 %v3920
        %v3937 = vpop.xlane.xlu0 %3936
        %3938 = vadd.xlane.f32.xlu0 %v3921
        %v3939 = vpop.xlane.xlu0 %3938
        %v3940 = vrcp.pop 128.0
        %v3941 = vmul.f32 128.0, %v3940
        %v3942 = vsub.f32 1.0, %v3941
        %v3943 = vmul.f32 %v3940, %v3942
        %v3944 = vadd.f32 %v3940, %v3943
        %vm3945 = vweird.f32 %v3940
        %v3946 = vsel %vm3945, %v3940, %v3944
        %v3947 = vmul.f32 %v3925, %v3946
        %v3948 = vmul.f32 %v3927, %v3946
        %v3949 = vmul.f32 %v3929, %v3946
        %v3950 = vmul.f32 %v3931, %v3946
        %v3951 = vmul.f32 %v3933, %v3946
        %v3952 = vmul.f32 %v3935, %v3946
        %v3953 = vmul.f32 %v3937, %v3946
        %v3954 = vmul.f32 %v3939, %v3946
        %v3955 = vsub.f32 %v3914, %v3947
        %v3956 = vsub.f32 %v3915, %v3948
        %v3957 = vsub.f32 %v3916, %v3949
        %v3958 = vsub.f32 %v3917, %v3950
        %v3959 = vsub.f32 %v3918, %v3951
        %v3960 = vsub.f32 %v3919, %v3952
        %v3961 = vsub.f32 %v3920, %v3953
        %v3962 = vsub.f32 %v3921, %v3954
        %v3963 = vmul.f32 %v3955, %v3955
        %v3964 = vmul.f32 %v3956, %v3956
        %v3965 = vmul.f32 %v3957, %v3957
        %v3966 = vmul.f32 %v3958, %v3958
        %v3967 = vmul.f32 %v3959, %v3959
        %v3968 = vmul.f32 %v3960, %v3960
        %v3969 = vmul.f32 %v3961, %v3961
        %v3970 = vmul.f32 %v3962, %v3962
        %3971 = vadd.xlane.f32.xlu0 %v3963
        %v3972 = vpop.xlane.xlu0 %3971
        %3973 = vadd.xlane.f32.xlu0 %v3964
        %v3974 = vpop.xlane.xlu0 %3973
        %3975 = vadd.xlane.f32.xlu0 %v3965
        %v3976 = vpop.xlane.xlu0 %3975
        %3977 = vadd.xlane.f32.xlu0 %v3966
        %v3978 = vpop.xlane.xlu0 %3977
        %3979 = vadd.xlane.f32.xlu0 %v3967
        %v3980 = vpop.xlane.xlu0 %3979
        %3981 = vadd.xlane.f32.xlu0 %v3968
        %v3982 = vpop.xlane.xlu0 %3981
        %3983 = vadd.xlane.f32.xlu0 %v3969
        %v3984 = vpop.xlane.xlu0 %3983
        %3985 = vadd.xlane.f32.xlu0 %v3970
        %v3986 = vpop.xlane.xlu0 %3985
        %v3987 = vmul.f32 %v3972, %v3946
        %v3988 = vmul.f32 %v3974, %v3946
        %v3989 = vmul.f32 %v3976, %v3946
        %v3990 = vmul.f32 %v3978, %v3946
        %v3991 = vmul.f32 %v3980, %v3946
        %v3992 = vmul.f32 %v3982, %v3946
        %v3993 = vmul.f32 %v3984, %v3946
        %v3994 = vmul.f32 %v3986, %v3946
        %v3995 = vadd.f32 %v3987, 1e-05
        %v3996 = vadd.f32 %v3988, 1e-05
        %v3997 = vadd.f32 %v3989, 1e-05
        %v3998 = vadd.f32 %v3990, 1e-05
        %v3999 = vadd.f32 %v3991, 1e-05
        %v4000 = vadd.f32 %v3992, 1e-05
        %v4001 = vadd.f32 %v3993, 1e-05
        %v4002 = vadd.f32 %v3994, 1e-05
        %v4003 = vrsqrt.pop %v3995
        %v4004 = vmul.f32 %v4003, %v3995
        %v4005 = vmul.f32 %v4004, %v4003
        %v4006 = vmul.f32 0.5, %v4005
        %v4007 = vsub.f32 1.5, %v4006
        %v4008 = vmul.f32 %v4003, %v4007
        %vm4009 = vweird.f32 %v3995
        %vm4010 = vweird.f32 %v4003
        %vm4011 = vmor %vm4009, %vm4010
        %v4012 = vsel %vm4011, %v4003, %v4008
        %v4013 = vrsqrt.pop %v3996
        %v4014 = vmul.f32 %v4013, %v3996
        %v4015 = vmul.f32 %v4014, %v4013
        %v4016 = vmul.f32 0.5, %v4015
        %v4017 = vsub.f32 1.5, %v4016
        %v4018 = vmul.f32 %v4013, %v4017
        %vm4019 = vweird.f32 %v3996
        %vm4020 = vweird.f32 %v4013
        %vm4021 = vmor %vm4019, %vm4020
        %v4022 = vsel %vm4021, %v4013, %v4018
        %v4023 = vrsqrt.pop %v3997
        %v4024 = vmul.f32 %v4023, %v3997
        %v4025 = vmul.f32 %v4024, %v4023
        %v4026 = vmul.f32 0.5, %v4025
        %v4027 = vsub.f32 1.5, %v4026
        %v4028 = vmul.f32 %v4023, %v4027
        %vm4029 = vweird.f32 %v3997
        %vm4030 = vweird.f32 %v4023
        %vm4031 = vmor %vm4029, %vm4030
        %v4032 = vsel %vm4031, %v4023, %v4028
        %v4033 = vrsqrt.pop %v3998
        %v4034 = vmul.f32 %v4033, %v3998
        %v4035 = vmul.f32 %v4034, %v4033
        %v4036 = vmul.f32 0.5, %v4035
        %v4037 = vsub.f32 1.5, %v4036
        %v4038 = vmul.f32 %v4033, %v4037
        %vm4039 = vweird.f32 %v3998
        %vm4040 = vweird.f32 %v4033
        %vm4041 = vmor %vm4039, %vm4040
        %v4042 = vsel %vm4041, %v4033, %v4038
        %v4043 = vrsqrt.pop %v3999
        %v4044 = vmul.f32 %v4043, %v3999
        %v4045 = vmul.f32 %v4044, %v4043
        %v4046 = vmul.f32 0.5, %v4045
        %v4047 = vsub.f32 1.5, %v4046
        %v4048 = vmul.f32 %v4043, %v4047
        %vm4049 = vweird.f32 %v3999
        %vm4050 = vweird.f32 %v4043
        %vm4051 = vmor %vm4049, %vm4050
        %v4052 = vsel %vm4051, %v4043, %v4048
        %v4053 = vrsqrt.pop %v4000
        %v4054 = vmul.f32 %v4053, %v4000
        %v4055 = vmul.f32 %v4054, %v4053
        %v4056 = vmul.f32 0.5, %v4055
        %v4057 = vsub.f32 1.5, %v4056
        %v4058 = vmul.f32 %v4053, %v4057
        %vm4059 = vweird.f32 %v4000
        %vm4060 = vweird.f32 %v4053
        %vm4061 = vmor %vm4059, %vm4060
        %v4062 = vsel %vm4061, %v4053, %v4058
        %v4063 = vrsqrt.pop %v4001
        %v4064 = vmul.f32 %v4063, %v4001
        %v4065 = vmul.f32 %v4064, %v4063
        %v4066 = vmul.f32 0.5, %v4065
        %v4067 = vsub.f32 1.5, %v4066
        %v4068 = vmul.f32 %v4063, %v4067
        %vm4069 = vweird.f32 %v4001
        %vm4070 = vweird.f32 %v4063
        %vm4071 = vmor %vm4069, %vm4070
        %v4072 = vsel %vm4071, %v4063, %v4068
        %v4073 = vrsqrt.pop %v4002
        %v4074 = vmul.f32 %v4073, %v4002
        %v4075 = vmul.f32 %v4074, %v4073
        %v4076 = vmul.f32 0.5, %v4075
        %v4077 = vsub.f32 1.5, %v4076
        %v4078 = vmul.f32 %v4073, %v4077
        %vm4079 = vweird.f32 %v4002
        %vm4080 = vweird.f32 %v4073
        %vm4081 = vmor %vm4079, %vm4080
        %v4082 = vsel %vm4081, %v4073, %v4078
        %v4083 = vmul.f32 %v3955, %v4012
        %v4084 = vmul.f32 %v3956, %v4022
        %v4085 = vmul.f32 %v3957, %v4032
        %v4086 = vmul.f32 %v3958, %v4042
        %v4087 = vmul.f32 %v3959, %v4052
        %v4088 = vmul.f32 %v3960, %v4062
        %v4089 = vmul.f32 %v3961, %v4072
        %v4090 = vmul.f32 %v3962, %v4082
        %v4092 = vperm.slane %v3922, 0
        %v4094 = vmul.f32 %v4083, %v4092
        %v4095 = vmul.f32 %v4084, %v4092
        %v4096 = vmul.f32 %v4085, %v4092
        %v4097 = vmul.f32 %v4086, %v4092
        %v4098 = vmul.f32 %v4087, %v4092
        %v4099 = vmul.f32 %v4088, %v4092
        %v4100 = vmul.f32 %v4089, %v4092
        %v4101 = vmul.f32 %v4090, %v4092
        %v4103 = vperm.slane %v3923, 0
        %v4105 = vadd.f32 %v4094, %v4103
        %v4106 = vadd.f32 %v4095, %v4103
        %v4107 = vadd.f32 %v4096, %v4103
        %v4108 = vadd.f32 %v4097, %v4103
        %v4109 = vadd.f32 %v4098, %v4103
        %v4110 = vadd.f32 %v4099, %v4103
        %v4111 = vadd.f32 %v4100, %v4103
        %v4112 = vadd.f32 %v4101, %v4103
        %v4113 = vpack.c.bf16 %v4106, %v4105
        %v4114 = vpack.c.bf16 %v4108, %v4107
        %v4115 = vpack.c.bf16 %v4110, %v4109
        %v4116 = vpack.c.bf16 %v4112, %v4111
        %v4117 = vld [vmem:[%s983] sm:$0xff]
        %v4118 = vld [vmem:[%s983 + $0x8] sm:$0xff]
        %v4119 = vld [vmem:[%s983 + $0x10] sm:$0xff]
        %v4120 = vld [vmem:[%s983 + $0x18] sm:$0xff]
        %v4121 = vld [vmem:[%s983 + $0x20] sm:$0xff]
        %v4122 = vld [vmem:[%s983 + $0x28] sm:$0xff]
        %v4123 = vld [vmem:[%s983 + $0x30] sm:$0xff]
        %v4124 = vld [vmem:[%s983 + $0x38] sm:$0xff]
        %v4125 = vld [vmem:[%s983 + $0x40] sm:$0xff]
        %v4126 = vld [vmem:[%s983 + $0x48] sm:$0xff]
        %v4127 = vld [vmem:[%s983 + $0x50] sm:$0xff]
        %v4128 = vld [vmem:[%s983 + $0x58] sm:$0xff]
        %v4129 = vld [vmem:[%s983 + $0x60] sm:$0xff]
        %v4130 = vld [vmem:[%s983 + $0x68] sm:$0xff]
        %v4131 = vld [vmem:[%s983 + $0x70] sm:$0xff]
        %v4132 = vld [vmem:[%s983 + $0x78] sm:$0xff]
        %v4133 = vld [vmem:[%s993] sm:$0x3]
        %v4135 = vperm.slane %v4133, 0
        %v4136 = vperm.slane %v4133, 1
        %v4155 = vunpack.c.l.b16 %v4117
        %v4156 = vunpack.c.h.b16 %v4117
        %v4157 = vunpack.c.l.b16 %v4118
        %v4158 = vunpack.c.h.b16 %v4118
        %v4159 = vunpack.c.l.b16 %v4119
        %v4160 = vunpack.c.h.b16 %v4119
        %v4161 = vunpack.c.l.b16 %v4120
        %v4162 = vunpack.c.h.b16 %v4120
        %v4163 = vunpack.c.l.b16 %v4121
        %v4164 = vunpack.c.h.b16 %v4121
        %v4165 = vunpack.c.l.b16 %v4122
        %v4166 = vunpack.c.h.b16 %v4122
        %v4167 = vunpack.c.l.b16 %v4123
        %v4168 = vunpack.c.h.b16 %v4123
        %v4169 = vunpack.c.l.b16 %v4124
        %v4170 = vunpack.c.h.b16 %v4124
        %v4171 = vunpack.c.l.b16 %v4125
        %v4172 = vunpack.c.h.b16 %v4125
        %v4173 = vunpack.c.l.b16 %v4126
        %v4174 = vunpack.c.h.b16 %v4126
        %v4175 = vunpack.c.l.b16 %v4127
        %v4176 = vunpack.c.h.b16 %v4127
        %v4177 = vunpack.c.l.b16 %v4128
        %v4178 = vunpack.c.h.b16 %v4128
        %v4179 = vunpack.c.l.b16 %v4129
        %v4180 = vunpack.c.h.b16 %v4129
        %v4181 = vunpack.c.l.b16 %v4130
        %v4182 = vunpack.c.h.b16 %v4130
        %v4183 = vunpack.c.l.b16 %v4131
        %v4184 = vunpack.c.h.b16 %v4131
        %v4185 = vunpack.c.l.b16 %v4132
        %v4186 = vunpack.c.h.b16 %v4132
        %v4187 = vpack.c.b16 %v4157, %v4155
        %v4188 = vpack.c.b16 %v4158, %v4156
        %v4189 = vpack.c.b16 %v4161, %v4159
        %v4190 = vpack.c.b16 %v4162, %v4160
        %v4191 = vpack.c.b16 %v4165, %v4163
        %v4192 = vpack.c.b16 %v4166, %v4164
        %v4193 = vpack.c.b16 %v4169, %v4167
        %v4194 = vpack.c.b16 %v4170, %v4168
        %v4195 = vpack.c.b16 %v4173, %v4171
        %v4196 = vpack.c.b16 %v4174, %v4172
        %v4197 = vpack.c.b16 %v4177, %v4175
        %v4198 = vpack.c.b16 %v4178, %v4176
        %v4199 = vpack.c.b16 %v4181, %v4179
        %v4200 = vpack.c.b16 %v4182, %v4180
        %v4201 = vpack.c.b16 %v4185, %v4183
        %v4202 = vpack.c.b16 %v4186, %v4184
        %4219 = vmatpush.bf16.msra.mxu0 %v4201
        %4220 = vmatpush.bf16.msra.mxu0 %v4199
        %4221 = vmatpush.bf16.msra.mxu0 %v4197
        %4222 = vmatpush.bf16.msra.mxu0 %v4195
        %4223 = vmatpush.bf16.msra.mxu0 %v4193
        %4224 = vmatpush.bf16.msra.mxu0 %v4191
        %4225 = vmatpush.bf16.msra.mxu0 %v4189
        %4226 = vmatpush.bf16.msra.mxu0 %v4187
        %4227 = vmatmul.bf16.gmra.mxu0 %v4113
        %v4228 = vpop.f32.mrf.mxu0
        %v4229 = vadd.f32 %v4135, %v4228
        %v4230 = vpop.f32.mrf.mxu0
        %v4231 = vadd.f32 %v4135, %v4230
        %4232 = vmatmul.bf16.gmra.mxu0 %v4114
        %v4233 = vpop.f32.mrf.mxu0
        %v4234 = vadd.f32 %v4135, %v4233
        %v4235 = vpop.f32.mrf.mxu0
        %v4236 = vadd.f32 %v4135, %v4235
        %4237 = vmatmul.bf16.gmra.mxu0 %v4115
        %v4238 = vpop.f32.mrf.mxu0
        %v4239 = vadd.f32 %v4135, %v4238
        %v4240 = vpop.f32.mrf.mxu0
        %v4241 = vadd.f32 %v4135, %v4240
        %4242 = vmatmul.bf16.gmra.mxu0 %v4116
        %v4243 = vpop.f32.mrf.mxu0
        %v4244 = vadd.f32 %v4135, %v4243
        %v4245 = vpop.f32.mrf.mxu0
        %v4246 = vadd.f32 %v4135, %v4245
        %4247 = vdwg.mxu0
        %4248 = vmatpush.bf16.msra.mxu0 %v4202
        %4249 = vmatpush.bf16.msra.mxu0 %v4200
        %4250 = vmatpush.bf16.msra.mxu0 %v4198
        %4251 = vmatpush.bf16.msra.mxu0 %v4196
        %4252 = vmatpush.bf16.msra.mxu0 %v4194
        %4253 = vmatpush.bf16.msra.mxu0 %v4192
        %4254 = vmatpush.bf16.msra.mxu0 %v4190
        %4255 = vmatpush.bf16.msra.mxu0 %v4188
        %4256 = vmatmul.bf16.gmra.mxu0 %v4113
        %v4257 = vpop.f32.mrf.mxu0
        %v4258 = vadd.f32 %v4136, %v4257
        %v4259 = vpop.f32.mrf.mxu0
        %v4260 = vadd.f32 %v4136, %v4259
        %4261 = vmatmul.bf16.gmra.mxu0 %v4114
        %v4262 = vpop.f32.mrf.mxu0
        %v4263 = vadd.f32 %v4136, %v4262
        %v4264 = vpop.f32.mrf.mxu0
        %v4265 = vadd.f32 %v4136, %v4264
        %4266 = vmatmul.bf16.gmra.mxu0 %v4115
        %v4267 = vpop.f32.mrf.mxu0
        %v4268 = vadd.f32 %v4136, %v4267
        %v4269 = vpop.f32.mrf.mxu0
        %v4270 = vadd.f32 %v4136, %v4269
        %4271 = vmatmul.bf16.gmra.mxu0 %v4116
        %v4272 = vpop.f32.mrf.mxu0
        %v4273 = vadd.f32 %v4136, %v4272
        %v4274 = vpop.f32.mrf.mxu0
        %v4275 = vadd.f32 %v4136, %v4274
        %4276 = vdwg.mxu0
        %v4277 = vmax.f32 %v4229, 0.0
        %v4278 = vmax.f32 %v4258, 0.0
        %v4279 = vmax.f32 %v4231, 0.0
        %v4280 = vmax.f32 %v4260, 0.0
        %v4281 = vmax.f32 %v4234, 0.0
        %v4282 = vmax.f32 %v4263, 0.0
        %v4283 = vmax.f32 %v4236, 0.0
        %v4284 = vmax.f32 %v4265, 0.0
        %v4285 = vmax.f32 %v4239, 0.0
        %v4286 = vmax.f32 %v4268, 0.0
        %v4287 = vmax.f32 %v4241, 0.0
        %v4288 = vmax.f32 %v4270, 0.0
        %v4289 = vmax.f32 %v4244, 0.0
        %v4290 = vmax.f32 %v4273, 0.0
        %v4291 = vmax.f32 %v4246, 0.0
        %v4292 = vmax.f32 %v4275, 0.0
        %v4293 = vpack.c.bf16 %v4279, %v4277
        %v4294 = vpack.c.bf16 %v4280, %v4278
        %v4295 = vpack.c.bf16 %v4283, %v4281
        %v4296 = vpack.c.bf16 %v4284, %v4282
        %v4297 = vpack.c.bf16 %v4287, %v4285
        %v4298 = vpack.c.bf16 %v4288, %v4286
        %v4299 = vpack.c.bf16 %v4291, %v4289
        %v4300 = vpack.c.bf16 %v4292, %v4290
        %v4301 = vld [vmem:[%s1003] sm:$0xf]
        %v4302 = vld [vmem:[%s1003 + $0x4] sm:$0xf]
        %v4303 = vld [vmem:[%s1003 + $0x8] sm:$0xf]
        %v4304 = vld [vmem:[%s1003 + $0xc] sm:$0xf]
        %v4305 = vld [vmem:[%s1003 + $0x10] sm:$0xf]
        %v4306 = vld [vmem:[%s1003 + $0x14] sm:$0xf]
        %v4307 = vld [vmem:[%s1003 + $0x18] sm:$0xf]
        %v4308 = vld [vmem:[%s1003 + $0x1c] sm:$0xf]
        %v4309 = vld [vmem:[%s1003 + $0x20] sm:$0xf]
        %v4310 = vld [vmem:[%s1003 + $0x24] sm:$0xf]
        %v4311 = vld [vmem:[%s1003 + $0x28] sm:$0xf]
        %v4312 = vld [vmem:[%s1003 + $0x2c] sm:$0xf]
        %v4313 = vld [vmem:[%s1003 + $0x30] sm:$0xf]
        %v4314 = vld [vmem:[%s1003 + $0x34] sm:$0xf]
        %v4315 = vld [vmem:[%s1003 + $0x38] sm:$0xf]
        %v4316 = vld [vmem:[%s1003 + $0x3c] sm:$0xf]
        %v4317 = vld [vmem:[%s1003 + $0x40] sm:$0xf]
        %v4318 = vld [vmem:[%s1003 + $0x44] sm:$0xf]
        %v4319 = vld [vmem:[%s1003 + $0x48] sm:$0xf]
        %v4320 = vld [vmem:[%s1003 + $0x4c] sm:$0xf]
        %v4321 = vld [vmem:[%s1003 + $0x50] sm:$0xf]
        %v4322 = vld [vmem:[%s1003 + $0x54] sm:$0xf]
        %v4323 = vld [vmem:[%s1003 + $0x58] sm:$0xf]
        %v4324 = vld [vmem:[%s1003 + $0x5c] sm:$0xf]
        %v4325 = vld [vmem:[%s1003 + $0x60] sm:$0xf]
        %v4326 = vld [vmem:[%s1003 + $0x64] sm:$0xf]
        %v4327 = vld [vmem:[%s1003 + $0x68] sm:$0xf]
        %v4328 = vld [vmem:[%s1003 + $0x6c] sm:$0xf]
        %v4329 = vld [vmem:[%s1003 + $0x70] sm:$0xf]
        %v4330 = vld [vmem:[%s1003 + $0x74] sm:$0xf]
        %v4331 = vld [vmem:[%s1003 + $0x78] sm:$0xf]
        %v4332 = vld [vmem:[%s1003 + $0x7c] sm:$0xf]
        %v4333 = vld [vmem:[%s1012] sm:$0x1]
        %v4335 = vperm.slane %v4333, 0
        %v4369 = vunpack.c.l.b16 %v4301
        %v4370 = vunpack.c.l.b16 %v4302
        %v4371 = vunpack.c.l.b16 %v4303
        %v4372 = vunpack.c.l.b16 %v4304
        %v4373 = vunpack.c.l.b16 %v4305
        %v4374 = vunpack.c.l.b16 %v4306
        %v4375 = vunpack.c.l.b16 %v4307
        %v4376 = vunpack.c.l.b16 %v4308
        %v4377 = vunpack.c.l.b16 %v4309
        %v4378 = vunpack.c.l.b16 %v4310
        %v4379 = vunpack.c.l.b16 %v4311
        %v4380 = vunpack.c.l.b16 %v4312
        %v4381 = vunpack.c.l.b16 %v4313
        %v4382 = vunpack.c.l.b16 %v4314
        %v4383 = vunpack.c.l.b16 %v4315
        %v4384 = vunpack.c.l.b16 %v4316
        %v4385 = vunpack.c.l.b16 %v4317
        %v4386 = vunpack.c.l.b16 %v4318
        %v4387 = vunpack.c.l.b16 %v4319
        %v4388 = vunpack.c.l.b16 %v4320
        %v4389 = vunpack.c.l.b16 %v4321
        %v4390 = vunpack.c.l.b16 %v4322
        %v4391 = vunpack.c.l.b16 %v4323
        %v4392 = vunpack.c.l.b16 %v4324
        %v4393 = vunpack.c.l.b16 %v4325
        %v4394 = vunpack.c.l.b16 %v4326
        %v4395 = vunpack.c.l.b16 %v4327
        %v4396 = vunpack.c.l.b16 %v4328
        %v4397 = vunpack.c.l.b16 %v4329
        %v4398 = vunpack.c.l.b16 %v4330
        %v4399 = vunpack.c.l.b16 %v4331
        %v4400 = vunpack.c.l.b16 %v4332
        %v4401 = vpack.c.b16 %v4370, %v4369
        %v4402 = vpack.c.b16 %v4372, %v4371
        %v4403 = vpack.c.b16 %v4374, %v4373
        %v4404 = vpack.c.b16 %v4376, %v4375
        %v4405 = vpack.c.b16 %v4378, %v4377
        %v4406 = vpack.c.b16 %v4380, %v4379
        %v4407 = vpack.c.b16 %v4382, %v4381
        %v4408 = vpack.c.b16 %v4384, %v4383
        %v4409 = vpack.c.b16 %v4386, %v4385
        %v4410 = vpack.c.b16 %v4388, %v4387
        %v4411 = vpack.c.b16 %v4390, %v4389
        %v4412 = vpack.c.b16 %v4392, %v4391
        %v4413 = vpack.c.b16 %v4394, %v4393
        %v4414 = vpack.c.b16 %v4396, %v4395
        %v4415 = vpack.c.b16 %v4398, %v4397
        %v4416 = vpack.c.b16 %v4400, %v4399
        %4433 = vmatpush.bf16.msra.mxu0 %v4408
        %4434 = vmatpush.bf16.msra.mxu0 %v4407
        %4435 = vmatpush.bf16.msra.mxu0 %v4406
        %4436 = vmatpush.bf16.msra.mxu0 %v4405
        %4437 = vmatpush.bf16.msra.mxu0 %v4404
        %4438 = vmatpush.bf16.msra.mxu0 %v4403
        %4439 = vmatpush.bf16.msra.mxu0 %v4402
        %4440 = vmatpush.bf16.msra.mxu0 %v4401
        %4441 = vmatmul.bf16.gmra.mxu0 %v4293
        %v4442 = vpop.f32.mrf.mxu0
        %v4443 = vadd.f32 %v4335, %v4442
        %v4444 = vpop.f32.mrf.mxu0
        %v4445 = vadd.f32 %v4335, %v4444
        %4446 = vmatmul.bf16.gmra.mxu0 %v4295
        %v4447 = vpop.f32.mrf.mxu0
        %v4448 = vadd.f32 %v4335, %v4447
        %v4449 = vpop.f32.mrf.mxu0
        %v4450 = vadd.f32 %v4335, %v4449
        %4451 = vmatmul.bf16.gmra.mxu0 %v4297
        %v4452 = vpop.f32.mrf.mxu0
        %v4453 = vadd.f32 %v4335, %v4452
        %v4454 = vpop.f32.mrf.mxu0
        %v4455 = vadd.f32 %v4335, %v4454
        %4456 = vmatmul.bf16.gmra.mxu0 %v4299
        %v4457 = vpop.f32.mrf.mxu0
        %v4458 = vadd.f32 %v4335, %v4457
        %v4459 = vpop.f32.mrf.mxu0
        %v4460 = vadd.f32 %v4335, %v4459
        %4461 = vdwg.mxu0
        %4462 = vmatpush.bf16.msra.mxu0 %v4416
        %4463 = vmatpush.bf16.msra.mxu0 %v4415
        %4464 = vmatpush.bf16.msra.mxu0 %v4414
        %4465 = vmatpush.bf16.msra.mxu0 %v4413
        %4466 = vmatpush.bf16.msra.mxu0 %v4412
        %4467 = vmatpush.bf16.msra.mxu0 %v4411
        %4468 = vmatpush.bf16.msra.mxu0 %v4410
        %4469 = vmatpush.bf16.msra.mxu0 %v4409
        %4470 = vmatmul.bf16.gmra.mxu0 %v4294
        %v4471 = vpop.f32.mrf.mxu0
        %v4472 = vadd.f32 %v4443, %v4471
        %v4473 = vpop.f32.mrf.mxu0
        %v4474 = vadd.f32 %v4445, %v4473
        %4475 = vmatmul.bf16.gmra.mxu0 %v4296
        %v4476 = vpop.f32.mrf.mxu0
        %v4477 = vadd.f32 %v4448, %v4476
        %v4478 = vpop.f32.mrf.mxu0
        %v4479 = vadd.f32 %v4450, %v4478
        %4480 = vmatmul.bf16.gmra.mxu0 %v4298
        %v4481 = vpop.f32.mrf.mxu0
        %v4482 = vadd.f32 %v4453, %v4481
        %v4483 = vpop.f32.mrf.mxu0
        %v4484 = vadd.f32 %v4455, %v4483
        %4485 = vmatmul.bf16.gmra.mxu0 %v4300
        %v4486 = vpop.f32.mrf.mxu0
        %v4487 = vadd.f32 %v4458, %v4486
        %v4488 = vpop.f32.mrf.mxu0
        %v4489 = vadd.f32 %v4460, %v4488
        %4490 = vdwg.mxu0
        %v4491 = vadd.f32 %v4105, %v4472
        %v4492 = vadd.f32 %v4106, %v4474
        %v4493 = vadd.f32 %v4107, %v4477
        %v4494 = vadd.f32 %v4108, %v4479
        %v4495 = vadd.f32 %v4109, %v4482
        %v4496 = vadd.f32 %v4110, %v4484
        %v4497 = vadd.f32 %v4111, %v4487
        %v4498 = vadd.f32 %v4112, %v4489
        %v4499 = vld [vmem:[%s1021] sm:$0x1]
        %v4500 = vld [vmem:[%s1030] sm:$0x1]
        %4501 = vadd.xlane.f32.xlu0 %v4491
        %v4502 = vpop.xlane.xlu0 %4501
        %4503 = vadd.xlane.f32.xlu0 %v4492
        %v4504 = vpop.xlane.xlu0 %4503
        %4505 = vadd.xlane.f32.xlu0 %v4493
        %v4506 = vpop.xlane.xlu0 %4505
        %4507 = vadd.xlane.f32.xlu0 %v4494
        %v4508 = vpop.xlane.xlu0 %4507
        %4509 = vadd.xlane.f32.xlu0 %v4495
        %v4510 = vpop.xlane.xlu0 %4509
        %4511 = vadd.xlane.f32.xlu0 %v4496
        %v4512 = vpop.xlane.xlu0 %4511
        %4513 = vadd.xlane.f32.xlu0 %v4497
        %v4514 = vpop.xlane.xlu0 %4513
        %4515 = vadd.xlane.f32.xlu0 %v4498
        %v4516 = vpop.xlane.xlu0 %4515
        %v4517 = vmul.f32 %v4502, %v3946
        %v4518 = vmul.f32 %v4504, %v3946
        %v4519 = vmul.f32 %v4506, %v3946
        %v4520 = vmul.f32 %v4508, %v3946
        %v4521 = vmul.f32 %v4510, %v3946
        %v4522 = vmul.f32 %v4512, %v3946
        %v4523 = vmul.f32 %v4514, %v3946
        %v4524 = vmul.f32 %v4516, %v3946
        %v4525 = vsub.f32 %v4491, %v4517
        %v4526 = vsub.f32 %v4492, %v4518
        %v4527 = vsub.f32 %v4493, %v4519
        %v4528 = vsub.f32 %v4494, %v4520
        %v4529 = vsub.f32 %v4495, %v4521
        %v4530 = vsub.f32 %v4496, %v4522
        %v4531 = vsub.f32 %v4497, %v4523
        %v4532 = vsub.f32 %v4498, %v4524
        %v4533 = vmul.f32 %v4525, %v4525
        %v4534 = vmul.f32 %v4526, %v4526
        %v4535 = vmul.f32 %v4527, %v4527
        %v4536 = vmul.f32 %v4528, %v4528
        %v4537 = vmul.f32 %v4529, %v4529
        %v4538 = vmul.f32 %v4530, %v4530
        %v4539 = vmul.f32 %v4531, %v4531
        %v4540 = vmul.f32 %v4532, %v4532
        %4541 = vadd.xlane.f32.xlu0 %v4533
        %v4542 = vpop.xlane.xlu0 %4541
        %4543 = vadd.xlane.f32.xlu0 %v4534
        %v4544 = vpop.xlane.xlu0 %4543
        %4545 = vadd.xlane.f32.xlu0 %v4535
        %v4546 = vpop.xlane.xlu0 %4545
        %4547 = vadd.xlane.f32.xlu0 %v4536
        %v4548 = vpop.xlane.xlu0 %4547
        %4549 = vadd.xlane.f32.xlu0 %v4537
        %v4550 = vpop.xlane.xlu0 %4549
        %4551 = vadd.xlane.f32.xlu0 %v4538
        %v4552 = vpop.xlane.xlu0 %4551
        %4553 = vadd.xlane.f32.xlu0 %v4539
        %v4554 = vpop.xlane.xlu0 %4553
        %4555 = vadd.xlane.f32.xlu0 %v4540
        %v4556 = vpop.xlane.xlu0 %4555
        %v4557 = vmul.f32 %v4542, %v3946
        %v4558 = vmul.f32 %v4544, %v3946
        %v4559 = vmul.f32 %v4546, %v3946
        %v4560 = vmul.f32 %v4548, %v3946
        %v4561 = vmul.f32 %v4550, %v3946
        %v4562 = vmul.f32 %v4552, %v3946
        %v4563 = vmul.f32 %v4554, %v3946
        %v4564 = vmul.f32 %v4556, %v3946
        %v4565 = vadd.f32 %v4557, 1e-05
        %v4566 = vadd.f32 %v4558, 1e-05
        %v4567 = vadd.f32 %v4559, 1e-05
        %v4568 = vadd.f32 %v4560, 1e-05
        %v4569 = vadd.f32 %v4561, 1e-05
        %v4570 = vadd.f32 %v4562, 1e-05
        %v4571 = vadd.f32 %v4563, 1e-05
        %v4572 = vadd.f32 %v4564, 1e-05
        %v4573 = vrsqrt.pop %v4565
        %v4574 = vmul.f32 %v4573, %v4565
        %v4575 = vmul.f32 %v4574, %v4573
        %v4576 = vmul.f32 0.5, %v4575
        %v4577 = vsub.f32 1.5, %v4576
        %v4578 = vmul.f32 %v4573, %v4577
        %vm4579 = vweird.f32 %v4565
        %vm4580 = vweird.f32 %v4573
        %vm4581 = vmor %vm4579, %vm4580
        %v4582 = vsel %vm4581, %v4573, %v4578
        %v4583 = vrsqrt.pop %v4566
        %v4584 = vmul.f32 %v4583, %v4566
        %v4585 = vmul.f32 %v4584, %v4583
        %v4586 = vmul.f32 0.5, %v4585
        %v4587 = vsub.f32 1.5, %v4586
        %v4588 = vmul.f32 %v4583, %v4587
        %vm4589 = vweird.f32 %v4566
        %vm4590 = vweird.f32 %v4583
        %vm4591 = vmor %vm4589, %vm4590
        %v4592 = vsel %vm4591, %v4583, %v4588
        %v4593 = vrsqrt.pop %v4567
        %v4594 = vmul.f32 %v4593, %v4567
        %v4595 = vmul.f32 %v4594, %v4593
        %v4596 = vmul.f32 0.5, %v4595
        %v4597 = vsub.f32 1.5, %v4596
        %v4598 = vmul.f32 %v4593, %v4597
        %vm4599 = vweird.f32 %v4567
        %vm4600 = vweird.f32 %v4593
        %vm4601 = vmor %vm4599, %vm4600
        %v4602 = vsel %vm4601, %v4593, %v4598
        %v4603 = vrsqrt.pop %v4568
        %v4604 = vmul.f32 %v4603, %v4568
        %v4605 = vmul.f32 %v4604, %v4603
        %v4606 = vmul.f32 0.5, %v4605
        %v4607 = vsub.f32 1.5, %v4606
        %v4608 = vmul.f32 %v4603, %v4607
        %vm4609 = vweird.f32 %v4568
        %vm4610 = vweird.f32 %v4603
        %vm4611 = vmor %vm4609, %vm4610
        %v4612 = vsel %vm4611, %v4603, %v4608
        %v4613 = vrsqrt.pop %v4569
        %v4614 = vmul.f32 %v4613, %v4569
        %v4615 = vmul.f32 %v4614, %v4613
        %v4616 = vmul.f32 0.5, %v4615
        %v4617 = vsub.f32 1.5, %v4616
        %v4618 = vmul.f32 %v4613, %v4617
        %vm4619 = vweird.f32 %v4569
        %vm4620 = vweird.f32 %v4613
        %vm4621 = vmor %vm4619, %vm4620
        %v4622 = vsel %vm4621, %v4613, %v4618
        %v4623 = vrsqrt.pop %v4570
        %v4624 = vmul.f32 %v4623, %v4570
        %v4625 = vmul.f32 %v4624, %v4623
        %v4626 = vmul.f32 0.5, %v4625
        %v4627 = vsub.f32 1.5, %v4626
        %v4628 = vmul.f32 %v4623, %v4627
        %vm4629 = vweird.f32 %v4570
        %vm4630 = vweird.f32 %v4623
        %vm4631 = vmor %vm4629, %vm4630
        %v4632 = vsel %vm4631, %v4623, %v4628
        %v4633 = vrsqrt.pop %v4571
        %v4634 = vmul.f32 %v4633, %v4571
        %v4635 = vmul.f32 %v4634, %v4633
        %v4636 = vmul.f32 0.5, %v4635
        %v4637 = vsub.f32 1.5, %v4636
        %v4638 = vmul.f32 %v4633, %v4637
        %vm4639 = vweird.f32 %v4571
        %vm4640 = vweird.f32 %v4633
        %vm4641 = vmor %vm4639, %vm4640
        %v4642 = vsel %vm4641, %v4633, %v4638
        %v4643 = vrsqrt.pop %v4572
        %v4644 = vmul.f32 %v4643, %v4572
        %v4645 = vmul.f32 %v4644, %v4643
        %v4646 = vmul.f32 0.5, %v4645
        %v4647 = vsub.f32 1.5, %v4646
        %v4648 = vmul.f32 %v4643, %v4647
        %vm4649 = vweird.f32 %v4572
        %vm4650 = vweird.f32 %v4643
        %vm4651 = vmor %vm4649, %vm4650
        %v4652 = vsel %vm4651, %v4643, %v4648
        %v4653 = vmul.f32 %v4525, %v4582
        %v4654 = vmul.f32 %v4526, %v4592
        %v4655 = vmul.f32 %v4527, %v4602
        %v4656 = vmul.f32 %v4528, %v4612
        %v4657 = vmul.f32 %v4529, %v4622
        %v4658 = vmul.f32 %v4530, %v4632
        %v4659 = vmul.f32 %v4531, %v4642
        %v4660 = vmul.f32 %v4532, %v4652
        %v4662 = vperm.slane %v4499, 0
        %v4664 = vmul.f32 %v4653, %v4662
        %v4665 = vmul.f32 %v4654, %v4662
        %v4666 = vmul.f32 %v4655, %v4662
        %v4667 = vmul.f32 %v4656, %v4662
        %v4668 = vmul.f32 %v4657, %v4662
        %v4669 = vmul.f32 %v4658, %v4662
        %v4670 = vmul.f32 %v4659, %v4662
        %v4671 = vmul.f32 %v4660, %v4662
        %v4673 = vperm.slane %v4500, 0
        %v4675 = vadd.f32 %v4664, %v4673
        %v4676 = vadd.f32 %v4665, %v4673
        %v4677 = vadd.f32 %v4666, %v4673
        %v4678 = vadd.f32 %v4667, %v4673
        %v4679 = vadd.f32 %v4668, %v4673
        %v4680 = vadd.f32 %v4669, %v4673
        %v4681 = vadd.f32 %v4670, %v4673
        %v4682 = vadd.f32 %v4671, %v4673
        %4683 = vst [vmem:[#allocation2] sm:$0xff] %v4675
        %4684 = vst [vmem:[#allocation2 + $0x8] sm:$0xff] %v4676
        %4685 = vst [vmem:[#allocation2 + $0x10] sm:$0xff] %v4677
        %4686 = vst [vmem:[#allocation2 + $0x18] sm:$0xff] %v4678
        %4687 = vst [vmem:[#allocation2 + $0x20] sm:$0xff] %v4679
        %4688 = vst [vmem:[#allocation2 + $0x28] sm:$0xff] %v4680
        %4689 = vst [vmem:[#allocation2 + $0x30] sm:$0xff] %v4681
        %4690 = vst [vmem:[#allocation2 + $0x38] sm:$0xff] %v4682
        %p4691 = scmp.eq.s32.totalorder %s54, 1
        // Predicated region
        $region181: #{vlm_forward.1} parent=99 // pred_check
          %p4692 = pneg %p4691
        $region182: #{vlm_forward.1} parent=99 // pred_check_branch
          %4694 = sbr.rel (%p4692) target = $region184
        $region183: #{vlm_forward.1} parent=99 // pred_region
          %v4696 = vrot.slane %v4679, 7
          %vm4698 = vcmask 1040384
          %v4699 = vsel %vm4698, %v4675, %v4696
          %v4700 = vpack.c.bf16 %v4699, %v4699
          %v4701 = vld [vmem:[#allocation30] sm:$0xf]
          %v4702 = vld [vmem:[#allocation30 + $0x4] sm:$0xf]
          %v4703 = vld [vmem:[#allocation30 + $0x8] sm:$0xf]
          %v4704 = vld [vmem:[#allocation30 + $0xc] sm:$0xf]
          %v4705 = vld [vmem:[#allocation30 + $0x10] sm:$0xf]
          %v4706 = vld [vmem:[#allocation30 + $0x14] sm:$0xf]
          %v4707 = vld [vmem:[#allocation30 + $0x18] sm:$0xf]
          %v4708 = vld [vmem:[#allocation30 + $0x1c] sm:$0xf]
          %v4709 = vld [vmem:[#allocation30 + $0x20] sm:$0xf]
          %v4710 = vld [vmem:[#allocation30 + $0x24] sm:$0xf]
          %v4711 = vld [vmem:[#allocation30 + $0x28] sm:$0xf]
          %v4712 = vld [vmem:[#allocation30 + $0x2c] sm:$0xf]
          %v4713 = vld [vmem:[#allocation30 + $0x30] sm:$0xf]
          %v4714 = vld [vmem:[#allocation30 + $0x34] sm:$0xf]
          %v4715 = vld [vmem:[#allocation30 + $0x38] sm:$0xf]
          %v4716 = vld [vmem:[#allocation30 + $0x3c] sm:$0xf]
          %v4717 = vld [vmem:[#allocation32] sm:$0x1]
          %v4719 = vperm.slane %v4717, 0
          %v4737 = vunpack.c.l.b16 %v4701
          %v4738 = vunpack.c.l.b16 %v4702
          %v4739 = vunpack.c.l.b16 %v4703
          %v4740 = vunpack.c.l.b16 %v4704
          %v4741 = vunpack.c.l.b16 %v4705
          %v4742 = vunpack.c.l.b16 %v4706
          %v4743 = vunpack.c.l.b16 %v4707
          %v4744 = vunpack.c.l.b16 %v4708
          %v4745 = vunpack.c.l.b16 %v4709
          %v4746 = vunpack.c.l.b16 %v4710
          %v4747 = vunpack.c.l.b16 %v4711
          %v4748 = vunpack.c.l.b16 %v4712
          %v4749 = vunpack.c.l.b16 %v4713
          %v4750 = vunpack.c.l.b16 %v4714
          %v4751 = vunpack.c.l.b16 %v4715
          %v4752 = vunpack.c.l.b16 %v4716
          %v4753 = vpack.c.b16 %v4738, %v4737
          %v4754 = vpack.c.b16 %v4740, %v4739
          %v4755 = vpack.c.b16 %v4742, %v4741
          %v4756 = vpack.c.b16 %v4744, %v4743
          %v4757 = vpack.c.b16 %v4746, %v4745
          %v4758 = vpack.c.b16 %v4748, %v4747
          %v4759 = vpack.c.b16 %v4750, %v4749
          %v4760 = vpack.c.b16 %v4752, %v4751
          %4769 = vmatpush.bf16.msra.mxu0 %v4760
          %4770 = vmatpush.bf16.msra.mxu0 %v4759
          %4771 = vmatpush.bf16.msra.mxu0 %v4758
          %4772 = vmatpush.bf16.msra.mxu0 %v4757
          %4773 = vmatpush.bf16.msra.mxu0 %v4756
          %4774 = vmatpush.bf16.msra.mxu0 %v4755
          %4775 = vmatpush.bf16.msra.mxu0 %v4754
          %4776 = vmatpush.bf16.msra.mxu0 %v4753
          %4777 = vmatmul.bf16.gmra.mxu0 %v4700
          %v4778 = vpop.f32.mrf.mxu0
          %v4779 = vadd.f32 %v4719, %v4778
          %v4780 = vpop.f32.mrf.mxu0
          %4781 = vdwg.mxu0
          %4782 = vst [vmem:[#allocation33] sm:$0x3] %v4779
        $region184: #{vlm_forward.1} parent=99 // pred_fallthru
          _
        // Predicated region
        $region185: #{vlm_forward.1} parent=99 // pred_check
          %p4783 = pneg %p547
        $region186: #{vlm_forward.1} parent=99 // pred_check_branch
          %4785 = sbr.rel (%p4783) target = $region188
        $region187: #{vlm_forward.1} parent=99 // pred_region
          %4787 = vsyncadd [#allocation5], 0
          %s4789 = sshll.u32 [#allocation33], 4
          %s4790 = int_to_ptr.vmem [resolvable:$true] %s4789
          %s4791 = sshll.u32 %s20, 4
          %s4792 = int_to_ptr.hbm [resolvable:$true] %s4791
          %4794 = dma.vmem_to_hbm [thread:$0]  %s4790, 32, %s4792, [#allocation5]
        $region188: #{vlm_forward.1} parent=99 // pred_fallthru
          _
        // Predicated region
        $region189: #{vlm_forward.1} parent=99 // pred_check
          %p4795 = pneg %p547
        $region190: #{vlm_forward.1} parent=99 // pred_check_branch
          %4797 = sbr.rel (%p4795) target = $region192
        $region191: #{vlm_forward.1} parent=99 // pred_region
          %4799 = dma.done [#allocation5], 32
        $region192: #{vlm_forward.1} parent=99 // pred_fallthru
          _
      $region100: #{vlm_forward.1} parent=5 // pred_fallthru
        _
      %p4800 = scmp.le.s32.totalorder 2, %s49
      // Predicated region
      $region193: #{vlm_forward.1} parent=5 // pred_check
        %p4801 = pneg %p4800
      $region194: #{vlm_forward.1} parent=5 // pred_check_branch
        %4803 = sbr.rel (%p4801) target = $region196
      $region195: #{vlm_forward.1} parent=5 // pred_region
        %s4804 = ssub.s32 %s49, 2
      $region196: #{vlm_forward.1} parent=5 // pred_fallthru
        _
    $region6: #{vlm_forward.1} parent=1 // loop_footer
      %s53 = sadd.s32 1, %s49
    $region7: #{vlm_forward.1} parent=1 // loop_footer_branch
      %48 = sbr.rel target = $region3
    $region8: #{vlm_forward.1} parent=1 // loop_exit
      _
    %4805 = vsyncpa [#allocation4], 1
    %s4806 = scalar_lea.sflag [#allocation4], 1
    %4807 = vsyncpa %s4806, 1
    %4808 = vsyncpa [#allocation7], 1
    %4809 = vsyncpa [#allocation10], 1
    %4810 = vsyncpa [#allocation13], 1
    %s4811 = scalar_lea.sflag [#allocation13], 1
    %4812 = vsyncpa %s4811, 1
    %4813 = vsyncpa [#allocation16], 1
    %s4814 = scalar_lea.sflag [#allocation16], 1
    %4815 = vsyncpa %s4814, 1
    %4816 = vsyncpa [#allocation19], 1
    %s4817 = scalar_lea.sflag [#allocation19], 1
    %4818 = vsyncpa %s4817, 1
    %4819 = vsyncpa [#allocation22], 1
    %s4820 = scalar_lea.sflag [#allocation22], 1
    %4821 = vsyncpa %s4820, 1
    %4822 = vsyncpa [#allocation25], 1
    %s4823 = scalar_lea.sflag [#allocation25], 1
    %4824 = vsyncpa %s4823, 1
    %4825 = vsyncpa [#allocation28], 1
    %s4826 = scalar_lea.sflag [#allocation28], 1
    %4827 = vsyncpa %s4826, 1
    %4828 = vsyncpa [#allocation31], 1
    %4829 = vsyncpa [#allocation5], 1
    %s4830 = scalar_lea.sflag [#allocation5], 1
    %4831 = vsyncpa %s4830, 1

</llo_original>
